<compile_context>
chip_gen: v7x
topology: tpu7x:2x2x1
jax: 0.10.0
libtpu: 0.0.40
codegen_flags: <defaults>
</compile_context>

<pallas_src>
import jax
import jax.numpy as jnp
from jax.experimental import pallas as pl
from jax.experimental.pallas import tpu as pltpu


# Packed-bias row indices (rows of the (8, C) bias array).
_B_Q, _B_QS, _B_KP, _B_KC, _B_TKC, _B_V, _B_TV, _B_O = range(8)


def _softmax_lastdim(x):
    m = jnp.max(x, axis=-1, keepdims=True)
    e = jnp.exp(x - m)
    s = jnp.sum(e, axis=-1, keepdims=True)
    return e * pl.reciprocal(s, approx=True)


def _make_kernel(num_heads, head_dim, is_first_layer, need_t_attn, need_t_v,
                 separate_value):
    H, hd = num_heads, head_dim
    C = H * hd
    n_out = 1 + int(need_t_attn) + int(need_t_v)
    f32, bf16 = jnp.float32, jnp.bfloat16

    def kernel(*refs):
        it = iter(refs)
        qin_ref = next(it)                        # (1, N, Cq) bf16
        qsine_ref = next(it)                      # (1, N, C)  bf16
        key_ref = next(it)                        # (1, HW, C) bf16
        val_ref = next(it) if separate_value else key_ref
        kpos_ref = next(it)                       # (1, HW, C) bf16
        w_q_ref, w_qs_ref, w_kp_ref = next(it), next(it), next(it)
        w_k_ref, w_v_ref, w_o_ref = next(it), next(it), next(it)
        bias_ref = next(it)                       # (8, C) f32
        out_ref = next(it)                        # (1, n_out, N, C) f32
        logits_s_ref = next(it)                   # (1, H, N, HW) f32
        logits_t_ref = next(it) if need_t_attn else None
        ov_ref = next(it)                         # VMEM scratch (n_out*N, C) f32

        bias = bias_ref[...]

        # ---- fused full-width input projections (bf16 operands, f32 accum) ----
        # The q-side scale (2*hd)**-0.5 is folded into weights + biases.
        q_cp = jnp.dot(qin_ref[0], w_q_ref[...],
                       preferred_element_type=f32) + bias[_B_Q:_B_Q + 1]
        q_sine = jnp.dot(qsine_ref[0], w_qs_ref[...],
                         preferred_element_type=f32) + bias[_B_QS:_B_QS + 1]
        kp = jnp.dot(kpos_ref[0], w_kp_ref[...],
                     preferred_element_type=f32) + bias[_B_KP:_B_KP + 1]
        k_all = jnp.dot(key_ref[0], w_k_ref[...], preferred_element_type=f32)
        v_all = jnp.dot(val_ref[0], w_v_ref[...], preferred_element_type=f32)

        k_s = k_all[:, :C] + bias[_B_KC:_B_KC + 1]
        vv = v_all[:, :C] + bias[_B_V:_B_V + 1]
        if is_first_layer:
            k_s = k_s + kp
        if need_t_attn:
            k_t = k_all[:, C:] + bias[_B_TKC:_B_TKC + 1]
            if is_first_layer:
                k_t = k_t + kp
        if need_t_v:
            vt = v_all[:, C:] + bias[_B_TV:_B_TV + 1]

        # bf16 operands for the attention-stage MXU work (f32 accumulation).
        qc_b, qs_b = q_cp.astype(bf16), q_sine.astype(bf16)
        kp_b, ks_b, v_b = kp.astype(bf16), k_s.astype(bf16), vv.astype(bf16)
        if need_t_attn:
            kt_b = k_t.astype(bf16)
        if need_t_v:
            vt_b = vt.astype(bf16)

        N = q_cp.shape[0]
        row_tv = N                                 # teacher_share_v rows
        row_ta = (1 + int(need_t_attn)) * N        # teacher_share_A rows

        # ---- per-head attention: logits stored straight to the output blocks,
        #      P@V written into the shared out-projection scratch ----
        for h in range(H):
            sl = slice(h * hd, (h + 1) * hd)
            # sine(q) x key_pos term is shared by student & teacher logits.
            pos = jnp.einsum('nd,md->nm', qs_b[:, sl], kp_b[:, sl],
                             preferred_element_type=f32)
            a_s = jnp.einsum('nd,md->nm', qc_b[:, sl], ks_b[:, sl],
                             preferred_element_type=f32) + pos
            logits_s_ref[0, h] = a_s
            p_s = _softmax_lastdim(a_s).astype(bf16)   # attn_drop = identity
            ov_ref[0:N, sl] = jnp.dot(p_s, v_b[:, sl],
                                      preferred_element_type=f32)

            if need_t_attn:
                a_t = jnp.einsum('nd,md->nm', qc_b[:, sl], kt_b[:, sl],
                                 preferred_element_type=f32) + pos
                logits_t_ref[0, h] = a_t
                p_t = _softmax_lastdim(a_t).astype(bf16)
                ov_ref[row_tv:row_tv + N, sl] = jnp.dot(
                    p_t, v_b[:, sl], preferred_element_type=f32)

            if need_t_v:
                ov_ref[row_ta:row_ta + N, sl] = jnp.dot(
                    p_s, vt_b[:, sl], preferred_element_type=f32)

        # ---- one shared full-width (C-deep) out-projection for all branches ----
        proj = jnp.dot(ov_ref[...].astype(bf16), w_o_ref[...],
                       preferred_element_type=f32) + bias[_B_O:_B_O + 1]
        for i in range(n_out):
            out_ref[0, i] = proj[i * N:(i + 1) * N]

    return kernel


def _cross_attn_pallas(q_in_b, qsine_b, key_b, value_b, kpos_b,
                       w_q, w_qs, w_kp, w_k, w_v, w_o, bias,
                       num_heads, is_first_layer, need_t_attn, need_t_v):
    """q_in_b (B,N,Cq); qsine_b (B,N,C); key/value/kpos (B,HW,C) -- bf16."""
    B, N, Cq = q_in_b.shape
    HW, C = key_b.shape[1], key_b.shape[2]
    H = num_heads
    hd = C // H
    n_out = 1 + int(need_t_attn) + int(need_t_v)
    separate_value = value_b is not None

    kernel = _make_kernel(H, hd, is_first_layer, need_t_attn, need_t_v,
                          separate_value)

    act3 = lambda b: (b, 0, 0)
    const2 = lambda b: (0, 0)      # constant map -> weights DMA'd once, resident
    out4 = lambda b: (b, 0, 0, 0)

    inputs = [q_in_b, qsine_b, key_b]
    in_specs = [pl.BlockSpec((1, N, Cq), act3),
                pl.BlockSpec((1, N, C), act3),
                pl.BlockSpec((1, HW, C), act3)]
    if separate_value:
        inputs.append(value_b)
        in_specs.append(pl.BlockSpec((1, HW, C), act3))
    inputs += [kpos_b, w_q, w_qs, w_kp, w_k, w_v, w_o, bias]
    in_specs += [pl.BlockSpec((1, HW, C), act3),
                 pl.BlockSpec(w_q.shape, const2),
                 pl.BlockSpec(w_qs.shape, const2),
                 pl.BlockSpec(w_kp.shape, const2),
                 pl.BlockSpec(w_k.shape, const2),
                 pl.BlockSpec(w_v.shape, const2),
                 pl.BlockSpec(w_o.shape, const2),
                 pl.BlockSpec(bias.shape, const2)]

    # NOTE: for C >= 128 (production DETR) the (N, C) / (N, HW) stores are
    # lane-dense; at the tiny test shapes they are masked but negligible.
    out_shape = [jax.ShapeDtypeStruct((B, n_out, N, C), jnp.float32),
                 jax.ShapeDtypeStruct((B, H, N, HW), jnp.float32)]
    out_specs = [pl.BlockSpec((1, n_out, N, C), out4),
                 pl.BlockSpec((1, H, N, HW), out4)]
    if need_t_attn:
        out_shape.append(jax.ShapeDtypeStruct((B, H, N, HW), jnp.float32))
        out_specs.append(pl.BlockSpec((1, H, N, HW), out4))

    return pl.pallas_call(
        kernel,
        out_shape=out_shape,
        grid_spec=pltpu.PrefetchScalarGridSpec(
            num_scalar_prefetch=0,
            grid=(B,),
            in_specs=in_specs,
            out_specs=out_specs,
            scratch_shapes=[pltpu.VMEM((n_out * N, C), jnp.float32)]),
        compiler_params=pltpu.CompilerParams(
            dimension_semantics=("parallel",),
            vmem_limit_bytes=32 * 1024 * 1024),
    )(*inputs)


def init_params(key, embed_dim, num_heads, dtype=jnp.bfloat16):
    """Deterministic params for the 9 Linear layers, pre-fused for the kernel."""
    C, H = embed_dim, num_heads
    hd = C // H
    scale = (2 * hd) ** (-0.5)         # folded into the q-side weights/biases

    names = ["query_content", "query_pos", "query_pos_sine", "key_content",
             "key_pos", "value", "out", "teacher_key_content", "teacher_value"]
    keys = jax.random.split(key, 2 * len(names))
    raw = {}
    for i, n in enumerate(names):
        w = 0.02 * jax.random.normal(keys[2 * i], (C, C), jnp.float32)  # torch (out,in)
        b = 0.01 * jax.random.normal(keys[2 * i + 1], (C,), jnp.float32)
        raw[n] = (w, b)

    wt = lambda n: raw[n][0].T          # (in, out) so the kernel computes x @ W
    bs = lambda n: raw[n][1]

    def pack_bias(first):
        bq = scale * (bs("query_content") + (bs("query_pos") if first else 0.0))
        return jnp.stack([
            bq,                               # _B_Q
            scale * bs("query_pos_sine"),     # _B_QS
            bs("key_pos"),                    # _B_KP
            bs("key_content"),                # _B_KC
            bs("teacher_key_content"),        # _B_TKC
            bs("value"),                      # _B_V
            bs("teacher_value"),              # _B_TV
            bs("out"),                        # _B_O
        ], axis=0).astype(jnp.float32)

    return dict(
        w_q=(scale * wt("query_content")).astype(dtype),                 # (C, C)
        w_q_first=(scale * jnp.concatenate(
            [wt("query_content"), wt("query_pos")], axis=0)).astype(dtype),  # (2C, C)
        w_qs=(scale * wt("query_pos_sine")).astype(dtype),
        w_kp=wt("key_pos").astype(dtype),
        w_k2=jnp.concatenate([wt("key_content"),
                              wt("teacher_key_content")], axis=1).astype(dtype),
        w_v2=jnp.concatenate([wt("value"),
                              wt("teacher_value")], axis=1).astype(dtype),
        w_o=wt("out").astype(dtype),
        bias=pack_bias(False),
        bias_first=pack_bias(True),
    )


def ks_conditional_cross_attention_dynamic_attn(
        query, params, num_heads, key=None, value=None, identity=None,
        query_pos=None, key_pos=None, query_sine_embed=None,
        is_first_layer=False, dynamic_attn_config="TripleAttention"):
    """Forward of KSConditionalCrossAttentionDynamicAttn (ksgt=None, eval, no masks).

    query/query_pos/query_sine_embed: (N, B, C); key/value/key_pos: (HW, B, C)
    (batch_first=False). Returns (output_list, cross_attn_out_dict).
    """
    if key is None:
        key = query
    separate_value = value is not None
    if value is None:
        value = key
    if identity is None:
        identity = query
    if key_pos is None:
        if query_pos is not None and query_pos.shape == key.shape:
            key_pos = query_pos
    assert query_pos is not None and key_pos is not None
    assert query_sine_embed is not None

    if dynamic_attn_config not in ("PlainAttention", "DualAttentionShareV",
                                   "DualAttentionShareA", "TripleAttention"):
        raise NotImplementedError(dynamic_attn_config)
    need_t_attn = dynamic_attn_config in ("DualAttentionShareV", "TripleAttention")
    need_t_v = dynamic_attn_config in ("DualAttentionShareA", "TripleAttention")

    # (S, B, C) -> (B, S, C) + bf16 cast (halves the kernel's activation DMA).
    # TODO(synk): if the surrounding model can produce batch-first tensors these
    # wrapper transposes (a full HBM pass each) disappear.
    to_b = lambda x: jnp.transpose(x, (1, 0, 2)).astype(jnp.bfloat16)

    C = query.shape[-1]
    if is_first_layer:
        q_in_b = jnp.concatenate([to_b(query), to_b(query_pos)], axis=-1)
        w_q = params["w_q_first"]          # [Wqc; Wqp] -> one (N,2C)@(2C,C) matmul
        bias = params["bias_first"]
    else:
        q_in_b = to_b(query)               # query_pos / Wqp not DMA'd at all
        w_q = params["w_q"]
        bias = params["bias"]

    w_k = params["w_k2"] if need_t_attn else params["w_k2"][:, :C]
    w_v = params["w_v2"] if need_t_v else params["w_v2"][:, :C]

    outs = _cross_attn_pallas(
        q_in_b, to_b(query_sine_embed), to_b(key),
        to_b(value) if separate_value else None, to_b(key_pos),
        w_q, params["w_qs"], params["w_kp"], w_k, w_v, params["w_o"], bias,
        num_heads, is_first_layer, need_t_attn, need_t_v)

    if need_t_attn:
        out_b, attn_logits_student, attn_logits_teacher = outs
    else:
        out_b, attn_logits_student = outs
        attn_logits_teacher = None

    # (B, n_out, N, C) -> n_out tensors of (N, B, C) (batch_first=False layout).
    n_out = out_b.shape[1]
    outs_nbc = [jnp.transpose(out_b[:, i], (1, 0, 2)) for i in range(n_out)]
    output = [identity + o for o in outs_nbc]   # proj_drop is identity (p=0/eval)

    if dynamic_attn_config == "PlainAttention":
        logits_t = []
    elif dynamic_attn_config == "DualAttentionShareV":
        logits_t = [attn_logits_teacher]
    elif dynamic_attn_config == "DualAttentionShareA":
        logits_t = [attn_logits_student]
    else:  # TripleAttention
        logits_t = [attn_logits_teacher, attn_logits_student]

    cross_attn_out_dict = dict(ca_attn_map_logits=attn_logits_student)
    if logits_t:
        cross_attn_out_dict["attn_output_weights_logits_t"] = logits_t
    return output, cross_attn_out_dict


if __name__ == "__main__":
    N, HW, B, C, H = 16, 32, 2, 32, 4     # num_query, num_key, batch, embed, heads
    key0 = jax.random.PRNGKey(0)
    ks = jax.random.split(key0, 6)
    query = jax.random.normal(ks[0], (N, B, C), jnp.float32)
    query_pos = jax.random.normal(ks[1], (N, B, C), jnp.float32)
    query_sine = jax.random.normal(ks[2], (N, B, C), jnp.float32)
    memory = jax.random.normal(ks[3], (HW, B, C), jnp.float32)   # key (value defaults to key)
    key_pos = jax.random.normal(ks[4], (HW, B, C), jnp.float32)
    params = init_params(ks[5], C, H)

    output, attn_dict = ks_conditional_cross_attention_dynamic_attn(
        query, params, num_heads=H, key=memory, value=None,
        query_pos=query_pos, key_pos=key_pos, query_sine_embed=query_sine,
        is_first_layer=True, dynamic_attn_config="TripleAttention")

    jax.block_until_ready(output)
    jax.block_until_ready(attn_dict["ca_attn_map_logits"])

    assert len(output) == 3
    for o in output:
        assert o.shape == (N, B, C)
    assert attn_dict["ca_attn_map_logits"].shape == (B, H, N, HW)
    assert len(attn_dict["attn_output_weights_logits_t"]) == 2
    for t in attn_dict["attn_output_weights_logits_t"]:
        assert t.shape == (B, H, N, HW)
    print("KERNEL_OK")
</pallas_src>

<mosaic_0001>
module attributes {stable_mosaic.version = 11 : i64} {
  func.func @kernel(%arg0: i32, %arg1: memref<1x16x64xbf16, #tpu.memory_space<vmem>>, %arg2: memref<1x16x32xbf16, #tpu.memory_space<vmem>>, %arg3: memref<1x32x32xbf16, #tpu.memory_space<vmem>>, %arg4: memref<1x32x32xbf16, #tpu.memory_space<vmem>>, %arg5: memref<64x32xbf16, #tpu.memory_space<vmem>>, %arg6: memref<32x32xbf16, #tpu.memory_space<vmem>>, %arg7: memref<32x32xbf16, #tpu.memory_space<vmem>>, %arg8: memref<32x64xbf16, #tpu.memory_space<vmem>>, %arg9: memref<32x64xbf16, #tpu.memory_space<vmem>>, %arg10: memref<32x32xbf16, #tpu.memory_space<vmem>>, %arg11: memref<8x32xf32, #tpu.memory_space<vmem>>, %arg12: memref<1x3x16x32xf32, #tpu.memory_space<vmem>>, %arg13: memref<1x4x16x32xf32, #tpu.memory_space<vmem>>, %arg14: memref<1x4x16x32xf32, #tpu.memory_space<vmem>>, %arg15: memref<48x32xf32, #tpu.memory_space<vmem>>) attributes {dimension_semantics = [#tpu.dimension_semantics<parallel>], iteration_bounds = array<i64: 2>, scalar_prefetch = 0 : i64, scratch_operands = 1 : i64, tpu.core_type = #tpu.core_type<tc>, window_params = [{transform_indices = @transform_0, window_bounds = array<i64: 1, 16, 64>}, {transform_indices = @transform_1, window_bounds = array<i64: 1, 16, 32>}, {transform_indices = @transform_2, window_bounds = array<i64: 1, 32, 32>}, {transform_indices = @transform_3, window_bounds = array<i64: 1, 32, 32>}, {pipeline_mode = #tpu.pipeline_mode<synchronous>, transform_indices = @transform_4, window_bounds = array<i64: 64, 32>}, {pipeline_mode = #tpu.pipeline_mode<synchronous>, transform_indices = @transform_5, window_bounds = array<i64: 32, 32>}, {pipeline_mode = #tpu.pipeline_mode<synchronous>, transform_indices = @transform_6, window_bounds = array<i64: 32, 32>}, {pipeline_mode = #tpu.pipeline_mode<synchronous>, transform_indices = @transform_7, window_bounds = array<i64: 32, 64>}, {pipeline_mode = #tpu.pipeline_mode<synchronous>, transform_indices = @transform_8, window_bounds = array<i64: 32, 64>}, {pipeline_mode = #tpu.pipeline_mode<synchronous>, transform_indices = @transform_9, window_bounds = array<i64: 32, 32>}, {pipeline_mode = #tpu.pipeline_mode<synchronous>, transform_indices = @transform_10, window_bounds = array<i64: 8, 32>}, {transform_indices = @transform_11, window_bounds = array<i64: 1, 3, 16, 32>}, {transform_indices = @transform_12, window_bounds = array<i64: 1, 4, 16, 32>}, {transform_indices = @transform_13, window_bounds = array<i64: 1, 4, 16, 32>}]} {
    %c0 = arith.constant 0 : index
    %c0_0 = arith.constant 0 : index
    %0 = vector.load %arg11[%c0, %c0_0] : memref<8x32xf32, #tpu.memory_space<vmem>>, vector<8x32xf32>
    %c0_1 = arith.constant 0 : index
    %c0_2 = arith.constant 0 : index
    %c0_3 = arith.constant 0 : index
    %1 = vector.load %arg1[%c0_1, %c0_2, %c0_3] : memref<1x16x64xbf16, #tpu.memory_space<vmem>>, vector<1x16x64xbf16>
    %2 = vector.shape_cast %1 : vector<1x16x64xbf16> to vector<16x64xbf16>
    %c0_4 = arith.constant 0 : index
    %c0_5 = arith.constant 0 : index
    %3 = vector.load %arg5[%c0_4, %c0_5] : memref<64x32xbf16, #tpu.memory_space<vmem>>, vector<64x32xbf16>
    %cst = arith.constant dense<0.000000e+00> : vector<16x32xf32>
    %4 = tpu.matmul %2, %3, %cst {dimension_numbers = #tpu.dot_dimension_numbers<[1], [0], [0], [1], [0, 0, 1, 1], [], []>} : vector<16x64xbf16>, vector<64x32xbf16>, vector<16x32xf32> -> vector<16x32xf32>
    %5 = vector.extract_strided_slice %0 {offsets = [0, 0], sizes = [1, 32], strides = [1, 1]} : vector<8x32xf32> to vector<1x32xf32>
    %6 = vector.broadcast %5 : vector<1x32xf32> to vector<16x32xf32>
    %7 = arith.addf %4, %6 : vector<16x32xf32>
    %c0_6 = arith.constant 0 : index
    %c0_7 = arith.constant 0 : index
    %c0_8 = arith.constant 0 : index
    %8 = vector.load %arg2[%c0_6, %c0_7, %c0_8] : memref<1x16x32xbf16, #tpu.memory_space<vmem>>, vector<1x16x32xbf16>
    %9 = vector.shape_cast %8 : vector<1x16x32xbf16> to vector<16x32xbf16>
    %c0_9 = arith.constant 0 : index
    %c0_10 = arith.constant 0 : index
    %10 = vector.load %arg6[%c0_9, %c0_10] : memref<32x32xbf16, #tpu.memory_space<vmem>>, vector<32x32xbf16>
    %cst_11 = arith.constant dense<0.000000e+00> : vector<16x32xf32>
    %11 = tpu.matmul %9, %10, %cst_11 {dimension_numbers = #tpu.dot_dimension_numbers<[1], [0], [0], [1], [0, 0, 1, 1], [], []>} : vector<16x32xbf16>, vector<32x32xbf16>, vector<16x32xf32> -> vector<16x32xf32>
    %12 = vector.extract_strided_slice %0 {offsets = [1, 0], sizes = [1, 32], strides = [1, 1]} : vector<8x32xf32> to vector<1x32xf32>
    %13 = vector.broadcast %12 : vector<1x32xf32> to vector<16x32xf32>
    %14 = arith.addf %11, %13 : vector<16x32xf32>
    %c0_12 = arith.constant 0 : index
    %c0_13 = arith.constant 0 : index
    %c0_14 = arith.constant 0 : index
    %15 = vector.load %arg4[%c0_12, %c0_13, %c0_14] : memref<1x32x32xbf16, #tpu.memory_space<vmem>>, vector<1x32x32xbf16>
    %16 = vector.shape_cast %15 : vector<1x32x32xbf16> to vector<32x32xbf16>
    %c0_15 = arith.constant 0 : index
    %c0_16 = arith.constant 0 : index
    %17 = vector.load %arg7[%c0_15, %c0_16] : memref<32x32xbf16, #tpu.memory_space<vmem>>, vector<32x32xbf16>
    %cst_17 = arith.constant dense<0.000000e+00> : vector<32x32xf32>
    %18 = tpu.matmul %16, %17, %cst_17 {dimension_numbers = #tpu.dot_dimension_numbers<[1], [0], [0], [1], [0, 0, 1, 1], [], []>} : vector<32x32xbf16>, vector<32x32xbf16>, vector<32x32xf32> -> vector<32x32xf32>
    %19 = vector.extract_strided_slice %0 {offsets = [2, 0], sizes = [1, 32], strides = [1, 1]} : vector<8x32xf32> to vector<1x32xf32>
    %20 = vector.broadcast %19 : vector<1x32xf32> to vector<32x32xf32>
    %21 = arith.addf %18, %20 : vector<32x32xf32>
    %c0_18 = arith.constant 0 : index
    %c0_19 = arith.constant 0 : index
    %c0_20 = arith.constant 0 : index
    %22 = vector.load %arg3[%c0_18, %c0_19, %c0_20] : memref<1x32x32xbf16, #tpu.memory_space<vmem>>, vector<1x32x32xbf16>
    %23 = vector.shape_cast %22 : vector<1x32x32xbf16> to vector<32x32xbf16>
    %c0_21 = arith.constant 0 : index
    %c0_22 = arith.constant 0 : index
    %24 = vector.load %arg8[%c0_21, %c0_22] : memref<32x64xbf16, #tpu.memory_space<vmem>>, vector<32x64xbf16>
    %cst_23 = arith.constant dense<0.000000e+00> : vector<32x64xf32>
    %25 = tpu.matmul %23, %24, %cst_23 {dimension_numbers = #tpu.dot_dimension_numbers<[1], [0], [0], [1], [0, 0, 1, 1], [], []>} : vector<32x32xbf16>, vector<32x64xbf16>, vector<32x64xf32> -> vector<32x64xf32>
    %c0_24 = arith.constant 0 : index
    %c0_25 = arith.constant 0 : index
    %c0_26 = arith.constant 0 : index
    %26 = vector.load %arg3[%c0_24, %c0_25, %c0_26] : memref<1x32x32xbf16, #tpu.memory_space<vmem>>, vector<1x32x32xbf16>
    %27 = vector.shape_cast %26 : vector<1x32x32xbf16> to vector<32x32xbf16>
    %c0_27 = arith.constant 0 : index
    %c0_28 = arith.constant 0 : index
    %28 = vector.load %arg9[%c0_27, %c0_28] : memref<32x64xbf16, #tpu.memory_space<vmem>>, vector<32x64xbf16>
    %cst_29 = arith.constant dense<0.000000e+00> : vector<32x64xf32>
    %29 = tpu.matmul %27, %28, %cst_29 {dimension_numbers = #tpu.dot_dimension_numbers<[1], [0], [0], [1], [0, 0, 1, 1], [], []>} : vector<32x32xbf16>, vector<32x64xbf16>, vector<32x64xf32> -> vector<32x64xf32>
    %30 = vector.extract_strided_slice %25 {offsets = [0, 0], sizes = [32, 32], strides = [1, 1]} : vector<32x64xf32> to vector<32x32xf32>
    %31 = vector.extract_strided_slice %0 {offsets = [3, 0], sizes = [1, 32], strides = [1, 1]} : vector<8x32xf32> to vector<1x32xf32>
    %32 = vector.broadcast %31 : vector<1x32xf32> to vector<32x32xf32>
    %33 = arith.addf %30, %32 : vector<32x32xf32>
    %34 = vector.extract_strided_slice %29 {offsets = [0, 0], sizes = [32, 32], strides = [1, 1]} : vector<32x64xf32> to vector<32x32xf32>
    %35 = vector.extract_strided_slice %0 {offsets = [5, 0], sizes = [1, 32], strides = [1, 1]} : vector<8x32xf32> to vector<1x32xf32>
    %36 = vector.broadcast %35 : vector<1x32xf32> to vector<32x32xf32>
    %37 = arith.addf %34, %36 : vector<32x32xf32>
    %38 = arith.addf %33, %21 : vector<32x32xf32>
    %39 = vector.extract_strided_slice %25 {offsets = [0, 32], sizes = [32, 32], strides = [1, 1]} : vector<32x64xf32> to vector<32x32xf32>
    %40 = vector.extract_strided_slice %0 {offsets = [4, 0], sizes = [1, 32], strides = [1, 1]} : vector<8x32xf32> to vector<1x32xf32>
    %41 = vector.broadcast %40 : vector<1x32xf32> to vector<32x32xf32>
    %42 = arith.addf %39, %41 : vector<32x32xf32>
    %43 = arith.addf %42, %21 : vector<32x32xf32>
    %44 = vector.extract_strided_slice %29 {offsets = [0, 32], sizes = [32, 32], strides = [1, 1]} : vector<32x64xf32> to vector<32x32xf32>
    %45 = vector.extract_strided_slice %0 {offsets = [6, 0], sizes = [1, 32], strides = [1, 1]} : vector<8x32xf32> to vector<1x32xf32>
    %46 = vector.broadcast %45 : vector<1x32xf32> to vector<32x32xf32>
    %47 = arith.addf %44, %46 : vector<32x32xf32>
    %48 = arith.truncf %7 : vector<16x32xf32> to vector<16x32xbf16>
    %49 = arith.truncf %14 : vector<16x32xf32> to vector<16x32xbf16>
    %50 = arith.truncf %21 : vector<32x32xf32> to vector<32x32xbf16>
    %51 = arith.truncf %38 : vector<32x32xf32> to vector<32x32xbf16>
    %52 = arith.truncf %37 : vector<32x32xf32> to vector<32x32xbf16>
    %53 = arith.truncf %43 : vector<32x32xf32> to vector<32x32xbf16>
    %54 = arith.truncf %47 : vector<32x32xf32> to vector<32x32xbf16>
    %55 = vector.extract_strided_slice %49 {offsets = [0, 0], sizes = [16, 8], strides = [1, 1]} : vector<16x32xbf16> to vector<16x8xbf16>
    %56 = vector.extract_strided_slice %50 {offsets = [0, 0], sizes = [32, 8], strides = [1, 1]} : vector<32x32xbf16> to vector<32x8xbf16>
    "tpu.trace_start"() <{level = 10 : i32, message = "nd,md->nm"}> : () -> ()
    %cst_30 = arith.constant dense<0.000000e+00> : vector<16x32xf32>
    %57 = tpu.matmul %55, %56, %cst_30 {dimension_numbers = #tpu.dot_dimension_numbers<[1], [1], [0], [0], [0, 0, 1, 0], [], []>} : vector<16x8xbf16>, vector<32x8xbf16>, vector<16x32xf32> -> vector<16x32xf32>
    "tpu.trace_stop"() : () -> ()
    %58 = vector.extract_strided_slice %48 {offsets = [0, 0], sizes = [16, 8], strides = [1, 1]} : vector<16x32xbf16> to vector<16x8xbf16>
    %59 = vector.extract_strided_slice %51 {offsets = [0, 0], sizes = [32, 8], strides = [1, 1]} : vector<32x32xbf16> to vector<32x8xbf16>
    "tpu.trace_start"() <{level = 10 : i32, message = "nd,md->nm"}> : () -> ()
    %cst_31 = arith.constant dense<0.000000e+00> : vector<16x32xf32>
    %60 = tpu.matmul %58, %59, %cst_31 {dimension_numbers = #tpu.dot_dimension_numbers<[1], [1], [0], [0], [0, 0, 1, 0], [], []>} : vector<16x8xbf16>, vector<32x8xbf16>, vector<16x32xf32> -> vector<16x32xf32>
    "tpu.trace_stop"() : () -> ()
    %61 = arith.addf %60, %57 : vector<16x32xf32>
    %c0_32 = arith.constant 0 : index
    %c0_33 = arith.constant 0 : index
    %c0_34 = arith.constant 0 : index
    %c0_35 = arith.constant 0 : index
    %62 = vector.load %arg13[%c0_32, %c0_33, %c0_34, %c0_35] : memref<1x4x16x32xf32, #tpu.memory_space<vmem>>, vector<1x1x16x32xf32>
    %63 = vector.shape_cast %62 : vector<1x1x16x32xf32> to vector<16x32xf32>
    %64 = vector.shape_cast %61 : vector<16x32xf32> to vector<1x1x16x32xf32>
    tpu.vector_store %arg13[%c0_32, %c0_33, %c0_34, %c0_35], %64 {strides = array<i32>} : memref<1x4x16x32xf32, #tpu.memory_space<vmem>>, vector<1x1x16x32xf32>,
    %cst_36 = arith.constant dense<0xFF800000> : vector<16xf32>
    %65 = vector.multi_reduction <maximumf>, %61, %cst_36 [1] : vector<16x32xf32> to vector<16xf32>
    %66 = vector.shape_cast %65 : vector<16xf32> to vector<16x1xf32>
    %67 = vector.broadcast %66 : vector<16x1xf32> to vector<16x32xf32>
    %68 = arith.subf %61, %67 : vector<16x32xf32>
    %69 = math.exp %68 : vector<16x32xf32>
    %cst_37 = arith.constant dense<0.000000e+00> : vector<16xf32>
    %70 = vector.multi_reduction <add>, %69, %cst_37 [1] : vector<16x32xf32> to vector<16xf32>
    %71 = vector.shape_cast %70 : vector<16xf32> to vector<16x1xf32>
    %72 = tpu.reciprocal %71 {approx = true} : vector<16x1xf32> -> vector<16x1xf32>
    %73 = vector.broadcast %72 : vector<16x1xf32> to vector<16x32xf32>
    %74 = arith.mulf %69, %73 : vector<16x32xf32>
    %75 = arith.truncf %74 : vector<16x32xf32> to vector<16x32xbf16>
    %76 = vector.extract_strided_slice %52 {offsets = [0, 0], sizes = [32, 8], strides = [1, 1]} : vector<32x32xbf16> to vector<32x8xbf16>
    %cst_38 = arith.constant dense<0.000000e+00> : vector<16x8xf32>
    %77 = tpu.matmul %75, %76, %cst_38 {dimension_numbers = #tpu.dot_dimension_numbers<[1], [0], [0], [1], [0, 0, 1, 1], [], []>} : vector<16x32xbf16>, vector<32x8xbf16>, vector<16x8xf32> -> vector<16x8xf32>
    %c0_39 = arith.constant 0 : index
    %c0_40 = arith.constant 0 : index
    %78 = vector.load %arg15[%c0_39, %c0_40] : memref<48x32xf32, #tpu.memory_space<vmem>>, vector<16x8xf32>
    tpu.vector_store %arg15[%c0_39, %c0_40], %77 {strides = array<i32>} : memref<48x32xf32, #tpu.memory_space<vmem>>, vector<16x8xf32>,
    %79 = vector.extract_strided_slice %48 {offsets = [0, 0], sizes = [16, 8], strides = [1, 1]} : vector<16x32xbf16> to vector<16x8xbf16>
    %80 = vector.extract_strided_slice %53 {offsets = [0, 0], sizes = [32, 8], strides = [1, 1]} : vector<32x32xbf16> to vector<32x8xbf16>
    "tpu.trace_start"() <{level = 10 : i32, message = "nd,md->nm"}> : () -> ()
    %cst_41 = arith.constant dense<0.000000e+00> : vector<16x32xf32>
    %81 = tpu.matmul %79, %80, %cst_41 {dimension_numbers = #tpu.dot_dimension_numbers<[1], [1], [0], [0], [0, 0, 1, 0], [], []>} : vector<16x8xbf16>, vector<32x8xbf16>, vector<16x32xf32> -> vector<16x32xf32>
    "tpu.trace_stop"() : () -> ()
    %82 = arith.addf %81, %57 : vector<16x32xf32>
    %c0_42 = arith.constant 0 : index
    %c0_43 = arith.constant 0 : index
    %c0_44 = arith.constant 0 : index
    %c0_45 = arith.constant 0 : index
    %83 = vector.load %arg14[%c0_42, %c0_43, %c0_44, %c0_45] : memref<1x4x16x32xf32, #tpu.memory_space<vmem>>, vector<1x1x16x32xf32>
    %84 = vector.shape_cast %83 : vector<1x1x16x32xf32> to vector<16x32xf32>
    %85 = vector.shape_cast %82 : vector<16x32xf32> to vector<1x1x16x32xf32>
    tpu.vector_store %arg14[%c0_42, %c0_43, %c0_44, %c0_45], %85 {strides = array<i32>} : memref<1x4x16x32xf32, #tpu.memory_space<vmem>>, vector<1x1x16x32xf32>,
    %cst_46 = arith.constant dense<0xFF800000> : vector<16xf32>
    %86 = vector.multi_reduction <maximumf>, %82, %cst_46 [1] : vector<16x32xf32> to vector<16xf32>
    %87 = vector.shape_cast %86 : vector<16xf32> to vector<16x1xf32>
    %88 = vector.broadcast %87 : vector<16x1xf32> to vector<16x32xf32>
    %89 = arith.subf %82, %88 : vector<16x32xf32>
    %90 = math.exp %89 : vector<16x32xf32>
    %cst_47 = arith.constant dense<0.000000e+00> : vector<16xf32>
    %91 = vector.multi_reduction <add>, %90, %cst_47 [1] : vector<16x32xf32> to vector<16xf32>
    %92 = vector.shape_cast %91 : vector<16xf32> to vector<16x1xf32>
    %93 = tpu.reciprocal %92 {approx = true} : vector<16x1xf32> -> vector<16x1xf32>
    %94 = vector.broadcast %93 : vector<16x1xf32> to vector<16x32xf32>
    %95 = arith.mulf %90, %94 : vector<16x32xf32>
    %96 = arith.truncf %95 : vector<16x32xf32> to vector<16x32xbf16>
    %97 = vector.extract_strided_slice %52 {offsets = [0, 0], sizes = [32, 8], strides = [1, 1]} : vector<32x32xbf16> to vector<32x8xbf16>
    %cst_48 = arith.constant dense<0.000000e+00> : vector<16x8xf32>
    %98 = tpu.matmul %96, %97, %cst_48 {dimension_numbers = #tpu.dot_dimension_numbers<[1], [0], [0], [1], [0, 0, 1, 1], [], []>} : vector<16x32xbf16>, vector<32x8xbf16>, vector<16x8xf32> -> vector<16x8xf32>
    %c16 = arith.constant 16 : index
    %c0_49 = arith.constant 0 : index
    %99 = vector.load %arg15[%c16, %c0_49] : memref<48x32xf32, #tpu.memory_space<vmem>>, vector<16x8xf32>
    tpu.vector_store %arg15[%c16, %c0_49], %98 {strides = array<i32>} : memref<48x32xf32, #tpu.memory_space<vmem>>, vector<16x8xf32>,
    %100 = vector.extract_strided_slice %54 {offsets = [0, 0], sizes = [32, 8], strides = [1, 1]} : vector<32x32xbf16> to vector<32x8xbf16>
    %cst_50 = arith.constant dense<0.000000e+00> : vector<16x8xf32>
    %101 = tpu.matmul %75, %100, %cst_50 {dimension_numbers = #tpu.dot_dimension_numbers<[1], [0], [0], [1], [0, 0, 1, 1], [], []>} : vector<16x32xbf16>, vector<32x8xbf16>, vector<16x8xf32> -> vector<16x8xf32>
    %c32 = arith.constant 32 : index
    %c0_51 = arith.constant 0 : index
    %102 = vector.load %arg15[%c32, %c0_51] : memref<48x32xf32, #tpu.memory_space<vmem>>, vector<16x8xf32>
    tpu.vector_store %arg15[%c32, %c0_51], %101 {strides = array<i32>} : memref<48x32xf32, #tpu.memory_space<vmem>>, vector<16x8xf32>,
    %103 = vector.extract_strided_slice %49 {offsets = [0, 8], sizes = [16, 8], strides = [1, 1]} : vector<16x32xbf16> to vector<16x8xbf16>
    %104 = vector.extract_strided_slice %50 {offsets = [0, 8], sizes = [32, 8], strides = [1, 1]} : vector<32x32xbf16> to vector<32x8xbf16>
    "tpu.trace_start"() <{level = 10 : i32, message = "nd,md->nm"}> : () -> ()
    %cst_52 = arith.constant dense<0.000000e+00> : vector<16x32xf32>
    %105 = tpu.matmul %103, %104, %cst_52 {dimension_numbers = #tpu.dot_dimension_numbers<[1], [1], [0], [0], [0, 0, 1, 0], [], []>} : vector<16x8xbf16>, vector<32x8xbf16>, vector<16x32xf32> -> vector<16x32xf32>
    "tpu.trace_stop"() : () -> ()
    %106 = vector.extract_strided_slice %48 {offsets = [0, 8], sizes = [16, 8], strides = [1, 1]} : vector<16x32xbf16> to vector<16x8xbf16>
    %107 = vector.extract_strided_slice %51 {offsets = [0, 8], sizes = [32, 8], strides = [1, 1]} : vector<32x32xbf16> to vector<32x8xbf16>
    "tpu.trace_start"() <{level = 10 : i32, message = "nd,md->nm"}> : () -> ()
    %cst_53 = arith.constant dense<0.000000e+00> : vector<16x32xf32>
    %108 = tpu.matmul %106, %107, %cst_53 {dimension_numbers = #tpu.dot_dimension_numbers<[1], [1], [0], [0], [0, 0, 1, 0], [], []>} : vector<16x8xbf16>, vector<32x8xbf16>, vector<16x32xf32> -> vector<16x32xf32>
    "tpu.trace_stop"() : () -> ()
    %109 = arith.addf %108, %105 : vector<16x32xf32>
    %c0_54 = arith.constant 0 : index
    %c1 = arith.constant 1 : index
    %c0_55 = arith.constant 0 : index
    %c0_56 = arith.constant 0 : index
    %110 = vector.load %arg13[%c0_54, %c1, %c0_55, %c0_56] : memref<1x4x16x32xf32, #tpu.memory_space<vmem>>, vector<1x1x16x32xf32>
    %111 = vector.shape_cast %110 : vector<1x1x16x32xf32> to vector<16x32xf32>
    %112 = vector.shape_cast %109 : vector<16x32xf32> to vector<1x1x16x32xf32>
    tpu.vector_store %arg13[%c0_54, %c1, %c0_55, %c0_56], %112 {strides = array<i32>} : memref<1x4x16x32xf32, #tpu.memory_space<vmem>>, vector<1x1x16x32xf32>,
    %cst_57 = arith.constant dense<0xFF800000> : vector<16xf32>
    %113 = vector.multi_reduction <maximumf>, %109, %cst_57 [1] : vector<16x32xf32> to vector<16xf32>
    %114 = vector.shape_cast %113 : vector<16xf32> to vector<16x1xf32>
    %115 = vector.broadcast %114 : vector<16x1xf32> to vector<16x32xf32>
    %116 = arith.subf %109, %115 : vector<16x32xf32>
    %117 = math.exp %116 : vector<16x32xf32>
    %cst_58 = arith.constant dense<0.000000e+00> : vector<16xf32>
    %118 = vector.multi_reduction <add>, %117, %cst_58 [1] : vector<16x32xf32> to vector<16xf32>
    %119 = vector.shape_cast %118 : vector<16xf32> to vector<16x1xf32>
    %120 = tpu.reciprocal %119 {approx = true} : vector<16x1xf32> -> vector<16x1xf32>
    %121 = vector.broadcast %120 : vector<16x1xf32> to vector<16x32xf32>
    %122 = arith.mulf %117, %121 : vector<16x32xf32>
    %123 = arith.truncf %122 : vector<16x32xf32> to vector<16x32xbf16>
    %124 = vector.extract_strided_slice %52 {offsets = [0, 8], sizes = [32, 8], strides = [1, 1]} : vector<32x32xbf16> to vector<32x8xbf16>
    %cst_59 = arith.constant dense<0.000000e+00> : vector<16x8xf32>
    %125 = tpu.matmul %123, %124, %cst_59 {dimension_numbers = #tpu.dot_dimension_numbers<[1], [0], [0], [1], [0, 0, 1, 1], [], []>} : vector<16x32xbf16>, vector<32x8xbf16>, vector<16x8xf32> -> vector<16x8xf32>
    %c0_60 = arith.constant 0 : index
    %c8 = arith.constant 8 : index
    %126 = vector.load %arg15[%c0_60, %c8] : memref<48x32xf32, #tpu.memory_space<vmem>>, vector<16x8xf32>
    tpu.vector_store %arg15[%c0_60, %c8], %125 {strides = array<i32>} : memref<48x32xf32, #tpu.memory_space<vmem>>, vector<16x8xf32>,
    %127 = vector.extract_strided_slice %48 {offsets = [0, 8], sizes = [16, 8], strides = [1, 1]} : vector<16x32xbf16> to vector<16x8xbf16>
    %128 = vector.extract_strided_slice %53 {offsets = [0, 8], sizes = [32, 8], strides = [1, 1]} : vector<32x32xbf16> to vector<32x8xbf16>
    "tpu.trace_start"() <{level = 10 : i32, message = "nd,md->nm"}> : () -> ()
    %cst_61 = arith.constant dense<0.000000e+00> : vector<16x32xf32>
    %129 = tpu.matmul %127, %128, %cst_61 {dimension_numbers = #tpu.dot_dimension_numbers<[1], [1], [0], [0], [0, 0, 1, 0], [], []>} : vector<16x8xbf16>, vector<32x8xbf16>, vector<16x32xf32> -> vector<16x32xf32>
    "tpu.trace_stop"() : () -> ()
    %130 = arith.addf %129, %105 : vector<16x32xf32>
    %c0_62 = arith.constant 0 : index
    %c1_63 = arith.constant 1 : index
    %c0_64 = arith.constant 0 : index
    %c0_65 = arith.constant 0 : index
    %131 = vector.load %arg14[%c0_62, %c1_63, %c0_64, %c0_65] : memref<1x4x16x32xf32, #tpu.memory_space<vmem>>, vector<1x1x16x32xf32>
    %132 = vector.shape_cast %131 : vector<1x1x16x32xf32> to vector<16x32xf32>
    %133 = vector.shape_cast %130 : vector<16x32xf32> to vector<1x1x16x32xf32>
    tpu.vector_store %arg14[%c0_62, %c1_63, %c0_64, %c0_65], %133 {strides = array<i32>} : memref<1x4x16x32xf32, #tpu.memory_space<vmem>>, vector<1x1x16x32xf32>,
    %cst_66 = arith.constant dense<0xFF800000> : vector<16xf32>
    %134 = vector.multi_reduction <maximumf>, %130, %cst_66 [1] : vector<16x32xf32> to vector<16xf32>
    %135 = vector.shape_cast %134 : vector<16xf32> to vector<16x1xf32>
    %136 = vector.broadcast %135 : vector<16x1xf32> to vector<16x32xf32>
    %137 = arith.subf %130, %136 : vector<16x32xf32>
    %138 = math.exp %137 : vector<16x32xf32>
    %cst_67 = arith.constant dense<0.000000e+00> : vector<16xf32>
    %139 = vector.multi_reduction <add>, %138, %cst_67 [1] : vector<16x32xf32> to vector<16xf32>
    %140 = vector.shape_cast %139 : vector<16xf32> to vector<16x1xf32>
    %141 = tpu.reciprocal %140 {approx = true} : vector<16x1xf32> -> vector<16x1xf32>
    %142 = vector.broadcast %141 : vector<16x1xf32> to vector<16x32xf32>
    %143 = arith.mulf %138, %142 : vector<16x32xf32>
    %144 = arith.truncf %143 : vector<16x32xf32> to vector<16x32xbf16>
    %145 = vector.extract_strided_slice %52 {offsets = [0, 8], sizes = [32, 8], strides = [1, 1]} : vector<32x32xbf16> to vector<32x8xbf16>
    %cst_68 = arith.constant dense<0.000000e+00> : vector<16x8xf32>
    %146 = tpu.matmul %144, %145, %cst_68 {dimension_numbers = #tpu.dot_dimension_numbers<[1], [0], [0], [1], [0, 0, 1, 1], [], []>} : vector<16x32xbf16>, vector<32x8xbf16>, vector<16x8xf32> -> vector<16x8xf32>
    %c16_69 = arith.constant 16 : index
    %c8_70 = arith.constant 8 : index
    %147 = vector.load %arg15[%c16_69, %c8_70] : memref<48x32xf32, #tpu.memory_space<vmem>>, vector<16x8xf32>
    tpu.vector_store %arg15[%c16_69, %c8_70], %146 {strides = array<i32>} : memref<48x32xf32, #tpu.memory_space<vmem>>, vector<16x8xf32>,
    %148 = vector.extract_strided_slice %54 {offsets = [0, 8], sizes = [32, 8], strides = [1, 1]} : vector<32x32xbf16> to vector<32x8xbf16>
    %cst_71 = arith.constant dense<0.000000e+00> : vector<16x8xf32>
    %149 = tpu.matmul %123, %148, %cst_71 {dimension_numbers = #tpu.dot_dimension_numbers<[1], [0], [0], [1], [0, 0, 1, 1], [], []>} : vector<16x32xbf16>, vector<32x8xbf16>, vector<16x8xf32> -> vector<16x8xf32>
    %c32_72 = arith.constant 32 : index
    %c8_73 = arith.constant 8 : index
    %150 = vector.load %arg15[%c32_72, %c8_73] : memref<48x32xf32, #tpu.memory_space<vmem>>, vector<16x8xf32>
    tpu.vector_store %arg15[%c32_72, %c8_73], %149 {strides = array<i32>} : memref<48x32xf32, #tpu.memory_space<vmem>>, vector<16x8xf32>,
    %151 = vector.extract_strided_slice %49 {offsets = [0, 16], sizes = [16, 8], strides = [1, 1]} : vector<16x32xbf16> to vector<16x8xbf16>
    %152 = vector.extract_strided_slice %50 {offsets = [0, 16], sizes = [32, 8], strides = [1, 1]} : vector<32x32xbf16> to vector<32x8xbf16>
    "tpu.trace_start"() <{level = 10 : i32, message = "nd,md->nm"}> : () -> ()
    %cst_74 = arith.constant dense<0.000000e+00> : vector<16x32xf32>
    %153 = tpu.matmul %151, %152, %cst_74 {dimension_numbers = #tpu.dot_dimension_numbers<[1], [1], [0], [0], [0, 0, 1, 0], [], []>} : vector<16x8xbf16>, vector<32x8xbf16>, vector<16x32xf32> -> vector<16x32xf32>
    "tpu.trace_stop"() : () -> ()
    %154 = vector.extract_strided_slice %48 {offsets = [0, 16], sizes = [16, 8], strides = [1, 1]} : vector<16x32xbf16> to vector<16x8xbf16>
    %155 = vector.extract_strided_slice %51 {offsets = [0, 16], sizes = [32, 8], strides = [1, 1]} : vector<32x32xbf16> to vector<32x8xbf16>
    "tpu.trace_start"() <{level = 10 : i32, message = "nd,md->nm"}> : () -> ()
    %cst_75 = arith.constant dense<0.000000e+00> : vector<16x32xf32>
    %156 = tpu.matmul %154, %155, %cst_75 {dimension_numbers = #tpu.dot_dimension_numbers<[1], [1], [0], [0], [0, 0, 1, 0], [], []>} : vector<16x8xbf16>, vector<32x8xbf16>, vector<16x32xf32> -> vector<16x32xf32>
    "tpu.trace_stop"() : () -> ()
    %157 = arith.addf %156, %153 : vector<16x32xf32>
    %c0_76 = arith.constant 0 : index
    %c2 = arith.constant 2 : index
    %c0_77 = arith.constant 0 : index
    %c0_78 = arith.constant 0 : index
    %158 = vector.load %arg13[%c0_76, %c2, %c0_77, %c0_78] : memref<1x4x16x32xf32, #tpu.memory_space<vmem>>, vector<1x1x16x32xf32>
    %159 = vector.shape_cast %158 : vector<1x1x16x32xf32> to vector<16x32xf32>
    %160 = vector.shape_cast %157 : vector<16x32xf32> to vector<1x1x16x32xf32>
    tpu.vector_store %arg13[%c0_76, %c2, %c0_77, %c0_78], %160 {strides = array<i32>} : memref<1x4x16x32xf32, #tpu.memory_space<vmem>>, vector<1x1x16x32xf32>,
    %cst_79 = arith.constant dense<0xFF800000> : vector<16xf32>
    %161 = vector.multi_reduction <maximumf>, %157, %cst_79 [1] : vector<16x32xf32> to vector<16xf32>
    %162 = vector.shape_cast %161 : vector<16xf32> to vector<16x1xf32>
    %163 = vector.broadcast %162 : vector<16x1xf32> to vector<16x32xf32>
    %164 = arith.subf %157, %163 : vector<16x32xf32>
    %165 = math.exp %164 : vector<16x32xf32>
    %cst_80 = arith.constant dense<0.000000e+00> : vector<16xf32>
    %166 = vector.multi_reduction <add>, %165, %cst_80 [1] : vector<16x32xf32> to vector<16xf32>
    %167 = vector.shape_cast %166 : vector<16xf32> to vector<16x1xf32>
    %168 = tpu.reciprocal %167 {approx = true} : vector<16x1xf32> -> vector<16x1xf32>
    %169 = vector.broadcast %168 : vector<16x1xf32> to vector<16x32xf32>
    %170 = arith.mulf %165, %169 : vector<16x32xf32>
    %171 = arith.truncf %170 : vector<16x32xf32> to vector<16x32xbf16>
    %172 = vector.extract_strided_slice %52 {offsets = [0, 16], sizes = [32, 8], strides = [1, 1]} : vector<32x32xbf16> to vector<32x8xbf16>
    %cst_81 = arith.constant dense<0.000000e+00> : vector<16x8xf32>
    %173 = tpu.matmul %171, %172, %cst_81 {dimension_numbers = #tpu.dot_dimension_numbers<[1], [0], [0], [1], [0, 0, 1, 1], [], []>} : vector<16x32xbf16>, vector<32x8xbf16>, vector<16x8xf32> -> vector<16x8xf32>
    %c0_82 = arith.constant 0 : index
    %c16_83 = arith.constant 16 : index
    %174 = vector.load %arg15[%c0_82, %c16_83] : memref<48x32xf32, #tpu.memory_space<vmem>>, vector<16x8xf32>
    tpu.vector_store %arg15[%c0_82, %c16_83], %173 {strides = array<i32>} : memref<48x32xf32, #tpu.memory_space<vmem>>, vector<16x8xf32>,
    %175 = vector.extract_strided_slice %48 {offsets = [0, 16], sizes = [16, 8], strides = [1, 1]} : vector<16x32xbf16> to vector<16x8xbf16>
    %176 = vector.extract_strided_slice %53 {offsets = [0, 16], sizes = [32, 8], strides = [1, 1]} : vector<32x32xbf16> to vector<32x8xbf16>
    "tpu.trace_start"() <{level = 10 : i32, message = "nd,md->nm"}> : () -> ()
    %cst_84 = arith.constant dense<0.000000e+00> : vector<16x32xf32>
    %177 = tpu.matmul %175, %176, %cst_84 {dimension_numbers = #tpu.dot_dimension_numbers<[1], [1], [0], [0], [0, 0, 1, 0], [], []>} : vector<16x8xbf16>, vector<32x8xbf16>, vector<16x32xf32> -> vector<16x32xf32>
    "tpu.trace_stop"() : () -> ()
    %178 = arith.addf %177, %153 : vector<16x32xf32>
    %c0_85 = arith.constant 0 : index
    %c2_86 = arith.constant 2 : index
    %c0_87 = arith.constant 0 : index
    %c0_88 = arith.constant 0 : index
    %179 = vector.load %arg14[%c0_85, %c2_86, %c0_87, %c0_88] : memref<1x4x16x32xf32, #tpu.memory_space<vmem>>, vector<1x1x16x32xf32>
    %180 = vector.shape_cast %179 : vector<1x1x16x32xf32> to vector<16x32xf32>
    %181 = vector.shape_cast %178 : vector<16x32xf32> to vector<1x1x16x32xf32>
    tpu.vector_store %arg14[%c0_85, %c2_86, %c0_87, %c0_88], %181 {strides = array<i32>} : memref<1x4x16x32xf32, #tpu.memory_space<vmem>>, vector<1x1x16x32xf32>,
    %cst_89 = arith.constant dense<0xFF800000> : vector<16xf32>
    %182 = vector.multi_reduction <maximumf>, %178, %cst_89 [1] : vector<16x32xf32> to vector<16xf32>
    %183 = vector.shape_cast %182 : vector<16xf32> to vector<16x1xf32>
    %184 = vector.broadcast %183 : vector<16x1xf32> to vector<16x32xf32>
    %185 = arith.subf %178, %184 : vector<16x32xf32>
    %186 = math.exp %185 : vector<16x32xf32>
    %cst_90 = arith.constant dense<0.000000e+00> : vector<16xf32>
    %187 = vector.multi_reduction <add>, %186, %cst_90 [1] : vector<16x32xf32> to vector<16xf32>
    %188 = vector.shape_cast %187 : vector<16xf32> to vector<16x1xf32>
    %189 = tpu.reciprocal %188 {approx = true} : vector<16x1xf32> -> vector<16x1xf32>
    %190 = vector.broadcast %189 : vector<16x1xf32> to vector<16x32xf32>
    %191 = arith.mulf %186, %190 : vector<16x32xf32>
    %192 = arith.truncf %191 : vector<16x32xf32> to vector<16x32xbf16>
    %193 = vector.extract_strided_slice %52 {offsets = [0, 16], sizes = [32, 8], strides = [1, 1]} : vector<32x32xbf16> to vector<32x8xbf16>
    %cst_91 = arith.constant dense<0.000000e+00> : vector<16x8xf32>
    %194 = tpu.matmul %192, %193, %cst_91 {dimension_numbers = #tpu.dot_dimension_numbers<[1], [0], [0], [1], [0, 0, 1, 1], [], []>} : vector<16x32xbf16>, vector<32x8xbf16>, vector<16x8xf32> -> vector<16x8xf32>
    %c16_92 = arith.constant 16 : index
    %c16_93 = arith.constant 16 : index
    %195 = vector.load %arg15[%c16_92, %c16_93] : memref<48x32xf32, #tpu.memory_space<vmem>>, vector<16x8xf32>
    tpu.vector_store %arg15[%c16_92, %c16_93], %194 {strides = array<i32>} : memref<48x32xf32, #tpu.memory_space<vmem>>, vector<16x8xf32>,
    %196 = vector.extract_strided_slice %54 {offsets = [0, 16], sizes = [32, 8], strides = [1, 1]} : vector<32x32xbf16> to vector<32x8xbf16>
    %cst_94 = arith.constant dense<0.000000e+00> : vector<16x8xf32>
    %197 = tpu.matmul %171, %196, %cst_94 {dimension_numbers = #tpu.dot_dimension_numbers<[1], [0], [0], [1], [0, 0, 1, 1], [], []>} : vector<16x32xbf16>, vector<32x8xbf16>, vector<16x8xf32> -> vector<16x8xf32>
    %c32_95 = arith.constant 32 : index
    %c16_96 = arith.constant 16 : index
    %198 = vector.load %arg15[%c32_95, %c16_96] : memref<48x32xf32, #tpu.memory_space<vmem>>, vector<16x8xf32>
    tpu.vector_store %arg15[%c32_95, %c16_96], %197 {strides = array<i32>} : memref<48x32xf32, #tpu.memory_space<vmem>>, vector<16x8xf32>,
    %199 = vector.extract_strided_slice %49 {offsets = [0, 24], sizes = [16, 8], strides = [1, 1]} : vector<16x32xbf16> to vector<16x8xbf16>
    %200 = vector.extract_strided_slice %50 {offsets = [0, 24], sizes = [32, 8], strides = [1, 1]} : vector<32x32xbf16> to vector<32x8xbf16>
    "tpu.trace_start"() <{level = 10 : i32, message = "nd,md->nm"}> : () -> ()
    %cst_97 = arith.constant dense<0.000000e+00> : vector<16x32xf32>
    %201 = tpu.matmul %199, %200, %cst_97 {dimension_numbers = #tpu.dot_dimension_numbers<[1], [1], [0], [0], [0, 0, 1, 0], [], []>} : vector<16x8xbf16>, vector<32x8xbf16>, vector<16x32xf32> -> vector<16x32xf32>
    "tpu.trace_stop"() : () -> ()
    %202 = vector.extract_strided_slice %48 {offsets = [0, 24], sizes = [16, 8], strides = [1, 1]} : vector<16x32xbf16> to vector<16x8xbf16>
    %203 = vector.extract_strided_slice %51 {offsets = [0, 24], sizes = [32, 8], strides = [1, 1]} : vector<32x32xbf16> to vector<32x8xbf16>
    "tpu.trace_start"() <{level = 10 : i32, message = "nd,md->nm"}> : () -> ()
    %cst_98 = arith.constant dense<0.000000e+00> : vector<16x32xf32>
    %204 = tpu.matmul %202, %203, %cst_98 {dimension_numbers = #tpu.dot_dimension_numbers<[1], [1], [0], [0], [0, 0, 1, 0], [], []>} : vector<16x8xbf16>, vector<32x8xbf16>, vector<16x32xf32> -> vector<16x32xf32>
    "tpu.trace_stop"() : () -> ()
    %205 = arith.addf %204, %201 : vector<16x32xf32>
    %c0_99 = arith.constant 0 : index
    %c3 = arith.constant 3 : index
    %c0_100 = arith.constant 0 : index
    %c0_101 = arith.constant 0 : index
    %206 = vector.load %arg13[%c0_99, %c3, %c0_100, %c0_101] : memref<1x4x16x32xf32, #tpu.memory_space<vmem>>, vector<1x1x16x32xf32>
    %207 = vector.shape_cast %206 : vector<1x1x16x32xf32> to vector<16x32xf32>
    %208 = vector.shape_cast %205 : vector<16x32xf32> to vector<1x1x16x32xf32>
    tpu.vector_store %arg13[%c0_99, %c3, %c0_100, %c0_101], %208 {strides = array<i32>} : memref<1x4x16x32xf32, #tpu.memory_space<vmem>>, vector<1x1x16x32xf32>,
    %cst_102 = arith.constant dense<0xFF800000> : vector<16xf32>
    %209 = vector.multi_reduction <maximumf>, %205, %cst_102 [1] : vector<16x32xf32> to vector<16xf32>
    %210 = vector.shape_cast %209 : vector<16xf32> to vector<16x1xf32>
    %211 = vector.broadcast %210 : vector<16x1xf32> to vector<16x32xf32>
    %212 = arith.subf %205, %211 : vector<16x32xf32>
    %213 = math.exp %212 : vector<16x32xf32>
    %cst_103 = arith.constant dense<0.000000e+00> : vector<16xf32>
    %214 = vector.multi_reduction <add>, %213, %cst_103 [1] : vector<16x32xf32> to vector<16xf32>
    %215 = vector.shape_cast %214 : vector<16xf32> to vector<16x1xf32>
    %216 = tpu.reciprocal %215 {approx = true} : vector<16x1xf32> -> vector<16x1xf32>
    %217 = vector.broadcast %216 : vector<16x1xf32> to vector<16x32xf32>
    %218 = arith.mulf %213, %217 : vector<16x32xf32>
    %219 = arith.truncf %218 : vector<16x32xf32> to vector<16x32xbf16>
    %220 = vector.extract_strided_slice %52 {offsets = [0, 24], sizes = [32, 8], strides = [1, 1]} : vector<32x32xbf16> to vector<32x8xbf16>
    %cst_104 = arith.constant dense<0.000000e+00> : vector<16x8xf32>
    %221 = tpu.matmul %219, %220, %cst_104 {dimension_numbers = #tpu.dot_dimension_numbers<[1], [0], [0], [1], [0, 0, 1, 1], [], []>} : vector<16x32xbf16>, vector<32x8xbf16>, vector<16x8xf32> -> vector<16x8xf32>
    %c0_105 = arith.constant 0 : index
    %c24 = arith.constant 24 : index
    %222 = vector.load %arg15[%c0_105, %c24] : memref<48x32xf32, #tpu.memory_space<vmem>>, vector<16x8xf32>
    tpu.vector_store %arg15[%c0_105, %c24], %221 {strides = array<i32>} : memref<48x32xf32, #tpu.memory_space<vmem>>, vector<16x8xf32>,
    %223 = vector.extract_strided_slice %48 {offsets = [0, 24], sizes = [16, 8], strides = [1, 1]} : vector<16x32xbf16> to vector<16x8xbf16>
    %224 = vector.extract_strided_slice %53 {offsets = [0, 24], sizes = [32, 8], strides = [1, 1]} : vector<32x32xbf16> to vector<32x8xbf16>
    "tpu.trace_start"() <{level = 10 : i32, message = "nd,md->nm"}> : () -> ()
    %cst_106 = arith.constant dense<0.000000e+00> : vector<16x32xf32>
    %225 = tpu.matmul %223, %224, %cst_106 {dimension_numbers = #tpu.dot_dimension_numbers<[1], [1], [0], [0], [0, 0, 1, 0], [], []>} : vector<16x8xbf16>, vector<32x8xbf16>, vector<16x32xf32> -> vector<16x32xf32>
    "tpu.trace_stop"() : () -> ()
    %226 = arith.addf %225, %201 : vector<16x32xf32>
    %c0_107 = arith.constant 0 : index
    %c3_108 = arith.constant 3 : index
    %c0_109 = arith.constant 0 : index
    %c0_110 = arith.constant 0 : index
    %227 = vector.load %arg14[%c0_107, %c3_108, %c0_109, %c0_110] : memref<1x4x16x32xf32, #tpu.memory_space<vmem>>, vector<1x1x16x32xf32>
    %228 = vector.shape_cast %227 : vector<1x1x16x32xf32> to vector<16x32xf32>
    %229 = vector.shape_cast %226 : vector<16x32xf32> to vector<1x1x16x32xf32>
    tpu.vector_store %arg14[%c0_107, %c3_108, %c0_109, %c0_110], %229 {strides = array<i32>} : memref<1x4x16x32xf32, #tpu.memory_space<vmem>>, vector<1x1x16x32xf32>,
    %cst_111 = arith.constant dense<0xFF800000> : vector<16xf32>
    %230 = vector.multi_reduction <maximumf>, %226, %cst_111 [1] : vector<16x32xf32> to vector<16xf32>
    %231 = vector.shape_cast %230 : vector<16xf32> to vector<16x1xf32>
    %232 = vector.broadcast %231 : vector<16x1xf32> to vector<16x32xf32>
    %233 = arith.subf %226, %232 : vector<16x32xf32>
    %234 = math.exp %233 : vector<16x32xf32>
    %cst_112 = arith.constant dense<0.000000e+00> : vector<16xf32>
    %235 = vector.multi_reduction <add>, %234, %cst_112 [1] : vector<16x32xf32> to vector<16xf32>
    %236 = vector.shape_cast %235 : vector<16xf32> to vector<16x1xf32>
    %237 = tpu.reciprocal %236 {approx = true} : vector<16x1xf32> -> vector<16x1xf32>
    %238 = vector.broadcast %237 : vector<16x1xf32> to vector<16x32xf32>
    %239 = arith.mulf %234, %238 : vector<16x32xf32>
    %240 = arith.truncf %239 : vector<16x32xf32> to vector<16x32xbf16>
    %241 = vector.extract_strided_slice %52 {offsets = [0, 24], sizes = [32, 8], strides = [1, 1]} : vector<32x32xbf16> to vector<32x8xbf16>
    %cst_113 = arith.constant dense<0.000000e+00> : vector<16x8xf32>
    %242 = tpu.matmul %240, %241, %cst_113 {dimension_numbers = #tpu.dot_dimension_numbers<[1], [0], [0], [1], [0, 0, 1, 1], [], []>} : vector<16x32xbf16>, vector<32x8xbf16>, vector<16x8xf32> -> vector<16x8xf32>
    %c16_114 = arith.constant 16 : index
    %c24_115 = arith.constant 24 : index
    %243 = vector.load %arg15[%c16_114, %c24_115] : memref<48x32xf32, #tpu.memory_space<vmem>>, vector<16x8xf32>
    tpu.vector_store %arg15[%c16_114, %c24_115], %242 {strides = array<i32>} : memref<48x32xf32, #tpu.memory_space<vmem>>, vector<16x8xf32>,
    %244 = vector.extract_strided_slice %54 {offsets = [0, 24], sizes = [32, 8], strides = [1, 1]} : vector<32x32xbf16> to vector<32x8xbf16>
    %cst_116 = arith.constant dense<0.000000e+00> : vector<16x8xf32>
    %245 = tpu.matmul %219, %244, %cst_116 {dimension_numbers = #tpu.dot_dimension_numbers<[1], [0], [0], [1], [0, 0, 1, 1], [], []>} : vector<16x32xbf16>, vector<32x8xbf16>, vector<16x8xf32> -> vector<16x8xf32>
    %c32_117 = arith.constant 32 : index
    %c24_118 = arith.constant 24 : index
    %246 = vector.load %arg15[%c32_117, %c24_118] : memref<48x32xf32, #tpu.memory_space<vmem>>, vector<16x8xf32>
    tpu.vector_store %arg15[%c32_117, %c24_118], %245 {strides = array<i32>} : memref<48x32xf32, #tpu.memory_space<vmem>>, vector<16x8xf32>,
    %c0_119 = arith.constant 0 : index
    %c0_120 = arith.constant 0 : index
    %247 = vector.load %arg15[%c0_119, %c0_120] : memref<48x32xf32, #tpu.memory_space<vmem>>, vector<48x32xf32>
    %248 = arith.truncf %247 : vector<48x32xf32> to vector<48x32xbf16>
    %c0_121 = arith.constant 0 : index
    %c0_122 = arith.constant 0 : index
    %249 = vector.load %arg10[%c0_121, %c0_122] : memref<32x32xbf16, #tpu.memory_space<vmem>>, vector<32x32xbf16>
    %cst_123 = arith.constant dense<0.000000e+00> : vector<48x32xf32>
    %250 = tpu.matmul %248, %249, %cst_123 {dimension_numbers = #tpu.dot_dimension_numbers<[1], [0], [0], [1], [0, 0, 1, 1], [], []>} : vector<48x32xbf16>, vector<32x32xbf16>, vector<48x32xf32> -> vector<48x32xf32>
    %251 = vector.extract_strided_slice %0 {offsets = [7, 0], sizes = [1, 32], strides = [1, 1]} : vector<8x32xf32> to vector<1x32xf32>
    %252 = vector.broadcast %251 : vector<1x32xf32> to vector<48x32xf32>
    %253 = arith.addf %250, %252 : vector<48x32xf32>
    %254 = vector.extract_strided_slice %253 {offsets = [0, 0], sizes = [16, 32], strides = [1, 1]} : vector<48x32xf32> to vector<16x32xf32>
    %c0_124 = arith.constant 0 : index
    %c0_125 = arith.constant 0 : index
    %c0_126 = arith.constant 0 : index
    %c0_127 = arith.constant 0 : index
    %255 = vector.load %arg12[%c0_124, %c0_125, %c0_126, %c0_127] : memref<1x3x16x32xf32, #tpu.memory_space<vmem>>, vector<1x1x16x32xf32>
    %256 = vector.shape_cast %255 : vector<1x1x16x32xf32> to vector<16x32xf32>
    %257 = vector.shape_cast %254 : vector<16x32xf32> to vector<1x1x16x32xf32>
    tpu.vector_store %arg12[%c0_124, %c0_125, %c0_126, %c0_127], %257 {strides = array<i32>} : memref<1x3x16x32xf32, #tpu.memory_space<vmem>>, vector<1x1x16x32xf32>,
    %258 = vector.extract_strided_slice %253 {offsets = [16, 0], sizes = [16, 32], strides = [1, 1]} : vector<48x32xf32> to vector<16x32xf32>
    %c0_128 = arith.constant 0 : index
    %c1_129 = arith.constant 1 : index
    %c0_130 = arith.constant 0 : index
    %c0_131 = arith.constant 0 : index
    %259 = vector.load %arg12[%c0_128, %c1_129, %c0_130, %c0_131] : memref<1x3x16x32xf32, #tpu.memory_space<vmem>>, vector<1x1x16x32xf32>
    %260 = vector.shape_cast %259 : vector<1x1x16x32xf32> to vector<16x32xf32>
    %261 = vector.shape_cast %258 : vector<16x32xf32> to vector<1x1x16x32xf32>
    tpu.vector_store %arg12[%c0_128, %c1_129, %c0_130, %c0_131], %261 {strides = array<i32>} : memref<1x3x16x32xf32, #tpu.memory_space<vmem>>, vector<1x1x16x32xf32>,
    %262 = vector.extract_strided_slice %253 {offsets = [32, 0], sizes = [16, 32], strides = [1, 1]} : vector<48x32xf32> to vector<16x32xf32>
    %c0_132 = arith.constant 0 : index
    %c2_133 = arith.constant 2 : index
    %c0_134 = arith.constant 0 : index
    %c0_135 = arith.constant 0 : index
    %263 = vector.load %arg12[%c0_132, %c2_133, %c0_134, %c0_135] : memref<1x3x16x32xf32, #tpu.memory_space<vmem>>, vector<1x1x16x32xf32>
    %264 = vector.shape_cast %263 : vector<1x1x16x32xf32> to vector<16x32xf32>
    %265 = vector.shape_cast %262 : vector<16x32xf32> to vector<1x1x16x32xf32>
    tpu.vector_store %arg12[%c0_132, %c2_133, %c0_134, %c0_135], %265 {strides = array<i32>} : memref<1x3x16x32xf32, #tpu.memory_space<vmem>>, vector<1x1x16x32xf32>,
    return
  }
  func.func @transform_0(%arg0: i32) -> (i32, i32, i32) {
    %c0_i32 = arith.constant 0 : i32
    %c0_i32_0 = arith.constant 0 : i32
    %c0_i32_1 = arith.constant 0 : i32
    return %arg0, %c0_i32, %c0_i32_0 : i32, i32, i32
  }
  func.func @transform_1(%arg0: i32) -> (i32, i32, i32) {
    %c0_i32 = arith.constant 0 : i32
    %c0_i32_0 = arith.constant 0 : i32
    %c0_i32_1 = arith.constant 0 : i32
    return %arg0, %c0_i32, %c0_i32_0 : i32, i32, i32
  }
  func.func @transform_2(%arg0: i32) -> (i32, i32, i32) {
    %c0_i32 = arith.constant 0 : i32
    %c0_i32_0 = arith.constant 0 : i32
    %c0_i32_1 = arith.constant 0 : i32
    return %arg0, %c0_i32, %c0_i32_0 : i32, i32, i32
  }
  func.func @transform_3(%arg0: i32) -> (i32, i32, i32) {
    %c0_i32 = arith.constant 0 : i32
    %c0_i32_0 = arith.constant 0 : i32
    %c0_i32_1 = arith.constant 0 : i32
    return %arg0, %c0_i32, %c0_i32_0 : i32, i32, i32
  }
  func.func @transform_4(%arg0: i32) -> (i32, i32) {
    %c0_i32 = arith.constant 0 : i32
    %c0_i32_0 = arith.constant 0 : i32
    %c0_i32_1 = arith.constant 0 : i32
    return %c0_i32, %c0_i32_0 : i32, i32
  }
  func.func @transform_5(%arg0: i32) -> (i32, i32) {
    %c0_i32 = arith.constant 0 : i32
    %c0_i32_0 = arith.constant 0 : i32
    %c0_i32_1 = arith.constant 0 : i32
    return %c0_i32, %c0_i32_0 : i32, i32
  }
  func.func @transform_6(%arg0: i32) -> (i32, i32) {
    %c0_i32 = arith.constant 0 : i32
    %c0_i32_0 = arith.constant 0 : i32
    %c0_i32_1 = arith.constant 0 : i32
    return %c0_i32, %c0_i32_0 : i32, i32
  }
  func.func @transform_7(%arg0: i32) -> (i32, i32) {
    %c0_i32 = arith.constant 0 : i32
    %c0_i32_0 = arith.constant 0 : i32
    %c0_i32_1 = arith.constant 0 : i32
    return %c0_i32, %c0_i32_0 : i32, i32
  }
  func.func @transform_8(%arg0: i32) -> (i32, i32) {
    %c0_i32 = arith.constant 0 : i32
    %c0_i32_0 = arith.constant 0 : i32
    %c0_i32_1 = arith.constant 0 : i32
    return %c0_i32, %c0_i32_0 : i32, i32
  }
  func.func @transform_9(%arg0: i32) -> (i32, i32) {
    %c0_i32 = arith.constant 0 : i32
    %c0_i32_0 = arith.constant 0 : i32
    %c0_i32_1 = arith.constant 0 : i32
    return %c0_i32, %c0_i32_0 : i32, i32
  }
  func.func @transform_10(%arg0: i32) -> (i32, i32) {
    %c0_i32 = arith.constant 0 : i32
    %c0_i32_0 = arith.constant 0 : i32
    %c0_i32_1 = arith.constant 0 : i32
    return %c0_i32, %c0_i32_0 : i32, i32
  }
  func.func @transform_11(%arg0: i32) -> (i32, i32, i32, i32) {
    %c0_i32 = arith.constant 0 : i32
    %c0_i32_0 = arith.constant 0 : i32
    %c0_i32_1 = arith.constant 0 : i32
    %c0_i32_2 = arith.constant 0 : i32
    return %arg0, %c0_i32, %c0_i32_0, %c0_i32_1 : i32, i32, i32, i32
  }
  func.func @transform_12(%arg0: i32) -> (i32, i32, i32, i32) {
    %c0_i32 = arith.constant 0 : i32
    %c0_i32_0 = arith.constant 0 : i32
    %c0_i32_1 = arith.constant 0 : i32
    %c0_i32_2 = arith.constant 0 : i32
    return %arg0, %c0_i32, %c0_i32_0, %c0_i32_1 : i32, i32, i32, i32
  }
  func.func @transform_13(%arg0: i32) -> (i32, i32, i32, i32) {
    %c0_i32 = arith.constant 0 : i32
    %c0_i32_0 = arith.constant 0 : i32
    %c0_i32_1 = arith.constant 0 : i32
    %c0_i32_2 = arith.constant 0 : i32
    return %arg0, %c0_i32, %c0_i32_0, %c0_i32_1 : i32, i32, i32, i32
  }
}

</mosaic_0001>

<llo_original>
// kernel: tpu_custom_call.1
$region0: #{tpu_custom_call.1}
  #allocation0 [shape = 'u32[]', space=smem, size = 0x4, offset = 0x4, fixed_abs, tag = 'smem constant byte address 0x4 - core index']
  #allocation1 [shape = 'u32[144,128]{1,0:T(1,128)}', space=vmem, size = 0x12000, scoped, tag = 'internal scratch']
  #allocation2 [shape = 'f32[48,32]{1,0:T(8,128)}', space=vmem, size = 0x6000, scoped, tag = 'scratch operand']
  %s0 = inlined_call_operand.vmem [shape: bf16[2,16,64], index: 0, kind: input, shape index: {}]
  %s1 = inlined_call_operand.hbm [shape: bf16[2,16,32], index: 1, kind: input, shape index: {}]
  %s2 = inlined_call_operand.vmem [shape: bf16[2,32,32], index: 2, kind: input, shape index: {}]
  %s3 = inlined_call_operand.hbm [shape: bf16[2,32,32], index: 3, kind: input, shape index: {}]
  %s4 = inlined_call_operand.vmem [shape: bf16[64,32], index: 4, kind: input, shape index: {}]
  %s5 = inlined_call_operand.vmem [shape: bf16[32,32], index: 5, kind: input, shape index: {}]
  %s6 = inlined_call_operand.hbm [shape: bf16[32,32], index: 6, kind: input, shape index: {}]
  %s7 = inlined_call_operand.hbm [shape: bf16[32,64], index: 7, kind: input, shape index: {}]
  %s8 = inlined_call_operand.hbm [shape: bf16[32,64], index: 8, kind: input, shape index: {}]
  %s9 = inlined_call_operand.vmem [shape: bf16[32,32], index: 9, kind: input, shape index: {}]
  %s10 = inlined_call_operand.hbm [shape: f32[8,32], index: 10, kind: input, shape index: {}]
  %s11 = inlined_call_operand.hbm [shape: f32[2,3,16,32], index: 11, kind: output, shape index: {0}]
  %s12 = inlined_call_operand.hbm [shape: f32[2,4,16,32], index: 12, kind: output, shape index: {1}]
  %s13 = inlined_call_operand.hbm [shape: f32[2,4,16,32], index: 13, kind: output, shape index: {2}]
  %14 = xla_tuple %s11, %s12, %s13
  %s15 = sld [smem:[#allocation0]]
  $region117: #{tpu_custom_call.1} parent=0
    _
  %s17 = ssub.s32 1, %s15
  %s18 = scalar_select 0, %s17, %s15
  $region1: #{tpu_custom_call.1} parent=0
    #allocation3 [shape = 'u8[8192]{0}', space=vmem, size = 0x2000, scoped, tag = 'input window, operand 1']
    #allocation4 [shape = 's32[2]{0}', space=sflag, size = 0x8, scoped, tag = 'scoped memory for tpu_custom_call.1']
    #allocation5 [shape = 's32[2]{0}', space=sflag, size = 0x8, scoped, tag = 'scoped memory for tpu_custom_call.1']
    #allocation6 [shape = 'u8[16384]{0}', space=vmem, size = 0x4000, scoped, tag = 'input window, operand 3']
    #allocation7 [shape = 's32[2]{0}', space=sflag, size = 0x8, scoped, tag = 'scoped memory for tpu_custom_call.1']
    #allocation8 [shape = 'u8[8192]{0}', space=vmem, size = 0x2000, scoped, tag = 'input window, operand 6, single buffered']
    #allocation9 [shape = 'u8[8192]{0}', space=vmem, size = 0x2000, scoped, tag = 'input window, operand 7, single buffered']
    #allocation10 [shape = 's32[1]{0}', space=sflag, size = 0x4, scoped, tag = 'scoped memory for tpu_custom_call.1']
    #allocation11 [shape = 'u8[8192]{0}', space=vmem, size = 0x2000, scoped, tag = 'input window, operand 8, single buffered']
    #allocation12 [shape = 'u8[4096]{0}', space=vmem, size = 0x1000, scoped, tag = 'input window, operand 10, single buffered']
    #allocation13 [shape = 's32[1]{0}', space=sflag, size = 0x4, scoped, tag = 'scoped memory for tpu_custom_call.1']
    #allocation14 [shape = 'u8[49152]{0}', space=vmem, size = 0xc000, scoped, tag = 'output window, operand 0']
    #allocation15 [shape = 'u8[65536]{0}', space=vmem, size = 0x10000, scoped, tag = 'output window, operand 1']
    #allocation16 [shape = 's32[2]{0}', space=sflag, size = 0x8, scoped, tag = 'scoped memory for tpu_custom_call.1']
    #allocation17 [shape = 'u8[65536]{0}', space=vmem, size = 0x10000, scoped, tag = 'output window, operand 2']
    %19 = vsyncpa [#allocation4], 0
    %s20 = scalar_lea.sflag [#allocation4], 1
    %21 = vsyncpa %s20, 0
    %22 = vsyncpa [#allocation7], 0
    %s23 = scalar_lea.sflag [#allocation7], 1
    %24 = vsyncpa %s23, 0
    %25 = vsyncpa [#allocation10], 0
    %26 = vsyncpa [#allocation13], 0
    %27 = vsyncpa [#allocation5], 0
    %s28 = scalar_lea.sflag [#allocation5], 1
    %29 = vsyncpa %s28, 0
    %30 = vsyncpa [#allocation16], 0
    %s31 = scalar_lea.sflag [#allocation16], 1
    %32 = vsyncpa %s31, 0
    loop: start=0, step=1, limit=4
    $region2: #{tpu_custom_call.1} parent=1 // loop_pre_header
      _
    $region3: #{tpu_custom_call.1} parent=1 // loop_header
      %s34 = sphi 0, %s38
      %p35 = scmp.ge.s32.totalorder %s34, 4
      %s44 = sphi 0, %s46
      %s47 = sphi 0, %s44
      %s48 = sphi 0, %s47
      %s64 = sphi 0, %s48
      %s70 = sphi 0, %s72
      %s73 = sphi 0, %s70
      %s74 = sphi 0, %s73
      %s90 = sphi 0, %s74
      %s96 = sphi 0, %s98
      %s99 = sphi 0, %s96
      %s100 = sphi 0, %s99
      %s116 = sphi 0, %s100
      %s122 = sphi 0, %s124
      %s125 = sphi 0, %s122
      %s126 = sphi 0, %s125
      %s142 = sphi 0, %s126
      %s146 = sphi 0, %s146
      %s148 = sphi 0, %s146
      %s149 = sphi 0, %s148
      %s163 = sphi 0, %s149
      %s167 = sphi 0, %s167
      %s169 = sphi 0, %s167
      %s170 = sphi 0, %s169
      %s184 = sphi 0, %s170
      %s188 = sphi 0, %s188
      %s190 = sphi 0, %s188
      %s191 = sphi 0, %s190
      %s205 = sphi 0, %s191
      %s209 = sphi 0, %s209
      %s211 = sphi 0, %s209
      %s212 = sphi 0, %s211
      %s226 = sphi 0, %s212
      %s230 = sphi 0, %s230
      %s232 = sphi 0, %s230
      %s233 = sphi 0, %s232
      %s247 = sphi 0, %s233
      %s251 = sphi 0, %s251
      %s253 = sphi 0, %s251
      %s254 = sphi 0, %s253
      %s268 = sphi 0, %s254
      %s272 = sphi 0, %s272
      %s274 = sphi 0, %s272
      %s275 = sphi 0, %s274
      %s289 = sphi 0, %s275
      %s295 = sphi 0, %s297
      %s298 = sphi 0, %s295
      %s299 = sphi 0, %s298
      %s315 = sphi 0, %s299
      %s321 = sphi 0, %s323
      %s324 = sphi 0, %s321
      %s325 = sphi 0, %s324
      %s341 = sphi 0, %s325
      %s347 = sphi 0, %s349
      %s350 = sphi 0, %s347
      %s351 = sphi 0, %s350
      %s367 = sphi 0, %s351
    $region4: #{tpu_custom_call.1} parent=1 // loop_header_branch
      %37 = sbr.rel (%p35) target = $region8
    $region5: #{tpu_custom_call.1} parent=1 // loop_body
      %s39 = ssub.s32 %s34, 1
      %s40 = ssub.s32 %s34, 2
      %s41 = sadd.s32 %s34, 1
      %s42 = ssub.s32 %s34, %s41
      %p43 = scmp.eq.s32.totalorder %s42, 0
      %s45 = sadd.s32 %s44, 1
      %s46 = scalar_select %p43, %s44, %s45
      %p49 = pneg %p43
      %p50 = scmp.eq.s32.totalorder %s34, 1
      %p51 = por %p49, %p50
      %p52 = scmp.ne.s32.totalorder %s44, %s47
      %p53 = scmp.eq.s32.totalorder %s34, 0
      %p54 = por %p52, %p53
      %p55 = scmp.ne.s32.totalorder %s44, %s47
      %p56 = scmp.eq.s32.totalorder %s39, 1
      %p57 = por %p55, %p56
      %p58 = scmp.ne.s32.totalorder %s47, %s48
      %p59 = scmp.eq.s32.totalorder %s39, 0
      %p60 = por %p58, %p59
      %p61 = scmp.ne.s32.totalorder %s47, %s48
      %p62 = scmp.eq.s32.totalorder %s40, 1
      %p63 = por %p61, %p62
      %p65 = scmp.ne.s32.totalorder %s48, %s64
      %p66 = scmp.eq.s32.totalorder %s40, 0
      %p67 = por %p65, %p66
      %s68 = ssub.s32 %s34, %s41
      %p69 = scmp.eq.s32.totalorder %s68, 0
      %s71 = sadd.s32 %s70, 1
      %s72 = scalar_select %p69, %s70, %s71
      %p75 = pneg %p69
      %p76 = scmp.eq.s32.totalorder %s34, 1
      %p77 = por %p75, %p76
      %p78 = scmp.ne.s32.totalorder %s70, %s73
      %p79 = scmp.eq.s32.totalorder %s34, 0
      %p80 = por %p78, %p79
      %p81 = scmp.ne.s32.totalorder %s70, %s73
      %p82 = scmp.eq.s32.totalorder %s39, 1
      %p83 = por %p81, %p82
      %p84 = scmp.ne.s32.totalorder %s73, %s74
      %p85 = scmp.eq.s32.totalorder %s39, 0
      %p86 = por %p84, %p85
      %p87 = scmp.ne.s32.totalorder %s73, %s74
      %p88 = scmp.eq.s32.totalorder %s40, 1
      %p89 = por %p87, %p88
      %p91 = scmp.ne.s32.totalorder %s74, %s90
      %p92 = scmp.eq.s32.totalorder %s40, 0
      %p93 = por %p91, %p92
      %s94 = ssub.s32 %s34, %s41
      %p95 = scmp.eq.s32.totalorder %s94, 0
      %s97 = sadd.s32 %s96, 1
      %s98 = scalar_select %p95, %s96, %s97
      %p101 = pneg %p95
      %p102 = scmp.eq.s32.totalorder %s34, 1
      %p103 = por %p101, %p102
      %p104 = scmp.ne.s32.totalorder %s96, %s99
      %p105 = scmp.eq.s32.totalorder %s34, 0
      %p106 = por %p104, %p105
      %p107 = scmp.ne.s32.totalorder %s96, %s99
      %p108 = scmp.eq.s32.totalorder %s39, 1
      %p109 = por %p107, %p108
      %p110 = scmp.ne.s32.totalorder %s99, %s100
      %p111 = scmp.eq.s32.totalorder %s39, 0
      %p112 = por %p110, %p111
      %p113 = scmp.ne.s32.totalorder %s99, %s100
      %p114 = scmp.eq.s32.totalorder %s40, 1
      %p115 = por %p113, %p114
      %p117 = scmp.ne.s32.totalorder %s100, %s116
      %p118 = scmp.eq.s32.totalorder %s40, 0
      %p119 = por %p117, %p118
      %s120 = ssub.s32 %s34, %s41
      %p121 = scmp.eq.s32.totalorder %s120, 0
      %s123 = sadd.s32 %s122, 1
      %s124 = scalar_select %p121, %s122, %s123
      %p127 = pneg %p121
      %p128 = scmp.eq.s32.totalorder %s34, 1
      %p129 = por %p127, %p128
      %p130 = scmp.ne.s32.totalorder %s122, %s125
      %p131 = scmp.eq.s32.totalorder %s34, 0
      %p132 = por %p130, %p131
      %p133 = scmp.ne.s32.totalorder %s122, %s125
      %p134 = scmp.eq.s32.totalorder %s39, 1
      %p135 = por %p133, %p134
      %p136 = scmp.ne.s32.totalorder %s125, %s126
      %p137 = scmp.eq.s32.totalorder %s39, 0
      %p138 = por %p136, %p137
      %p139 = scmp.ne.s32.totalorder %s125, %s126
      %p140 = scmp.eq.s32.totalorder %s40, 1
      %p141 = por %p139, %p140
      %p143 = scmp.ne.s32.totalorder %s126, %s142
      %p144 = scmp.eq.s32.totalorder %s40, 0
      %p145 = por %p143, %p144
      %s147 = sadd.s32 %s146, 1
      %p150 = scmp.eq.s32.totalorder %s34, 1
      %p151 = scmp.ne.s32.totalorder %s146, %s148
      %p152 = scmp.eq.s32.totalorder %s34, 0
      %p153 = por %p151, %p152
      %p154 = scmp.ne.s32.totalorder %s146, %s148
      %p155 = scmp.eq.s32.totalorder %s39, 1
      %p156 = por %p154, %p155
      %p157 = scmp.ne.s32.totalorder %s148, %s149
      %p158 = scmp.eq.s32.totalorder %s39, 0
      %p159 = por %p157, %p158
      %p160 = scmp.ne.s32.totalorder %s148, %s149
      %p161 = scmp.eq.s32.totalorder %s40, 1
      %p162 = por %p160, %p161
      %p164 = scmp.ne.s32.totalorder %s149, %s163
      %p165 = scmp.eq.s32.totalorder %s40, 0
      %p166 = por %p164, %p165
      %s168 = sadd.s32 %s167, 1
      %p171 = scmp.eq.s32.totalorder %s34, 1
      %p172 = scmp.ne.s32.totalorder %s167, %s169
      %p173 = scmp.eq.s32.totalorder %s34, 0
      %p174 = por %p172, %p173
      %p175 = scmp.ne.s32.totalorder %s167, %s169
      %p176 = scmp.eq.s32.totalorder %s39, 1
      %p177 = por %p175, %p176
      %p178 = scmp.ne.s32.totalorder %s169, %s170
      %p179 = scmp.eq.s32.totalorder %s39, 0
      %p180 = por %p178, %p179
      %p181 = scmp.ne.s32.totalorder %s169, %s170
      %p182 = scmp.eq.s32.totalorder %s40, 1
      %p183 = por %p181, %p182
      %p185 = scmp.ne.s32.totalorder %s170, %s184
      %p186 = scmp.eq.s32.totalorder %s40, 0
      %p187 = por %p185, %p186
      %s189 = sadd.s32 %s188, 1
      %p192 = scmp.eq.s32.totalorder %s34, 1
      %p193 = scmp.ne.s32.totalorder %s188, %s190
      %p194 = scmp.eq.s32.totalorder %s34, 0
      %p195 = por %p193, %p194
      %p196 = scmp.ne.s32.totalorder %s188, %s190
      %p197 = scmp.eq.s32.totalorder %s39, 1
      %p198 = por %p196, %p197
      %p199 = scmp.ne.s32.totalorder %s190, %s191
      %p200 = scmp.eq.s32.totalorder %s39, 0
      %p201 = por %p199, %p200
      %p202 = scmp.ne.s32.totalorder %s190, %s191
      %p203 = scmp.eq.s32.totalorder %s40, 1
      %p204 = por %p202, %p203
      %p206 = scmp.ne.s32.totalorder %s191, %s205
      %p207 = scmp.eq.s32.totalorder %s40, 0
      %p208 = por %p206, %p207
      %s210 = sadd.s32 %s209, 1
      %p213 = scmp.eq.s32.totalorder %s34, 1
      %p214 = scmp.ne.s32.totalorder %s209, %s211
      %p215 = scmp.eq.s32.totalorder %s34, 0
      %p216 = por %p214, %p215
      %p217 = scmp.ne.s32.totalorder %s209, %s211
      %p218 = scmp.eq.s32.totalorder %s39, 1
      %p219 = por %p217, %p218
      %p220 = scmp.ne.s32.totalorder %s211, %s212
      %p221 = scmp.eq.s32.totalorder %s39, 0
      %p222 = por %p220, %p221
      %p223 = scmp.ne.s32.totalorder %s211, %s212
      %p224 = scmp.eq.s32.totalorder %s40, 1
      %p225 = por %p223, %p224
      %p227 = scmp.ne.s32.totalorder %s212, %s226
      %p228 = scmp.eq.s32.totalorder %s40, 0
      %p229 = por %p227, %p228
      %s231 = sadd.s32 %s230, 1
      %p234 = scmp.eq.s32.totalorder %s34, 1
      %p235 = scmp.ne.s32.totalorder %s230, %s232
      %p236 = scmp.eq.s32.totalorder %s34, 0
      %p237 = por %p235, %p236
      %p238 = scmp.ne.s32.totalorder %s230, %s232
      %p239 = scmp.eq.s32.totalorder %s39, 1
      %p240 = por %p238, %p239
      %p241 = scmp.ne.s32.totalorder %s232, %s233
      %p242 = scmp.eq.s32.totalorder %s39, 0
      %p243 = por %p241, %p242
      %p244 = scmp.ne.s32.totalorder %s232, %s233
      %p245 = scmp.eq.s32.totalorder %s40, 1
      %p246 = por %p244, %p245
      %p248 = scmp.ne.s32.totalorder %s233, %s247
      %p249 = scmp.eq.s32.totalorder %s40, 0
      %p250 = por %p248, %p249
      %s252 = sadd.s32 %s251, 1
      %p255 = scmp.eq.s32.totalorder %s34, 1
      %p256 = scmp.ne.s32.totalorder %s251, %s253
      %p257 = scmp.eq.s32.totalorder %s34, 0
      %p258 = por %p256, %p257
      %p259 = scmp.ne.s32.totalorder %s251, %s253
      %p260 = scmp.eq.s32.totalorder %s39, 1
      %p261 = por %p259, %p260
      %p262 = scmp.ne.s32.totalorder %s253, %s254
      %p263 = scmp.eq.s32.totalorder %s39, 0
      %p264 = por %p262, %p263
      %p265 = scmp.ne.s32.totalorder %s253, %s254
      %p266 = scmp.eq.s32.totalorder %s40, 1
      %p267 = por %p265, %p266
      %p269 = scmp.ne.s32.totalorder %s254, %s268
      %p270 = scmp.eq.s32.totalorder %s40, 0
      %p271 = por %p269, %p270
      %s273 = sadd.s32 %s272, 1
      %p276 = scmp.eq.s32.totalorder %s34, 1
      %p277 = scmp.ne.s32.totalorder %s272, %s274
      %p278 = scmp.eq.s32.totalorder %s34, 0
      %p279 = por %p277, %p278
      %p280 = scmp.ne.s32.totalorder %s272, %s274
      %p281 = scmp.eq.s32.totalorder %s39, 1
      %p282 = por %p280, %p281
      %p283 = scmp.ne.s32.totalorder %s274, %s275
      %p284 = scmp.eq.s32.totalorder %s39, 0
      %p285 = por %p283, %p284
      %p286 = scmp.ne.s32.totalorder %s274, %s275
      %p287 = scmp.eq.s32.totalorder %s40, 1
      %p288 = por %p286, %p287
      %p290 = scmp.ne.s32.totalorder %s275, %s289
      %p291 = scmp.eq.s32.totalorder %s40, 0
      %p292 = por %p290, %p291
      %s293 = ssub.s32 %s34, %s41
      %p294 = scmp.eq.s32.totalorder %s293, 0
      %s296 = sadd.s32 %s295, 1
      %s297 = scalar_select %p294, %s295, %s296
      %p300 = pneg %p294
      %p301 = scmp.eq.s32.totalorder %s34, 1
      %p302 = por %p300, %p301
      %p303 = scmp.ne.s32.totalorder %s295, %s298
      %p304 = scmp.eq.s32.totalorder %s34, 0
      %p305 = por %p303, %p304
      %p306 = scmp.ne.s32.totalorder %s295, %s298
      %p307 = scmp.eq.s32.totalorder %s39, 1
      %p308 = por %p306, %p307
      %p309 = scmp.ne.s32.totalorder %s298, %s299
      %p310 = scmp.eq.s32.totalorder %s39, 0
      %p311 = por %p309, %p310
      %p312 = scmp.ne.s32.totalorder %s298, %s299
      %p313 = scmp.eq.s32.totalorder %s40, 1
      %p314 = por %p312, %p313
      %p316 = scmp.ne.s32.totalorder %s299, %s315
      %p317 = scmp.eq.s32.totalorder %s40, 0
      %p318 = por %p316, %p317
      %s319 = ssub.s32 %s34, %s41
      %p320 = scmp.eq.s32.totalorder %s319, 0
      %s322 = sadd.s32 %s321, 1
      %s323 = scalar_select %p320, %s321, %s322
      %p326 = pneg %p320
      %p327 = scmp.eq.s32.totalorder %s34, 1
      %p328 = por %p326, %p327
      %p329 = scmp.ne.s32.totalorder %s321, %s324
      %p330 = scmp.eq.s32.totalorder %s34, 0
      %p331 = por %p329, %p330
      %p332 = scmp.ne.s32.totalorder %s321, %s324
      %p333 = scmp.eq.s32.totalorder %s39, 1
      %p334 = por %p332, %p333
      %p335 = scmp.ne.s32.totalorder %s324, %s325
      %p336 = scmp.eq.s32.totalorder %s39, 0
      %p337 = por %p335, %p336
      %p338 = scmp.ne.s32.totalorder %s324, %s325
      %p339 = scmp.eq.s32.totalorder %s40, 1
      %p340 = por %p338, %p339
      %p342 = scmp.ne.s32.totalorder %s325, %s341
      %p343 = scmp.eq.s32.totalorder %s40, 0
      %p344 = por %p342, %p343
      %s345 = ssub.s32 %s34, %s41
      %p346 = scmp.eq.s32.totalorder %s345, 0
      %s348 = sadd.s32 %s347, 1
      %s349 = scalar_select %p346, %s347, %s348
      %p352 = pneg %p346
      %p353 = scmp.eq.s32.totalorder %s34, 1
      %p354 = por %p352, %p353
      %p355 = scmp.ne.s32.totalorder %s347, %s350
      %p356 = scmp.eq.s32.totalorder %s34, 0
      %p357 = por %p355, %p356
      %p358 = scmp.ne.s32.totalorder %s347, %s350
      %p359 = scmp.eq.s32.totalorder %s39, 1
      %p360 = por %p358, %p359
      %p361 = scmp.ne.s32.totalorder %s350, %s351
      %p362 = scmp.eq.s32.totalorder %s39, 0
      %p363 = por %p361, %p362
      %p364 = scmp.ne.s32.totalorder %s350, %s351
      %p365 = scmp.eq.s32.totalorder %s40, 1
      %p366 = por %p364, %p365
      %p368 = scmp.ne.s32.totalorder %s351, %s367
      %p369 = scmp.eq.s32.totalorder %s40, 0
      %p370 = por %p368, %p369
      %p371 = scmp.le.s32.totalorder 1, %s34
      %p372 = scmp.lt.s32.totalorder %s34, 3
      %p373 = pnand %p371, %p372
      %p374 = pneg %p373
      // Predicated region
      $region9: #{tpu_custom_call.1} parent=5 // pred_check
        _
      $region10: #{tpu_custom_call.1} parent=5 // pred_check_branch
        %376 = sbr.rel (%p373) target = $region12
      $region11: #{tpu_custom_call.1} parent=5 // pred_region
        %s377 = ssub.s32 %s34, 1
        // Predicated region
        $region13: #{tpu_custom_call.1} parent=11 // pred_check
          %p378 = pneg %p159
        $region14: #{tpu_custom_call.1} parent=11 // pred_check_branch
          %380 = sbr.rel (%p378) target = $region16
        $region15: #{tpu_custom_call.1} parent=11 // pred_region
          _
        $region16: #{tpu_custom_call.1} parent=11 // pred_fallthru
          _
        // Predicated region
        $region17: #{tpu_custom_call.1} parent=11 // pred_check
          %p381 = pneg %p180
        $region18: #{tpu_custom_call.1} parent=11 // pred_check_branch
          %383 = sbr.rel (%p381) target = $region20
        $region19: #{tpu_custom_call.1} parent=11 // pred_region
          _
        $region20: #{tpu_custom_call.1} parent=11 // pred_fallthru
          _
        // Predicated region
        $region21: #{tpu_custom_call.1} parent=11 // pred_check
          %p384 = pneg %p201
        $region22: #{tpu_custom_call.1} parent=11 // pred_check_branch
          %386 = sbr.rel (%p384) target = $region24
        $region23: #{tpu_custom_call.1} parent=11 // pred_region
          %s388 = ssub.s32 256, 256
          %389 = vsyncadd [#allocation7], %s388
          %s390 = sshll.u32 [#allocation8], 4
          %s391 = int_to_ptr.vmem [resolvable:$true] %s390
          %396 = dma.hbm_to_vmem [thread:$0]  %s6, 256, %s391, [#allocation7], 64, 64, 4
        $region24: #{tpu_custom_call.1} parent=11 // pred_fallthru
          _
        // Predicated region
        $region25: #{tpu_custom_call.1} parent=11 // pred_check
          %p397 = pneg %p222
        $region26: #{tpu_custom_call.1} parent=11 // pred_check_branch
          %399 = sbr.rel (%p397) target = $region28
        $region27: #{tpu_custom_call.1} parent=11 // pred_region
          %s401 = ssub.s32 256, 256
          %402 = vsyncadd [#allocation10], %s401
          %s403 = sshll.u32 [#allocation9], 4
          %s404 = int_to_ptr.vmem [resolvable:$true] %s403
          %409 = dma.hbm_to_vmem [thread:$0]  %s7, 256, %s404, [#allocation10], 64, 64, 4
        $region28: #{tpu_custom_call.1} parent=11 // pred_fallthru
          _
        // Predicated region
        $region29: #{tpu_custom_call.1} parent=11 // pred_check
          %p410 = pneg %p243
        $region30: #{tpu_custom_call.1} parent=11 // pred_check_branch
          %412 = sbr.rel (%p410) target = $region32
        $region31: #{tpu_custom_call.1} parent=11 // pred_region
          %s414 = ssub.s32 256, 256
          %415 = vsyncadd [#allocation10], %s414
          %s416 = sshll.u32 [#allocation11], 4
          %s417 = int_to_ptr.vmem [resolvable:$true] %s416
          %422 = dma.hbm_to_vmem [thread:$0]  %s8, 256, %s417, [#allocation10], 64, 64, 4
        $region32: #{tpu_custom_call.1} parent=11 // pred_fallthru
          _
        // Predicated region
        $region33: #{tpu_custom_call.1} parent=11 // pred_check
          %p423 = pneg %p264
        $region34: #{tpu_custom_call.1} parent=11 // pred_check_branch
          %425 = sbr.rel (%p423) target = $region36
        $region35: #{tpu_custom_call.1} parent=11 // pred_region
          _
        $region36: #{tpu_custom_call.1} parent=11 // pred_fallthru
          _
        // Predicated region
        $region37: #{tpu_custom_call.1} parent=11 // pred_check
          %p426 = pneg %p285
        $region38: #{tpu_custom_call.1} parent=11 // pred_check_branch
          %428 = sbr.rel (%p426) target = $region40
        $region39: #{tpu_custom_call.1} parent=11 // pred_region
          %s430 = ssub.s32 128, 128
          %431 = vsyncadd [#allocation13], %s430
          %s433 = sshll.u32 [#allocation12], 4
          %s434 = int_to_ptr.vmem [resolvable:$true] %s433
          %436 = dma.hbm_to_vmem [thread:$0]  %s10, 128, %s434, [#allocation13]
        $region40: #{tpu_custom_call.1} parent=11 // pred_fallthru
          _
      $region12: #{tpu_custom_call.1} parent=5 // pred_fallthru
        _
      %p437 = scmp.lt.s32.totalorder %s34, 2
      // Predicated region
      $region41: #{tpu_custom_call.1} parent=5 // pred_check
        %p438 = pneg %p437
      $region42: #{tpu_custom_call.1} parent=5 // pred_check_branch
        %440 = sbr.rel (%p438) target = $region44
      $region43: #{tpu_custom_call.1} parent=5 // pred_region
        // Predicated region
        $region45: #{tpu_custom_call.1} parent=43 // pred_check
          %p441 = pneg %p54
        $region46: #{tpu_custom_call.1} parent=43 // pred_check_branch
          %443 = sbr.rel (%p441) target = $region48
        $region47: #{tpu_custom_call.1} parent=43 // pred_region
          %p444 = scmp.lt.s32.totalorder %s34, 1
          %s445 = scalar_select %p444, %s34, 1
          %s446 = smul.addr %s445, 2
          %s447 = smul.addr %s446, 4
          %s448 = scalar_lea.vmem %s0, %s447
        $region48: #{tpu_custom_call.1} parent=43 // pred_fallthru
          _
        // Predicated region
        $region49: #{tpu_custom_call.1} parent=43 // pred_check
          %p449 = pneg %p80
        $region50: #{tpu_custom_call.1} parent=43 // pred_check_branch
          %451 = sbr.rel (%p449) target = $region52
        $region51: #{tpu_custom_call.1} parent=43 // pred_region
          %s452 = sand.u32 %s70, 1
          %s453 = scalar_lea.sflag [#allocation4], %s452
          %s454 = sand.u32 %s70, 1
          %s455 = smul.addr %s454, 8
          %s456 = scalar_lea.vmem [#allocation3], %s455
          %s458 = ssub.s32 128, 128
          %459 = vsyncadd %s453, %s458
          %s460 = smul.addr %s34, 2
          %s461 = smul.addr %s460, 64
          %s462 = scalar_lea.hbm %s1, %s461
          %s463 = sshll.u32 %s456, 4
          %s464 = int_to_ptr.vmem [resolvable:$true] %s463
          %469 = dma.hbm_to_vmem [thread:$0]  %s462, 128, %s464, %s453, 64, 64, 4
        $region52: #{tpu_custom_call.1} parent=43 // pred_fallthru
          _
        // Predicated region
        $region53: #{tpu_custom_call.1} parent=43 // pred_check
          %p470 = pneg %p106
        $region54: #{tpu_custom_call.1} parent=43 // pred_check_branch
          %472 = sbr.rel (%p470) target = $region56
        $region55: #{tpu_custom_call.1} parent=43 // pred_region
          %p473 = scmp.lt.s32.totalorder %s34, 1
          %s474 = scalar_select %p473, %s34, 1
          %s475 = smul.addr %s474, 4
          %s476 = smul.addr %s475, 4
          %s477 = scalar_lea.vmem %s2, %s476
        $region56: #{tpu_custom_call.1} parent=43 // pred_fallthru
          _
        // Predicated region
        $region57: #{tpu_custom_call.1} parent=43 // pred_check
          %p478 = pneg %p132
        $region58: #{tpu_custom_call.1} parent=43 // pred_check_branch
          %480 = sbr.rel (%p478) target = $region60
        $region59: #{tpu_custom_call.1} parent=43 // pred_region
          %s481 = sand.u32 %s34, 1
          %s482 = scalar_lea.sflag [#allocation7], %s481
          %s483 = sand.u32 %s122, 1
          %s484 = smul.addr %s483, 16
          %s485 = scalar_lea.vmem [#allocation6], %s484
          %s487 = ssub.s32 256, 256
          %488 = vsyncadd %s482, %s487
          %s489 = smul.addr %s34, 4
          %s490 = smul.addr %s489, 64
          %s491 = scalar_lea.hbm %s3, %s490
          %s492 = sshll.u32 %s485, 4
          %s493 = int_to_ptr.vmem [resolvable:$true] %s492
          %498 = dma.hbm_to_vmem [thread:$0]  %s491, 256, %s493, %s482, 64, 64, 4
        $region60: #{tpu_custom_call.1} parent=43 // pred_fallthru
          _
      $region44: #{tpu_custom_call.1} parent=5 // pred_fallthru
        _
      %p499 = scmp.le.s32.totalorder 1, %s34
      %p500 = scmp.lt.s32.totalorder %s34, 3
      %p501 = pnand %p499, %p500
      %p502 = pneg %p501
      // Predicated region
      $region61: #{tpu_custom_call.1} parent=5 // pred_check
        _
      $region62: #{tpu_custom_call.1} parent=5 // pred_check_branch
        %504 = sbr.rel (%p501) target = $region64
      $region63: #{tpu_custom_call.1} parent=5 // pred_region
        %s505 = ssub.s32 %s34, 1
        %s506 = sand.u32 %s73, 1
        %s507 = scalar_lea.sflag [#allocation4], %s506
        %s508 = sand.u32 %s73, 1
        %s509 = smul.addr %s508, 8
        %s510 = scalar_lea.vmem [#allocation3], %s509
        // Predicated region
        $region65: #{tpu_custom_call.1} parent=63 // pred_check
          %p511 = pneg %p86
        $region66: #{tpu_custom_call.1} parent=63 // pred_check_branch
          %513 = sbr.rel (%p511) target = $region68
        $region67: #{tpu_custom_call.1} parent=63 // pred_region
          %514 = dma.done %s507, 128
        $region68: #{tpu_custom_call.1} parent=63 // pred_fallthru
          _
        %s515 = sand.u32 %s39, 1
        %s516 = scalar_lea.sflag [#allocation7], %s515
        %s517 = sand.u32 %s125, 1
        %s518 = smul.addr %s517, 16
        %s519 = scalar_lea.vmem [#allocation6], %s518
        // Predicated region
        $region69: #{tpu_custom_call.1} parent=63 // pred_check
          %p520 = pneg %p138
        $region70: #{tpu_custom_call.1} parent=63 // pred_check_branch
          %522 = sbr.rel (%p520) target = $region72
        $region71: #{tpu_custom_call.1} parent=63 // pred_region
          %523 = dma.done %s516, 256
        $region72: #{tpu_custom_call.1} parent=63 // pred_fallthru
          _
        // Predicated region
        $region73: #{tpu_custom_call.1} parent=63 // pred_check
          %p524 = pneg %p201
        $region74: #{tpu_custom_call.1} parent=63 // pred_check_branch
          %526 = sbr.rel (%p524) target = $region76
        $region75: #{tpu_custom_call.1} parent=63 // pred_region
          %527 = dma.done [#allocation7], 256
        $region76: #{tpu_custom_call.1} parent=63 // pred_fallthru
          _
        // Predicated region
        $region77: #{tpu_custom_call.1} parent=63 // pred_check
          %p528 = pneg %p222
        $region78: #{tpu_custom_call.1} parent=63 // pred_check_branch
          %530 = sbr.rel (%p528) target = $region80
        $region79: #{tpu_custom_call.1} parent=63 // pred_region
          %531 = dma.done [#allocation10], 256
        $region80: #{tpu_custom_call.1} parent=63 // pred_fallthru
          _
        // Predicated region
        $region81: #{tpu_custom_call.1} parent=63 // pred_check
          %p532 = pneg %p243
        $region82: #{tpu_custom_call.1} parent=63 // pred_check_branch
          %534 = sbr.rel (%p532) target = $region84
        $region83: #{tpu_custom_call.1} parent=63 // pred_region
          %535 = dma.done [#allocation10], 256
        $region84: #{tpu_custom_call.1} parent=63 // pred_fallthru
          _
        // Predicated region
        $region85: #{tpu_custom_call.1} parent=63 // pred_check
          %p536 = pneg %p285
        $region86: #{tpu_custom_call.1} parent=63 // pred_check_branch
          %538 = sbr.rel (%p536) target = $region88
        $region87: #{tpu_custom_call.1} parent=63 // pred_region
          %539 = dma.done [#allocation13], 128
        $region88: #{tpu_custom_call.1} parent=63 // pred_fallthru
          _
        %p540 = scmp.lt.s32.totalorder %s39, 1
        %s541 = scalar_select %p540, %s39, 1
        %s542 = smul.addr %s541, 2
        %s543 = smul.addr %s542, 4
        %s544 = scalar_lea.vmem %s0, %s543
        %p545 = pneg %p60
        %p546 = pneg %p57
        %s547 = sand.u32 %s73, 1
        %s548 = scalar_lea.sflag [#allocation4], %s547
        %s549 = sand.u32 %s73, 1
        %s550 = smul.addr %s549, 8
        %s551 = scalar_lea.vmem [#allocation3], %s550
        %p552 = pneg %p86
        %p553 = pneg %p83
        %p554 = scmp.lt.s32.totalorder %s39, 1
        %s555 = scalar_select %p554, %s39, 1
        %s556 = smul.addr %s555, 4
        %s557 = smul.addr %s556, 4
        %s558 = scalar_lea.vmem %s2, %s557
        %p559 = pneg %p112
        %p560 = pneg %p109
        %s561 = sand.u32 %s39, 1
        %s562 = scalar_lea.sflag [#allocation7], %s561
        %s563 = sand.u32 %s125, 1
        %s564 = smul.addr %s563, 16
        %s565 = scalar_lea.vmem [#allocation6], %s564
        %p566 = pneg %p138
        %p567 = pneg %p135
        %p568 = pneg %p159
        %p569 = pneg %p156
        %p570 = pneg %p180
        %p571 = pneg %p177
        %p572 = pneg %p201
        %p573 = pneg %p198
        %p574 = pneg %p222
        %p575 = pneg %p219
        %p576 = pneg %p243
        %p577 = pneg %p240
        %p578 = pneg %p264
        %p579 = pneg %p261
        %p580 = pneg %p285
        %p581 = pneg %p282
        %p582 = pneg %p311
        %p583 = pneg %p308
        %s584 = sand.u32 %s298, 1
        %s585 = scalar_lea.sflag [#allocation5], %s584
        %s586 = sand.u32 %s298, 1
        %s587 = smul.addr %s586, 48
        %s588 = scalar_lea.vmem [#allocation14], %s587
        %p589 = pneg %p337
        %p590 = pneg %p334
        %s591 = sand.u32 %s39, 1
        %s592 = scalar_lea.sflag [#allocation16], %s591
        %s593 = sand.u32 %s324, 1
        %s594 = smul.addr %s593, 64
        %s595 = scalar_lea.vmem [#allocation15], %s594
        %p596 = pneg %p363
        %p597 = pneg %p360
        %s598 = sand.u32 %s39, 1
        %s599 = scalar_lea.sflag [#allocation16], %s598
        %s600 = sand.u32 %s350, 1
        %s601 = smul.addr %s600, 64
        %s602 = scalar_lea.vmem [#allocation17], %s601
        %p603 = scmp.lt.s32.totalorder %s39, 1
        %s604 = scalar_select %p603, %s39, 1
        %s605 = smul.addr %s604, 2
        %s606 = smul.addr %s605, 4
        %s607 = scalar_lea.vmem %s0, %s606
        %p608 = scmp.lt.s32.totalorder %s39, 1
        %s609 = scalar_select %p608, %s39, 1
        %s610 = smul.addr %s609, 4
        %s611 = smul.addr %s610, 4
        %s612 = scalar_lea.vmem %s2, %s611
        %v614 = vld [vmem:[#allocation12] sm:$0xff]
        %v615 = vld [vmem:[%s607] sm:$0xf]
        %v616 = vld [vmem:[%s607 + $0x4] sm:$0xf]
        %v617 = vld [vmem:[%s4] sm:$0xf]
        %v618 = vld [vmem:[%s4 + $0x4] sm:$0xf]
        %v619 = vld [vmem:[%s4 + $0x8] sm:$0xf]
        %v620 = vld [vmem:[%s4 + $0xc] sm:$0xf]
        %v621 = vld [vmem:[%s4 + $0x10] sm:$0xf]
        %v622 = vld [vmem:[%s4 + $0x14] sm:$0xf]
        %v623 = vld [vmem:[%s4 + $0x18] sm:$0xf]
        %v624 = vld [vmem:[%s4 + $0x1c] sm:$0xf]
        %v625 = vlaneseq
        %v626 = vshrl.u32 %v625, 7
        %v627 = vsub.s32 0, %v626
        %v628 = vrot.slane %v614, %v627
        %v631 = vunpack.c.l.b16 %v615
        %v632 = vunpack.c.l.b16 %v616
        %v633 = vpack.c.b16 %v632, %v631
        %v642 = vunpack.c.l.b16 %v617
        %v643 = vunpack.c.l.b16 %v618
        %v644 = vunpack.c.l.b16 %v619
        %v645 = vunpack.c.l.b16 %v620
        %v646 = vunpack.c.l.b16 %v621
        %v647 = vunpack.c.l.b16 %v622
        %v648 = vunpack.c.l.b16 %v623
        %v649 = vunpack.c.l.b16 %v624
        %v650 = vpack.c.b16 %v643, %v642
        %v651 = vpack.c.b16 %v645, %v644
        %v652 = vpack.c.b16 %v647, %v646
        %v653 = vpack.c.b16 %v649, %v648
        %vm658 = vcmask 523264
        %v660 = vsel %vm658, %v633, 0
        %662 = vmatprep.subr.bf16.mxu0 0
        %663 = vmatpush1.bf16.msra.mxu0 %v650
        %664 = vmatprep.subr.bf16.mxu0 0
        %665 = vmatpush1.bf16.msra.mxu0 %v651
        %666 = vmatprep.subr.bf16.mxu0 0
        %667 = vmatpush1.bf16.msra.mxu0 %v652
        %668 = vmatprep.subr.bf16.mxu0 0
        %669 = vmatpush1.bf16.msra.mxu0 %v653
        %670 = vmatprep.subr.bf16.mxu0 0
        %671 = vmatpush1.bf16.msra.mxu0 0
        %672 = vmatprep.subr.bf16.mxu0 0
        %673 = vmatpush1.bf16.msra.mxu0 0
        %674 = vmatprep.subr.bf16.mxu0 0
        %675 = vmatpush1.bf16.msra.mxu0 0
        %676 = vmatprep.subr.bf16.mxu0 0
        %677 = vmatpush1.bf16.msra.mxu0 0
        %678 = vmatprep.subr.bf16.mxu0 0
        %679 = vmatpush1.bf16.msra.mxu0 0
        %680 = vmatprep.subr.bf16.mxu0 0
        %681 = vmatpush1.bf16.msra.mxu0 0
        %682 = vmatprep.subr.bf16.mxu0 0
        %683 = vmatpush1.bf16.msra.mxu0 0
        %684 = vmatprep.subr.bf16.mxu0 0
        %685 = vmatpush1.bf16.msra.mxu0 0
        %686 = vmatprep.subr.bf16.mxu0 0
        %687 = vmatpush1.bf16.msra.mxu0 0
        %688 = vmatprep.subr.bf16.mxu0 0
        %689 = vmatpush1.bf16.msra.mxu0 0
        %690 = vmatprep.subr.bf16.mxu0 0
        %691 = vmatpush1.bf16.msra.mxu0 0
        %692 = vmatprep.subr.bf16.mxu0 0
        %693 = vmatpush1.bf16.msra.mxu0 0
        %694 = vmatprep.mubr.bf16.mxu0 0
        %695 = vmatmul.mubr.bf16.gmra.mrb[0].mxu0 %v660
        %v696 = vpop.f32.mrb[0].mxu0
        %v697 = vadd.f32 %v628, %v696
        %v698 = vpop.f32.mrb[0].mxu0
        %v699 = vpop.f32.mrb[0].mxu0
        %v700 = vadd.f32 %v628, %v699
        %v701 = vpop.f32.mrb[0].mxu0
        %702 = vdwg.mxu0
        %v703 = vld [vmem:[%s510] sm:$0xf]
        %v704 = vld [vmem:[%s510 + $0x4] sm:$0xf]
        %v705 = vld [vmem:[%s5] sm:$0xf]
        %v706 = vld [vmem:[%s5 + $0x4] sm:$0xf]
        %v707 = vld [vmem:[%s5 + $0x8] sm:$0xf]
        %v708 = vld [vmem:[%s5 + $0xc] sm:$0xf]
        %v709 = vlaneseq
        %v710 = vshrl.u32 %v709, 7
        %v711 = vsub.s32 1, %v710
        %v712 = vrot.slane %v614, %v711
        %v715 = vunpack.c.l.b16 %v703
        %v716 = vunpack.c.l.b16 %v704
        %v717 = vpack.c.b16 %v716, %v715
        %v722 = vunpack.c.l.b16 %v705
        %v723 = vunpack.c.l.b16 %v706
        %v724 = vunpack.c.l.b16 %v707
        %v725 = vunpack.c.l.b16 %v708
        %v726 = vpack.c.b16 %v723, %v722
        %v727 = vpack.c.b16 %v725, %v724
        %vm730 = vcmask 261120
        %v732 = vsel %vm730, %v717, 0
        %734 = vmatprep.subr.bf16.mxu0 0
        %735 = vmatpush1.bf16.msra.mxu0 %v726
        %736 = vmatprep.subr.bf16.mxu0 0
        %737 = vmatpush1.bf16.msra.mxu0 %v727
        %738 = vmatprep.subr.bf16.mxu0 0
        %739 = vmatpush1.bf16.msra.mxu0 0
        %740 = vmatprep.subr.bf16.mxu0 0
        %741 = vmatpush1.bf16.msra.mxu0 0
        %742 = vmatprep.subr.bf16.mxu0 0
        %743 = vmatpush1.bf16.msra.mxu0 0
        %744 = vmatprep.subr.bf16.mxu0 0
        %745 = vmatpush1.bf16.msra.mxu0 0
        %746 = vmatprep.subr.bf16.mxu0 0
        %747 = vmatpush1.bf16.msra.mxu0 0
        %748 = vmatprep.subr.bf16.mxu0 0
        %749 = vmatpush1.bf16.msra.mxu0 0
        %750 = vmatprep.subr.bf16.mxu0 0
        %751 = vmatpush1.bf16.msra.mxu0 0
        %752 = vmatprep.subr.bf16.mxu0 0
        %753 = vmatpush1.bf16.msra.mxu0 0
        %754 = vmatprep.subr.bf16.mxu0 0
        %755 = vmatpush1.bf16.msra.mxu0 0
        %756 = vmatprep.subr.bf16.mxu0 0
        %757 = vmatpush1.bf16.msra.mxu0 0
        %758 = vmatprep.subr.bf16.mxu0 0
        %759 = vmatpush1.bf16.msra.mxu0 0
        %760 = vmatprep.subr.bf16.mxu0 0
        %761 = vmatpush1.bf16.msra.mxu0 0
        %762 = vmatprep.subr.bf16.mxu0 0
        %763 = vmatpush1.bf16.msra.mxu0 0
        %764 = vmatprep.subr.bf16.mxu0 0
        %765 = vmatpush1.bf16.msra.mxu0 0
        %766 = vmatprep.mubr.bf16.mxu0 0
        %767 = vmatmul.mubr.bf16.gmra.mrb[0].mxu0 %v732
        %v768 = vpop.f32.mrb[0].mxu0
        %v769 = vadd.f32 %v712, %v768
        %v770 = vpop.f32.mrb[0].mxu0
        %v771 = vpop.f32.mrb[0].mxu0
        %v772 = vadd.f32 %v712, %v771
        %v773 = vpop.f32.mrb[0].mxu0
        %774 = vdwg.mxu0
        %v775 = vld [vmem:[%s519] sm:$0xf]
        %v776 = vld [vmem:[%s519 + $0x4] sm:$0xf]
        %v777 = vld [vmem:[%s519 + $0x8] sm:$0xf]
        %v778 = vld [vmem:[%s519 + $0xc] sm:$0xf]
        %v779 = vld [vmem:[#allocation8] sm:$0xf]
        %v780 = vld [vmem:[#allocation8 + $0x4] sm:$0xf]
        %v781 = vld [vmem:[#allocation8 + $0x8] sm:$0xf]
        %v782 = vld [vmem:[#allocation8 + $0xc] sm:$0xf]
        %v783 = vlaneseq
        %v784 = vshrl.u32 %v783, 7
        %v785 = vsub.s32 2, %v784
        %v786 = vrot.slane %v614, %v785
        %v791 = vunpack.c.l.b16 %v775
        %v792 = vunpack.c.l.b16 %v776
        %v793 = vunpack.c.l.b16 %v777
        %v794 = vunpack.c.l.b16 %v778
        %v795 = vpack.c.b16 %v792, %v791
        %v796 = vpack.c.b16 %v794, %v793
        %v801 = vunpack.c.l.b16 %v779
        %v802 = vunpack.c.l.b16 %v780
        %v803 = vunpack.c.l.b16 %v781
        %v804 = vunpack.c.l.b16 %v782
        %v805 = vpack.c.b16 %v802, %v801
        %v806 = vpack.c.b16 %v804, %v803
        %v810 = vsel %vm730, %v795, 0
        %v813 = vsel %vm730, %v796, 0
        %815 = vmatprep.subr.bf16.mxu0 0
        %816 = vmatpush1.bf16.msra.mxu0 %v805
        %817 = vmatprep.subr.bf16.mxu0 0
        %818 = vmatpush1.bf16.msra.mxu0 %v806
        %819 = vmatprep.subr.bf16.mxu0 0
        %820 = vmatpush1.bf16.msra.mxu0 0
        %821 = vmatprep.subr.bf16.mxu0 0
        %822 = vmatpush1.bf16.msra.mxu0 0
        %823 = vmatprep.subr.bf16.mxu0 0
        %824 = vmatpush1.bf16.msra.mxu0 0
        %825 = vmatprep.subr.bf16.mxu0 0
        %826 = vmatpush1.bf16.msra.mxu0 0
        %827 = vmatprep.subr.bf16.mxu0 0
        %828 = vmatpush1.bf16.msra.mxu0 0
        %829 = vmatprep.subr.bf16.mxu0 0
        %830 = vmatpush1.bf16.msra.mxu0 0
        %831 = vmatprep.subr.bf16.mxu0 0
        %832 = vmatpush1.bf16.msra.mxu0 0
        %833 = vmatprep.subr.bf16.mxu0 0
        %834 = vmatpush1.bf16.msra.mxu0 0
        %835 = vmatprep.subr.bf16.mxu0 0
        %836 = vmatpush1.bf16.msra.mxu0 0
        %837 = vmatprep.subr.bf16.mxu0 0
        %838 = vmatpush1.bf16.msra.mxu0 0
        %839 = vmatprep.subr.bf16.mxu0 0
        %840 = vmatpush1.bf16.msra.mxu0 0
        %841 = vmatprep.subr.bf16.mxu0 0
        %842 = vmatpush1.bf16.msra.mxu0 0
        %843 = vmatprep.subr.bf16.mxu0 0
        %844 = vmatpush1.bf16.msra.mxu0 0
        %845 = vmatprep.subr.bf16.mxu0 0
        %846 = vmatpush1.bf16.msra.mxu0 0
        %847 = vmatprep.mubr.bf16.mxu0 0
        %848 = vmatmul.mubr.bf16.gmra.mrb[0].mxu0 %v810
        %v849 = vpop.f32.mrb[0].mxu0
        %v850 = vadd.f32 %v786, %v849
        %v851 = vpop.f32.mrb[0].mxu0
        %v852 = vpop.f32.mrb[0].mxu0
        %v853 = vadd.f32 %v786, %v852
        %v854 = vpop.f32.mrb[0].mxu0
        %855 = vmatprep.mubr.bf16.mxu0 0
        %856 = vmatmul.mubr.bf16.gmra.mrb[0].mxu0 %v813
        %v857 = vpop.f32.mrb[0].mxu0
        %v858 = vadd.f32 %v786, %v857
        %v859 = vpop.f32.mrb[0].mxu0
        %v860 = vpop.f32.mrb[0].mxu0
        %v861 = vadd.f32 %v786, %v860
        %v862 = vpop.f32.mrb[0].mxu0
        %863 = vdwg.mxu0
        %v864 = vld [vmem:[%s612] sm:$0xf]
        %v865 = vld [vmem:[%s612 + $0x4] sm:$0xf]
        %v866 = vld [vmem:[%s612 + $0x8] sm:$0xf]
        %v867 = vld [vmem:[%s612 + $0xc] sm:$0xf]
        %v868 = vld [vmem:[#allocation9] sm:$0xf]
        %v869 = vld [vmem:[#allocation9 + $0x4] sm:$0xf]
        %v870 = vld [vmem:[#allocation9 + $0x8] sm:$0xf]
        %v871 = vld [vmem:[#allocation9 + $0xc] sm:$0xf]
        %v876 = vunpack.c.l.b16 %v864
        %v877 = vunpack.c.l.b16 %v865
        %v878 = vunpack.c.l.b16 %v866
        %v879 = vunpack.c.l.b16 %v867
        %v880 = vpack.c.b16 %v877, %v876
        %v881 = vpack.c.b16 %v879, %v878
        %v886 = vunpack.c.l.b16 %v868
        %v887 = vunpack.c.l.b16 %v869
        %v888 = vunpack.c.l.b16 %v870
        %v889 = vunpack.c.l.b16 %v871
        %v890 = vpack.c.b16 %v887, %v886
        %v891 = vpack.c.b16 %v889, %v888
        %v895 = vsel %vm730, %v880, 0
        %v898 = vsel %vm730, %v881, 0
        %900 = vmatprep.subr.bf16.mxu0 0
        %901 = vmatpush1.bf16.msra.mxu0 %v890
        %902 = vmatprep.subr.bf16.mxu0 0
        %903 = vmatpush1.bf16.msra.mxu0 %v891
        %904 = vmatprep.subr.bf16.mxu0 0
        %905 = vmatpush1.bf16.msra.mxu0 0
        %906 = vmatprep.subr.bf16.mxu0 0
        %907 = vmatpush1.bf16.msra.mxu0 0
        %908 = vmatprep.subr.bf16.mxu0 0
        %909 = vmatpush1.bf16.msra.mxu0 0
        %910 = vmatprep.subr.bf16.mxu0 0
        %911 = vmatpush1.bf16.msra.mxu0 0
        %912 = vmatprep.subr.bf16.mxu0 0
        %913 = vmatpush1.bf16.msra.mxu0 0
        %914 = vmatprep.subr.bf16.mxu0 0
        %915 = vmatpush1.bf16.msra.mxu0 0
        %916 = vmatprep.subr.bf16.mxu0 0
        %917 = vmatpush1.bf16.msra.mxu0 0
        %918 = vmatprep.subr.bf16.mxu0 0
        %919 = vmatpush1.bf16.msra.mxu0 0
        %920 = vmatprep.subr.bf16.mxu0 0
        %921 = vmatpush1.bf16.msra.mxu0 0
        %922 = vmatprep.subr.bf16.mxu0 0
        %923 = vmatpush1.bf16.msra.mxu0 0
        %924 = vmatprep.subr.bf16.mxu0 0
        %925 = vmatpush1.bf16.msra.mxu0 0
        %926 = vmatprep.subr.bf16.mxu0 0
        %927 = vmatpush1.bf16.msra.mxu0 0
        %928 = vmatprep.subr.bf16.mxu0 0
        %929 = vmatpush1.bf16.msra.mxu0 0
        %930 = vmatprep.subr.bf16.mxu0 0
        %931 = vmatpush1.bf16.msra.mxu0 0
        %932 = vmatprep.mubr.bf16.mxu0 0
        %933 = vmatmul.mubr.bf16.gmra.mrb[0].mxu0 %v895
        %v934 = vpop.f32.mrb[0].mxu0
        %v935 = vadd.f32 0.0, %v934
        %v936 = vpop.f32.mrb[0].mxu0
        %v937 = vpop.f32.mrb[0].mxu0
        %v938 = vadd.f32 0.0, %v937
        %v939 = vpop.f32.mrb[0].mxu0
        %940 = vmatprep.mubr.bf16.mxu0 0
        %941 = vmatmul.mubr.bf16.gmra.mrb[0].mxu0 %v898
        %v942 = vpop.f32.mrb[0].mxu0
        %v943 = vadd.f32 0.0, %v942
        %v944 = vpop.f32.mrb[0].mxu0
        %v945 = vpop.f32.mrb[0].mxu0
        %v946 = vadd.f32 0.0, %v945
        %v947 = vpop.f32.mrb[0].mxu0
        %948 = vdwg.mxu0
        %v949 = vld [vmem:[#allocation11] sm:$0xf]
        %v950 = vld [vmem:[#allocation11 + $0x4] sm:$0xf]
        %v951 = vld [vmem:[#allocation11 + $0x8] sm:$0xf]
        %v952 = vld [vmem:[#allocation11 + $0xc] sm:$0xf]
        %v957 = vunpack.c.l.b16 %v949
        %v958 = vunpack.c.l.b16 %v950
        %v959 = vunpack.c.l.b16 %v951
        %v960 = vunpack.c.l.b16 %v952
        %v961 = vpack.c.b16 %v958, %v957
        %v962 = vpack.c.b16 %v960, %v959
        %965 = vmatprep.subr.bf16.mxu0 0
        %966 = vmatpush1.bf16.msra.mxu0 %v961
        %967 = vmatprep.subr.bf16.mxu0 0
        %968 = vmatpush1.bf16.msra.mxu0 %v962
        %969 = vmatprep.subr.bf16.mxu0 0
        %970 = vmatpush1.bf16.msra.mxu0 0
        %971 = vmatprep.subr.bf16.mxu0 0
        %972 = vmatpush1.bf16.msra.mxu0 0
        %973 = vmatprep.subr.bf16.mxu0 0
        %974 = vmatpush1.bf16.msra.mxu0 0
        %975 = vmatprep.subr.bf16.mxu0 0
        %976 = vmatpush1.bf16.msra.mxu0 0
        %977 = vmatprep.subr.bf16.mxu0 0
        %978 = vmatpush1.bf16.msra.mxu0 0
        %979 = vmatprep.subr.bf16.mxu0 0
        %980 = vmatpush1.bf16.msra.mxu0 0
        %981 = vmatprep.subr.bf16.mxu0 0
        %982 = vmatpush1.bf16.msra.mxu0 0
        %983 = vmatprep.subr.bf16.mxu0 0
        %984 = vmatpush1.bf16.msra.mxu0 0
        %985 = vmatprep.subr.bf16.mxu0 0
        %986 = vmatpush1.bf16.msra.mxu0 0
        %987 = vmatprep.subr.bf16.mxu0 0
        %988 = vmatpush1.bf16.msra.mxu0 0
        %989 = vmatprep.subr.bf16.mxu0 0
        %990 = vmatpush1.bf16.msra.mxu0 0
        %991 = vmatprep.subr.bf16.mxu0 0
        %992 = vmatpush1.bf16.msra.mxu0 0
        %993 = vmatprep.subr.bf16.mxu0 0
        %994 = vmatpush1.bf16.msra.mxu0 0
        %995 = vmatprep.subr.bf16.mxu0 0
        %996 = vmatpush1.bf16.msra.mxu0 0
        %997 = vmatprep.mubr.bf16.mxu0 0
        %998 = vmatmul.mubr.bf16.gmra.mrb[0].mxu0 %v895
        %v999 = vpop.f32.mrb[0].mxu0
        %v1000 = vadd.f32 0.0, %v999
        %v1001 = vpop.f32.mrb[0].mxu0
        %v1002 = vpop.f32.mrb[0].mxu0
        %v1003 = vadd.f32 0.0, %v1002
        %v1004 = vpop.f32.mrb[0].mxu0
        %1005 = vmatprep.mubr.bf16.mxu0 0
        %1006 = vmatmul.mubr.bf16.gmra.mrb[0].mxu0 %v898
        %v1007 = vpop.f32.mrb[0].mxu0
        %v1008 = vadd.f32 0.0, %v1007
        %v1009 = vpop.f32.mrb[0].mxu0
        %v1010 = vpop.f32.mrb[0].mxu0
        %v1011 = vadd.f32 0.0, %v1010
        %v1012 = vpop.f32.mrb[0].mxu0
        %1013 = vdwg.mxu0
        %v1014 = vlaneseq
        %v1015 = vshrl.u32 %v1014, 7
        %v1016 = vsub.s32 3, %v1015
        %v1017 = vrot.slane %v614, %v1016
        %v1018 = vadd.f32 %v935, %v1017
        %v1019 = vadd.f32 %v938, %v1017
        %v1020 = vadd.f32 %v943, %v1017
        %v1021 = vadd.f32 %v946, %v1017
        %v1022 = vlaneseq
        %v1023 = vshrl.u32 %v1022, 7
        %v1024 = vsub.s32 5, %v1023
        %v1025 = vrot.slane %v614, %v1024
        %v1026 = vadd.f32 %v1000, %v1025
        %v1027 = vadd.f32 %v1003, %v1025
        %v1028 = vadd.f32 %v1008, %v1025
        %v1029 = vadd.f32 %v1011, %v1025
        %v1030 = vadd.f32 %v1018, %v850
        %v1031 = vadd.f32 %v1019, %v853
        %v1032 = vadd.f32 %v1020, %v858
        %v1033 = vadd.f32 %v1021, %v861
        %v1034 = vlaneseq
        %v1035 = vshrl.u32 %v1034, 7
        %v1036 = vsub.s32 4, %v1035
        %v1037 = vrot.slane %v614, %v1036
        %1039 = vrot.lane.b32.xlu0 %v1037, 32
        %v1040 = vpop.permute.xlu0 %1039
        %v1042 = vadd.f32 %v935, %v1040
        %v1043 = vadd.f32 %v938, %v1040
        %v1044 = vadd.f32 %v943, %v1040
        %v1045 = vadd.f32 %v946, %v1040
        %1050 = vrot.lane.b32.xlu0 %v850, 32
        %v1051 = vpop.permute.xlu0 %1050
        %1052 = vrot.lane.b32.xlu0 %v853, 32
        %v1053 = vpop.permute.xlu0 %1052
        %1054 = vrot.lane.b32.xlu0 %v858, 32
        %v1055 = vpop.permute.xlu0 %1054
        %1056 = vrot.lane.b32.xlu0 %v861, 32
        %v1057 = vpop.permute.xlu0 %1056
        %v1062 = vadd.f32 %v1042, %v1051
        %v1063 = vadd.f32 %v1043, %v1053
        %v1064 = vadd.f32 %v1044, %v1055
        %v1065 = vadd.f32 %v1045, %v1057
        %v1066 = vlaneseq
        %v1067 = vshrl.u32 %v1066, 7
        %v1068 = vsub.s32 6, %v1067
        %v1069 = vrot.slane %v614, %v1068
        %1071 = vrot.lane.b32.xlu0 %v1069, 32
        %v1072 = vpop.permute.xlu0 %1071
        %v1074 = vadd.f32 %v1000, %v1072
        %v1075 = vadd.f32 %v1003, %v1072
        %v1076 = vadd.f32 %v1008, %v1072
        %v1077 = vadd.f32 %v1011, %v1072
        %v1078 = vpack.c.bf16 %v700, %v697
        %v1079 = vpack.c.bf16 %v772, %v769
        %v1080 = vpack.c.bf16 %v853, %v850
        %v1081 = vpack.c.bf16 %v861, %v858
        %v1082 = vpack.c.bf16 %v1031, %v1030
        %v1083 = vpack.c.bf16 %v1033, %v1032
        %v1084 = vpack.c.bf16 %v1027, %v1026
        %v1085 = vpack.c.bf16 %v1029, %v1028
        %v1086 = vpack.c.bf16 %v1063, %v1062
        %v1087 = vpack.c.bf16 %v1065, %v1064
        %v1088 = vpack.c.bf16 %v1075, %v1074
        %v1089 = vpack.c.bf16 %v1077, %v1076
        %vm1090 = vcmask 64512
        %v1092 = vsel %vm1090, %v1079, 0
        %v1095 = vsel %vm1090, %v1080, 0
        %v1098 = vsel %vm1090, %v1081, 0
        %1100 = vmatprep.subr.bf16.mxu0 0
        %1101 = vmatpush1.bf16.xpose.msra.mxu0 %v1095
        %1102 = vmatprep.subr.bf16.mxu0 0
        %1103 = vmatpush1.bf16.xpose.msra.mxu0 %v1098
        %1104 = vmatprep.subr.bf16.mxu0 0
        %1105 = vmatpush1.bf16.xpose.msra.mxu0 0
        %1106 = vmatprep.subr.bf16.mxu0 0
        %1107 = vmatpush1.bf16.xpose.msra.mxu0 0
        %1108 = vmatprep.subr.bf16.mxu0 0
        %1109 = vmatpush1.bf16.xpose.msra.mxu0 0
        %1110 = vmatprep.subr.bf16.mxu0 0
        %1111 = vmatpush1.bf16.xpose.msra.mxu0 0
        %1112 = vmatprep.subr.bf16.mxu0 0
        %1113 = vmatpush1.bf16.xpose.msra.mxu0 0
        %1114 = vmatprep.subr.bf16.mxu0 0
        %1115 = vmatpush1.bf16.xpose.msra.mxu0 0
        %1116 = vmatprep.subr.bf16.mxu0 0
        %1117 = vmatpush1.bf16.xpose.msra.mxu0 0
        %1118 = vmatprep.subr.bf16.mxu0 0
        %1119 = vmatpush1.bf16.xpose.msra.mxu0 0
        %1120 = vmatprep.subr.bf16.mxu0 0
        %1121 = vmatpush1.bf16.xpose.msra.mxu0 0
        %1122 = vmatprep.subr.bf16.mxu0 0
        %1123 = vmatpush1.bf16.xpose.msra.mxu0 0
        %1124 = vmatprep.subr.bf16.mxu0 0
        %1125 = vmatpush1.bf16.xpose.msra.mxu0 0
        %1126 = vmatprep.subr.bf16.mxu0 0
        %1127 = vmatpush1.bf16.xpose.msra.mxu0 0
        %1128 = vmatprep.subr.bf16.mxu0 0
        %1129 = vmatpush1.bf16.xpose.msra.mxu0 0
        %1130 = vmatprep.subr.bf16.mxu0 0
        %1131 = vmatpush1.bf16.xpose.msra.mxu0 0
        %1132 = vmatprep.mubr.bf16.mxu0 0
        %1133 = vmatmul.mubr.bf16.gmra.mrb[0].mxu0 %v1092
        %v1134 = vpop.f32.mrb[0].mxu0
        %v1135 = vadd.f32 0.0, %v1134
        %v1136 = vpop.f32.mrb[0].mxu0
        %v1137 = vpop.f32.mrb[0].mxu0
        %v1138 = vadd.f32 0.0, %v1137
        %v1139 = vpop.f32.mrb[0].mxu0
        %1140 = vdwg.mxu0
        %v1142 = vsel %vm1090, %v1078, 0
        %v1145 = vsel %vm1090, %v1082, 0
        %v1148 = vsel %vm1090, %v1083, 0
        %1150 = vmatprep.subr.bf16.mxu0 0
        %1151 = vmatpush1.bf16.xpose.msra.mxu0 %v1145
        %1152 = vmatprep.subr.bf16.mxu0 0
        %1153 = vmatpush1.bf16.xpose.msra.mxu0 %v1148
        %1154 = vmatprep.subr.bf16.mxu0 0
        %1155 = vmatpush1.bf16.xpose.msra.mxu0 0
        %1156 = vmatprep.subr.bf16.mxu0 0
        %1157 = vmatpush1.bf16.xpose.msra.mxu0 0
        %1158 = vmatprep.subr.bf16.mxu0 0
        %1159 = vmatpush1.bf16.xpose.msra.mxu0 0
        %1160 = vmatprep.subr.bf16.mxu0 0
        %1161 = vmatpush1.bf16.xpose.msra.mxu0 0
        %1162 = vmatprep.subr.bf16.mxu0 0
        %1163 = vmatpush1.bf16.xpose.msra.mxu0 0
        %1164 = vmatprep.subr.bf16.mxu0 0
        %1165 = vmatpush1.bf16.xpose.msra.mxu0 0
        %1166 = vmatprep.subr.bf16.mxu0 0
        %1167 = vmatpush1.bf16.xpose.msra.mxu0 0
        %1168 = vmatprep.subr.bf16.mxu0 0
        %1169 = vmatpush1.bf16.xpose.msra.mxu0 0
        %1170 = vmatprep.subr.bf16.mxu0 0
        %1171 = vmatpush1.bf16.xpose.msra.mxu0 0
        %1172 = vmatprep.subr.bf16.mxu0 0
        %1173 = vmatpush1.bf16.xpose.msra.mxu0 0
        %1174 = vmatprep.subr.bf16.mxu0 0
        %1175 = vmatpush1.bf16.xpose.msra.mxu0 0
        %1176 = vmatprep.subr.bf16.mxu0 0
        %1177 = vmatpush1.bf16.xpose.msra.mxu0 0
        %1178 = vmatprep.subr.bf16.mxu0 0
        %1179 = vmatpush1.bf16.xpose.msra.mxu0 0
        %1180 = vmatprep.subr.bf16.mxu0 0
        %1181 = vmatpush1.bf16.xpose.msra.mxu0 0
        %1182 = vmatprep.mubr.bf16.mxu0 0
        %1183 = vmatmul.mubr.bf16.gmra.mrb[0].mxu0 %v1142
        %v1184 = vpop.f32.mrb[0].mxu0
        %v1185 = vadd.f32 %v1135, %v1184
        %v1186 = vpop.f32.mrb[0].mxu0
        %v1187 = vpop.f32.mrb[0].mxu0
        %v1188 = vadd.f32 %v1138, %v1187
        %v1189 = vpop.f32.mrb[0].mxu0
        %1190 = vdwg.mxu0
        %1191 = vst.msk [vmem:[%s595] sm:$0xff] %vm730, %v1185
        %1192 = vst.msk [vmem:[%s595 + $0x8] sm:$0xff] %vm730, %v1188
        %v1193 = vsel %vm730, %v1185, -inf
        %1194 = vmax.xlane.f32.xlu0 %v1193
        %v1195 = vpop.xlane.xlu0 %1194
        %v1196 = vsel %vm730, %v1188, -inf
        %1197 = vmax.xlane.f32.xlu0 %v1196
        %v1198 = vpop.xlane.xlu0 %1197
        %v1199 = vsub.f32 %v1185, %v1195
        %v1200 = vsub.f32 %v1188, %v1198
        %v1201 = vmul.f32 %v1199, 1.442695
        %v1202 = vpow.pop %v1201
        %v1203 = vmul.f32 %v1200, 1.442695
        %v1204 = vpow.pop %v1203
        %v1205 = vsel %vm730, %v1202, 0.0
        %1206 = vadd.xlane.f32.xlu0 %v1205
        %v1207 = vpop.xlane.xlu0 %1206
        %v1208 = vsel %vm730, %v1204, 0.0
        %1209 = vadd.xlane.f32.xlu0 %v1208
        %v1210 = vpop.xlane.xlu0 %1209
        %v1211 = vrcp.pop %v1207
        %v1212 = vrcp.pop %v1210
        %v1213 = vmul.f32 %v1202, %v1211
        %v1214 = vmul.f32 %v1204, %v1212
        %v1215 = vpack.c.bf16 %v1214, %v1213
        %v1217 = vsel %vm730, %v1215, 0
        %1219 = vmatprep.subr.bf16.mxu0 0
        %1220 = vmatpush1.bf16.msra.mxu0 %v1084
        %1221 = vmatprep.subr.bf16.mxu0 0
        %1222 = vmatpush1.bf16.msra.mxu0 %v1085
        %1223 = vmatprep.subr.bf16.mxu0 0
        %1224 = vmatpush1.bf16.msra.mxu0 0
        %1225 = vmatprep.subr.bf16.mxu0 0
        %1226 = vmatpush1.bf16.msra.mxu0 0
        %1227 = vmatprep.subr.bf16.mxu0 0
        %1228 = vmatpush1.bf16.msra.mxu0 0
        %1229 = vmatprep.subr.bf16.mxu0 0
        %1230 = vmatpush1.bf16.msra.mxu0 0
        %1231 = vmatprep.subr.bf16.mxu0 0
        %1232 = vmatpush1.bf16.msra.mxu0 0
        %1233 = vmatprep.subr.bf16.mxu0 0
        %1234 = vmatpush1.bf16.msra.mxu0 0
        %1235 = vmatprep.subr.bf16.mxu0 0
        %1236 = vmatpush1.bf16.msra.mxu0 0
        %1237 = vmatprep.subr.bf16.mxu0 0
        %1238 = vmatpush1.bf16.msra.mxu0 0
        %1239 = vmatprep.subr.bf16.mxu0 0
        %1240 = vmatpush1.bf16.msra.mxu0 0
        %1241 = vmatprep.subr.bf16.mxu0 0
        %1242 = vmatpush1.bf16.msra.mxu0 0
        %1243 = vmatprep.subr.bf16.mxu0 0
        %1244 = vmatpush1.bf16.msra.mxu0 0
        %1245 = vmatprep.subr.bf16.mxu0 0
        %1246 = vmatpush1.bf16.msra.mxu0 0
        %1247 = vmatprep.subr.bf16.mxu0 0
        %1248 = vmatpush1.bf16.msra.mxu0 0
        %1249 = vmatprep.subr.bf16.mxu0 0
        %1250 = vmatpush1.bf16.msra.mxu0 0
        %1251 = vmatprep.mubr.bf16.mxu0 0
        %1252 = vmatmul.mubr.bf16.gmra.mrb[0].mxu0 %v1217
        %v1253 = vpop.f32.mrb[0].mxu0
        %v1254 = vadd.f32 0.0, %v1253
        %v1255 = vpop.f32.mrb[0].mxu0
        %v1256 = vpop.f32.mrb[0].mxu0
        %v1257 = vadd.f32 0.0, %v1256
        %v1258 = vpop.f32.mrb[0].mxu0
        %1259 = vdwg.mxu0
        %1260 = vst.msk [vmem:[#allocation2] sm:$0xff] %vm1090, %v1254
        %1261 = vst.msk [vmem:[#allocation2 + $0x8] sm:$0xff] %vm1090, %v1257
        %1264 = vrot.lane.b32.xlu0 %v1086, 96
        %v1265 = vpop.permute.xlu0 %1264
        %1266 = vrot.lane.b32.xlu0 %v1087, 96
        %v1267 = vpop.permute.xlu0 %1266
        %v1269 = vsel %vm1090, %v1265, 0
        %v1272 = vsel %vm1090, %v1267, 0
        %1274 = vmatprep.subr.bf16.mxu0 0
        %1275 = vmatpush1.bf16.xpose.msra.mxu0 %v1269
        %1276 = vmatprep.subr.bf16.mxu0 0
        %1277 = vmatpush1.bf16.xpose.msra.mxu0 %v1272
        %1278 = vmatprep.subr.bf16.mxu0 0
        %1279 = vmatpush1.bf16.xpose.msra.mxu0 0
        %1280 = vmatprep.subr.bf16.mxu0 0
        %1281 = vmatpush1.bf16.xpose.msra.mxu0 0
        %1282 = vmatprep.subr.bf16.mxu0 0
        %1283 = vmatpush1.bf16.xpose.msra.mxu0 0
        %1284 = vmatprep.subr.bf16.mxu0 0
        %1285 = vmatpush1.bf16.xpose.msra.mxu0 0
        %1286 = vmatprep.subr.bf16.mxu0 0
        %1287 = vmatpush1.bf16.xpose.msra.mxu0 0
        %1288 = vmatprep.subr.bf16.mxu0 0
        %1289 = vmatpush1.bf16.xpose.msra.mxu0 0
        %1290 = vmatprep.subr.bf16.mxu0 0
        %1291 = vmatpush1.bf16.xpose.msra.mxu0 0
        %1292 = vmatprep.subr.bf16.mxu0 0
        %1293 = vmatpush1.bf16.xpose.msra.mxu0 0
        %1294 = vmatprep.subr.bf16.mxu0 0
        %1295 = vmatpush1.bf16.xpose.msra.mxu0 0
        %1296 = vmatprep.subr.bf16.mxu0 0
        %1297 = vmatpush1.bf16.xpose.msra.mxu0 0
        %1298 = vmatprep.subr.bf16.mxu0 0
        %1299 = vmatpush1.bf16.xpose.msra.mxu0 0
        %1300 = vmatprep.subr.bf16.mxu0 0
        %1301 = vmatpush1.bf16.xpose.msra.mxu0 0
        %1302 = vmatprep.subr.bf16.mxu0 0
        %1303 = vmatpush1.bf16.xpose.msra.mxu0 0
        %1304 = vmatprep.subr.bf16.mxu0 0
        %1305 = vmatpush1.bf16.xpose.msra.mxu0 0
        %1306 = vmatprep.mubr.bf16.mxu0 0
        %1307 = vmatmul.mubr.bf16.gmra.mrb[0].mxu0 %v1142
        %v1308 = vpop.f32.mrb[0].mxu0
        %v1309 = vadd.f32 %v1135, %v1308
        %v1310 = vpop.f32.mrb[0].mxu0
        %v1311 = vpop.f32.mrb[0].mxu0
        %v1312 = vadd.f32 %v1138, %v1311
        %v1313 = vpop.f32.mrb[0].mxu0
        %1314 = vdwg.mxu0
        %1315 = vst.msk [vmem:[%s602] sm:$0xff] %vm730, %v1309
        %1316 = vst.msk [vmem:[%s602 + $0x8] sm:$0xff] %vm730, %v1312
        %v1317 = vsel %vm730, %v1309, -inf
        %1318 = vmax.xlane.f32.xlu0 %v1317
        %v1319 = vpop.xlane.xlu0 %1318
        %v1320 = vsel %vm730, %v1312, -inf
        %1321 = vmax.xlane.f32.xlu0 %v1320
        %v1322 = vpop.xlane.xlu0 %1321
        %v1323 = vsub.f32 %v1309, %v1319
        %v1324 = vsub.f32 %v1312, %v1322
        %v1325 = vmul.f32 %v1323, 1.442695
        %v1326 = vpow.pop %v1325
        %v1327 = vmul.f32 %v1324, 1.442695
        %v1328 = vpow.pop %v1327
        %v1329 = vsel %vm730, %v1326, 0.0
        %1330 = vadd.xlane.f32.xlu0 %v1329
        %v1331 = vpop.xlane.xlu0 %1330
        %v1332 = vsel %vm730, %v1328, 0.0
        %1333 = vadd.xlane.f32.xlu0 %v1332
        %v1334 = vpop.xlane.xlu0 %1333
        %v1335 = vrcp.pop %v1331
        %v1336 = vrcp.pop %v1334
        %v1337 = vmul.f32 %v1326, %v1335
        %v1338 = vmul.f32 %v1328, %v1336
        %v1339 = vpack.c.bf16 %v1338, %v1337
        %v1341 = vsel %vm730, %v1339, 0
        %1343 = vmatprep.subr.bf16.mxu0 0
        %1344 = vmatpush1.bf16.msra.mxu0 %v1084
        %1345 = vmatprep.subr.bf16.mxu0 0
        %1346 = vmatpush1.bf16.msra.mxu0 %v1085
        %1347 = vmatprep.subr.bf16.mxu0 0
        %1348 = vmatpush1.bf16.msra.mxu0 0
        %1349 = vmatprep.subr.bf16.mxu0 0
        %1350 = vmatpush1.bf16.msra.mxu0 0
        %1351 = vmatprep.subr.bf16.mxu0 0
        %1352 = vmatpush1.bf16.msra.mxu0 0
        %1353 = vmatprep.subr.bf16.mxu0 0
        %1354 = vmatpush1.bf16.msra.mxu0 0
        %1355 = vmatprep.subr.bf16.mxu0 0
        %1356 = vmatpush1.bf16.msra.mxu0 0
        %1357 = vmatprep.subr.bf16.mxu0 0
        %1358 = vmatpush1.bf16.msra.mxu0 0
        %1359 = vmatprep.subr.bf16.mxu0 0
        %1360 = vmatpush1.bf16.msra.mxu0 0
        %1361 = vmatprep.subr.bf16.mxu0 0
        %1362 = vmatpush1.bf16.msra.mxu0 0
        %1363 = vmatprep.subr.bf16.mxu0 0
        %1364 = vmatpush1.bf16.msra.mxu0 0
        %1365 = vmatprep.subr.bf16.mxu0 0
        %1366 = vmatpush1.bf16.msra.mxu0 0
        %1367 = vmatprep.subr.bf16.mxu0 0
        %1368 = vmatpush1.bf16.msra.mxu0 0
        %1369 = vmatprep.subr.bf16.mxu0 0
        %1370 = vmatpush1.bf16.msra.mxu0 0
        %1371 = vmatprep.subr.bf16.mxu0 0
        %1372 = vmatpush1.bf16.msra.mxu0 0
        %1373 = vmatprep.subr.bf16.mxu0 0
        %1374 = vmatpush1.bf16.msra.mxu0 0
        %1375 = vmatprep.mubr.bf16.mxu0 0
        %1376 = vmatmul.mubr.bf16.gmra.mrb[0].mxu0 %v1341
        %v1377 = vpop.f32.mrb[0].mxu0
        %v1378 = vadd.f32 0.0, %v1377
        %v1379 = vpop.f32.mrb[0].mxu0
        %v1380 = vpop.f32.mrb[0].mxu0
        %v1381 = vadd.f32 0.0, %v1380
        %v1382 = vpop.f32.mrb[0].mxu0
        %1383 = vdwg.mxu0
        %1384 = vst.msk [vmem:[#allocation2 + $0x10] sm:$0xff] %vm1090, %v1378
        %1385 = vst.msk [vmem:[#allocation2 + $0x18] sm:$0xff] %vm1090, %v1381
        %1388 = vrot.lane.b32.xlu0 %v1088, 96
        %v1389 = vpop.permute.xlu0 %1388
        %1390 = vrot.lane.b32.xlu0 %v1089, 96
        %v1391 = vpop.permute.xlu0 %1390
        %1394 = vmatprep.subr.bf16.mxu0 0
        %1395 = vmatpush1.bf16.msra.mxu0 %v1389
        %1396 = vmatprep.subr.bf16.mxu0 0
        %1397 = vmatpush1.bf16.msra.mxu0 %v1391
        %1398 = vmatprep.subr.bf16.mxu0 0
        %1399 = vmatpush1.bf16.msra.mxu0 0
        %1400 = vmatprep.subr.bf16.mxu0 0
        %1401 = vmatpush1.bf16.msra.mxu0 0
        %1402 = vmatprep.subr.bf16.mxu0 0
        %1403 = vmatpush1.bf16.msra.mxu0 0
        %1404 = vmatprep.subr.bf16.mxu0 0
        %1405 = vmatpush1.bf16.msra.mxu0 0
        %1406 = vmatprep.subr.bf16.mxu0 0
        %1407 = vmatpush1.bf16.msra.mxu0 0
        %1408 = vmatprep.subr.bf16.mxu0 0
        %1409 = vmatpush1.bf16.msra.mxu0 0
        %1410 = vmatprep.subr.bf16.mxu0 0
        %1411 = vmatpush1.bf16.msra.mxu0 0
        %1412 = vmatprep.subr.bf16.mxu0 0
        %1413 = vmatpush1.bf16.msra.mxu0 0
        %1414 = vmatprep.subr.bf16.mxu0 0
        %1415 = vmatpush1.bf16.msra.mxu0 0
        %1416 = vmatprep.subr.bf16.mxu0 0
        %1417 = vmatpush1.bf16.msra.mxu0 0
        %1418 = vmatprep.subr.bf16.mxu0 0
        %1419 = vmatpush1.bf16.msra.mxu0 0
        %1420 = vmatprep.subr.bf16.mxu0 0
        %1421 = vmatpush1.bf16.msra.mxu0 0
        %1422 = vmatprep.subr.bf16.mxu0 0
        %1423 = vmatpush1.bf16.msra.mxu0 0
        %1424 = vmatprep.subr.bf16.mxu0 0
        %1425 = vmatpush1.bf16.msra.mxu0 0
        %1426 = vmatprep.mubr.bf16.mxu0 0
        %1427 = vmatmul.mubr.bf16.gmra.mrb[0].mxu0 %v1217
        %v1428 = vpop.f32.mrb[0].mxu0
        %v1429 = vadd.f32 0.0, %v1428
        %v1430 = vpop.f32.mrb[0].mxu0
        %v1431 = vpop.f32.mrb[0].mxu0
        %v1432 = vadd.f32 0.0, %v1431
        %v1433 = vpop.f32.mrb[0].mxu0
        %1434 = vdwg.mxu0
        %1435 = vst.msk [vmem:[#allocation2 + $0x20] sm:$0xff] %vm1090, %v1429
        %1436 = vst.msk [vmem:[#allocation2 + $0x28] sm:$0xff] %vm1090, %v1432
        %1438 = vrot.lane.b32.xlu0 %v1079, 120
        %v1439 = vpop.permute.xlu0 %1438
        %1442 = vrot.lane.b32.xlu0 %v1080, 120
        %v1443 = vpop.permute.xlu0 %1442
        %1444 = vrot.lane.b32.xlu0 %v1081, 120
        %v1445 = vpop.permute.xlu0 %1444
        %v1447 = vsel %vm1090, %v1439, 0
        %v1450 = vsel %vm1090, %v1443, 0
        %v1453 = vsel %vm1090, %v1445, 0
        %1455 = vmatprep.subr.bf16.mxu0 0
        %1456 = vmatpush1.bf16.xpose.msra.mxu0 %v1450
        %1457 = vmatprep.subr.bf16.mxu0 0
        %1458 = vmatpush1.bf16.xpose.msra.mxu0 %v1453
        %1459 = vmatprep.subr.bf16.mxu0 0
        %1460 = vmatpush1.bf16.xpose.msra.mxu0 0
        %1461 = vmatprep.subr.bf16.mxu0 0
        %1462 = vmatpush1.bf16.xpose.msra.mxu0 0
        %1463 = vmatprep.subr.bf16.mxu0 0
        %1464 = vmatpush1.bf16.xpose.msra.mxu0 0
        %1465 = vmatprep.subr.bf16.mxu0 0
        %1466 = vmatpush1.bf16.xpose.msra.mxu0 0
        %1467 = vmatprep.subr.bf16.mxu0 0
        %1468 = vmatpush1.bf16.xpose.msra.mxu0 0
        %1469 = vmatprep.subr.bf16.mxu0 0
        %1470 = vmatpush1.bf16.xpose.msra.mxu0 0
        %1471 = vmatprep.subr.bf16.mxu0 0
        %1472 = vmatpush1.bf16.xpose.msra.mxu0 0
        %1473 = vmatprep.subr.bf16.mxu0 0
        %1474 = vmatpush1.bf16.xpose.msra.mxu0 0
        %1475 = vmatprep.subr.bf16.mxu0 0
        %1476 = vmatpush1.bf16.xpose.msra.mxu0 0
        %1477 = vmatprep.subr.bf16.mxu0 0
        %1478 = vmatpush1.bf16.xpose.msra.mxu0 0
        %1479 = vmatprep.subr.bf16.mxu0 0
        %1480 = vmatpush1.bf16.xpose.msra.mxu0 0
        %1481 = vmatprep.subr.bf16.mxu0 0
        %1482 = vmatpush1.bf16.xpose.msra.mxu0 0
        %1483 = vmatprep.subr.bf16.mxu0 0
        %1484 = vmatpush1.bf16.xpose.msra.mxu0 0
        %1485 = vmatprep.subr.bf16.mxu0 0
        %1486 = vmatpush1.bf16.xpose.msra.mxu0 0
        %1487 = vmatprep.mubr.bf16.mxu0 0
        %1488 = vmatmul.mubr.bf16.gmra.mrb[0].mxu0 %v1447
        %v1489 = vpop.f32.mrb[0].mxu0
        %v1490 = vadd.f32 0.0, %v1489
        %v1491 = vpop.f32.mrb[0].mxu0
        %v1492 = vpop.f32.mrb[0].mxu0
        %v1493 = vadd.f32 0.0, %v1492
        %v1494 = vpop.f32.mrb[0].mxu0
        %1495 = vdwg.mxu0
        %1497 = vrot.lane.b32.xlu0 %v1078, 120
        %v1498 = vpop.permute.xlu0 %1497
        %1501 = vrot.lane.b32.xlu0 %v1082, 120
        %v1502 = vpop.permute.xlu0 %1501
        %1503 = vrot.lane.b32.xlu0 %v1083, 120
        %v1504 = vpop.permute.xlu0 %1503
        %v1506 = vsel %vm1090, %v1498, 0
        %v1509 = vsel %vm1090, %v1502, 0
        %v1512 = vsel %vm1090, %v1504, 0
        %1514 = vmatprep.subr.bf16.mxu0 0
        %1515 = vmatpush1.bf16.xpose.msra.mxu0 %v1509
        %1516 = vmatprep.subr.bf16.mxu0 0
        %1517 = vmatpush1.bf16.xpose.msra.mxu0 %v1512
        %1518 = vmatprep.subr.bf16.mxu0 0
        %1519 = vmatpush1.bf16.xpose.msra.mxu0 0
        %1520 = vmatprep.subr.bf16.mxu0 0
        %1521 = vmatpush1.bf16.xpose.msra.mxu0 0
        %1522 = vmatprep.subr.bf16.mxu0 0
        %1523 = vmatpush1.bf16.xpose.msra.mxu0 0
        %1524 = vmatprep.subr.bf16.mxu0 0
        %1525 = vmatpush1.bf16.xpose.msra.mxu0 0
        %1526 = vmatprep.subr.bf16.mxu0 0
        %1527 = vmatpush1.bf16.xpose.msra.mxu0 0
        %1528 = vmatprep.subr.bf16.mxu0 0
        %1529 = vmatpush1.bf16.xpose.msra.mxu0 0
        %1530 = vmatprep.subr.bf16.mxu0 0
        %1531 = vmatpush1.bf16.xpose.msra.mxu0 0
        %1532 = vmatprep.subr.bf16.mxu0 0
        %1533 = vmatpush1.bf16.xpose.msra.mxu0 0
        %1534 = vmatprep.subr.bf16.mxu0 0
        %1535 = vmatpush1.bf16.xpose.msra.mxu0 0
        %1536 = vmatprep.subr.bf16.mxu0 0
        %1537 = vmatpush1.bf16.xpose.msra.mxu0 0
        %1538 = vmatprep.subr.bf16.mxu0 0
        %1539 = vmatpush1.bf16.xpose.msra.mxu0 0
        %1540 = vmatprep.subr.bf16.mxu0 0
        %1541 = vmatpush1.bf16.xpose.msra.mxu0 0
        %1542 = vmatprep.subr.bf16.mxu0 0
        %1543 = vmatpush1.bf16.xpose.msra.mxu0 0
        %1544 = vmatprep.subr.bf16.mxu0 0
        %1545 = vmatpush1.bf16.xpose.msra.mxu0 0
        %1546 = vmatprep.mubr.bf16.mxu0 0
        %1547 = vmatmul.mubr.bf16.gmra.mrb[0].mxu0 %v1506
        %v1548 = vpop.f32.mrb[0].mxu0
        %v1549 = vadd.f32 %v1490, %v1548
        %v1550 = vpop.f32.mrb[0].mxu0
        %v1551 = vpop.f32.mrb[0].mxu0
        %v1552 = vadd.f32 %v1493, %v1551
        %v1553 = vpop.f32.mrb[0].mxu0
        %1554 = vdwg.mxu0
        %s1555 = scalar_lea.vmem %s595, 16 [#allocation15]
        %1556 = vst.msk [vmem:[%s1555] sm:$0xff] %vm730, %v1549
        %1557 = vst.msk [vmem:[%s1555 + $0x8] sm:$0xff] %vm730, %v1552
        %v1558 = vsel %vm730, %v1549, -inf
        %1559 = vmax.xlane.f32.xlu0 %v1558
        %v1560 = vpop.xlane.xlu0 %1559
        %v1561 = vsel %vm730, %v1552, -inf
        %1562 = vmax.xlane.f32.xlu0 %v1561
        %v1563 = vpop.xlane.xlu0 %1562
        %v1564 = vsub.f32 %v1549, %v1560
        %v1565 = vsub.f32 %v1552, %v1563
        %v1566 = vmul.f32 %v1564, 1.442695
        %v1567 = vpow.pop %v1566
        %v1568 = vmul.f32 %v1565, 1.442695
        %v1569 = vpow.pop %v1568
        %v1570 = vsel %vm730, %v1567, 0.0
        %1571 = vadd.xlane.f32.xlu0 %v1570
        %v1572 = vpop.xlane.xlu0 %1571
        %v1573 = vsel %vm730, %v1569, 0.0
        %1574 = vadd.xlane.f32.xlu0 %v1573
        %v1575 = vpop.xlane.xlu0 %1574
        %v1576 = vrcp.pop %v1572
        %v1577 = vrcp.pop %v1575
        %v1578 = vmul.f32 %v1567, %v1576
        %v1579 = vmul.f32 %v1569, %v1577
        %v1580 = vpack.c.bf16 %v1579, %v1578
        %1583 = vrot.lane.b32.xlu0 %v1084, 120
        %v1584 = vpop.permute.xlu0 %1583
        %1585 = vrot.lane.b32.xlu0 %v1085, 120
        %v1586 = vpop.permute.xlu0 %1585
        %v1590 = vsel %vm730, %v1580, 0
        %1592 = vmatprep.subr.bf16.mxu0 0
        %1593 = vmatpush1.bf16.msra.mxu0 %v1584
        %1594 = vmatprep.subr.bf16.mxu0 0
        %1595 = vmatpush1.bf16.msra.mxu0 %v1586
        %1596 = vmatprep.subr.bf16.mxu0 0
        %1597 = vmatpush1.bf16.msra.mxu0 0
        %1598 = vmatprep.subr.bf16.mxu0 0
        %1599 = vmatpush1.bf16.msra.mxu0 0
        %1600 = vmatprep.subr.bf16.mxu0 0
        %1601 = vmatpush1.bf16.msra.mxu0 0
        %1602 = vmatprep.subr.bf16.mxu0 0
        %1603 = vmatpush1.bf16.msra.mxu0 0
        %1604 = vmatprep.subr.bf16.mxu0 0
        %1605 = vmatpush1.bf16.msra.mxu0 0
        %1606 = vmatprep.subr.bf16.mxu0 0
        %1607 = vmatpush1.bf16.msra.mxu0 0
        %1608 = vmatprep.subr.bf16.mxu0 0
        %1609 = vmatpush1.bf16.msra.mxu0 0
        %1610 = vmatprep.subr.bf16.mxu0 0
        %1611 = vmatpush1.bf16.msra.mxu0 0
        %1612 = vmatprep.subr.bf16.mxu0 0
        %1613 = vmatpush1.bf16.msra.mxu0 0
        %1614 = vmatprep.subr.bf16.mxu0 0
        %1615 = vmatpush1.bf16.msra.mxu0 0
        %1616 = vmatprep.subr.bf16.mxu0 0
        %1617 = vmatpush1.bf16.msra.mxu0 0
        %1618 = vmatprep.subr.bf16.mxu0 0
        %1619 = vmatpush1.bf16.msra.mxu0 0
        %1620 = vmatprep.subr.bf16.mxu0 0
        %1621 = vmatpush1.bf16.msra.mxu0 0
        %1622 = vmatprep.subr.bf16.mxu0 0
        %1623 = vmatpush1.bf16.msra.mxu0 0
        %1624 = vmatprep.mubr.bf16.mxu0 0
        %1625 = vmatmul.mubr.bf16.gmra.mrb[0].mxu0 %v1590
        %v1626 = vpop.f32.mrb[0].mxu0
        %v1627 = vadd.f32 0.0, %v1626
        %v1628 = vpop.f32.mrb[0].mxu0
        %v1629 = vpop.f32.mrb[0].mxu0
        %v1630 = vadd.f32 0.0, %v1629
        %v1631 = vpop.f32.mrb[0].mxu0
        %1632 = vdwg.mxu0
        %1635 = vrot.lane.b32.xlu0 %v1627, 8
        %v1636 = vpop.permute.xlu0 %1635
        %1637 = vrot.lane.b32.xlu0 %v1630, 8
        %v1638 = vpop.permute.xlu0 %1637
        %vm1641 = vcmask 130112
        %1642 = vst.msk [vmem:[#allocation2] sm:$0xff] %vm1641, %v1636
        %1643 = vst.msk [vmem:[#allocation2 + $0x8] sm:$0xff] %vm1641, %v1638
        %1644 = vrot.lane.b32.xlu0 %v1086, 88
        %v1645 = vpop.permute.xlu0 %1644
        %1646 = vrot.lane.b32.xlu0 %v1087, 88
        %v1647 = vpop.permute.xlu0 %1646
        %v1649 = vsel %vm1090, %v1645, 0
        %v1652 = vsel %vm1090, %v1647, 0
        %1654 = vmatprep.subr.bf16.mxu0 0
        %1655 = vmatpush1.bf16.xpose.msra.mxu0 %v1649
        %1656 = vmatprep.subr.bf16.mxu0 0
        %1657 = vmatpush1.bf16.xpose.msra.mxu0 %v1652
        %1658 = vmatprep.subr.bf16.mxu0 0
        %1659 = vmatpush1.bf16.xpose.msra.mxu0 0
        %1660 = vmatprep.subr.bf16.mxu0 0
        %1661 = vmatpush1.bf16.xpose.msra.mxu0 0
        %1662 = vmatprep.subr.bf16.mxu0 0
        %1663 = vmatpush1.bf16.xpose.msra.mxu0 0
        %1664 = vmatprep.subr.bf16.mxu0 0
        %1665 = vmatpush1.bf16.xpose.msra.mxu0 0
        %1666 = vmatprep.subr.bf16.mxu0 0
        %1667 = vmatpush1.bf16.xpose.msra.mxu0 0
        %1668 = vmatprep.subr.bf16.mxu0 0
        %1669 = vmatpush1.bf16.xpose.msra.mxu0 0
        %1670 = vmatprep.subr.bf16.mxu0 0
        %1671 = vmatpush1.bf16.xpose.msra.mxu0 0
        %1672 = vmatprep.subr.bf16.mxu0 0
        %1673 = vmatpush1.bf16.xpose.msra.mxu0 0
        %1674 = vmatprep.subr.bf16.mxu0 0
        %1675 = vmatpush1.bf16.xpose.msra.mxu0 0
        %1676 = vmatprep.subr.bf16.mxu0 0
        %1677 = vmatpush1.bf16.xpose.msra.mxu0 0
        %1678 = vmatprep.subr.bf16.mxu0 0
        %1679 = vmatpush1.bf16.xpose.msra.mxu0 0
        %1680 = vmatprep.subr.bf16.mxu0 0
        %1681 = vmatpush1.bf16.xpose.msra.mxu0 0
        %1682 = vmatprep.subr.bf16.mxu0 0
        %1683 = vmatpush1.bf16.xpose.msra.mxu0 0
        %1684 = vmatprep.subr.bf16.mxu0 0
        %1685 = vmatpush1.bf16.xpose.msra.mxu0 0
        %1686 = vmatprep.mubr.bf16.mxu0 0
        %1687 = vmatmul.mubr.bf16.gmra.mrb[0].mxu0 %v1506
        %v1688 = vpop.f32.mrb[0].mxu0
        %v1689 = vadd.f32 %v1490, %v1688
        %v1690 = vpop.f32.mrb[0].mxu0
        %v1691 = vpop.f32.mrb[0].mxu0
        %v1692 = vadd.f32 %v1493, %v1691
        %v1693 = vpop.f32.mrb[0].mxu0
        %1694 = vdwg.mxu0
        %s1695 = scalar_lea.vmem %s602, 16 [#allocation17]
        %1696 = vst.msk [vmem:[%s1695] sm:$0xff] %vm730, %v1689
        %1697 = vst.msk [vmem:[%s1695 + $0x8] sm:$0xff] %vm730, %v1692
        %v1698 = vsel %vm730, %v1689, -inf
        %1699 = vmax.xlane.f32.xlu0 %v1698
        %v1700 = vpop.xlane.xlu0 %1699
        %v1701 = vsel %vm730, %v1692, -inf
        %1702 = vmax.xlane.f32.xlu0 %v1701
        %v1703 = vpop.xlane.xlu0 %1702
        %v1704 = vsub.f32 %v1689, %v1700
        %v1705 = vsub.f32 %v1692, %v1703
        %v1706 = vmul.f32 %v1704, 1.442695
        %v1707 = vpow.pop %v1706
        %v1708 = vmul.f32 %v1705, 1.442695
        %v1709 = vpow.pop %v1708
        %v1710 = vsel %vm730, %v1707, 0.0
        %1711 = vadd.xlane.f32.xlu0 %v1710
        %v1712 = vpop.xlane.xlu0 %1711
        %v1713 = vsel %vm730, %v1709, 0.0
        %1714 = vadd.xlane.f32.xlu0 %v1713
        %v1715 = vpop.xlane.xlu0 %1714
        %v1716 = vrcp.pop %v1712
        %v1717 = vrcp.pop %v1715
        %v1718 = vmul.f32 %v1707, %v1716
        %v1719 = vmul.f32 %v1709, %v1717
        %v1720 = vpack.c.bf16 %v1719, %v1718
        %v1722 = vsel %vm730, %v1720, 0
        %1724 = vmatprep.subr.bf16.mxu0 0
        %1725 = vmatpush1.bf16.msra.mxu0 %v1584
        %1726 = vmatprep.subr.bf16.mxu0 0
        %1727 = vmatpush1.bf16.msra.mxu0 %v1586
        %1728 = vmatprep.subr.bf16.mxu0 0
        %1729 = vmatpush1.bf16.msra.mxu0 0
        %1730 = vmatprep.subr.bf16.mxu0 0
        %1731 = vmatpush1.bf16.msra.mxu0 0
        %1732 = vmatprep.subr.bf16.mxu0 0
        %1733 = vmatpush1.bf16.msra.mxu0 0
        %1734 = vmatprep.subr.bf16.mxu0 0
        %1735 = vmatpush1.bf16.msra.mxu0 0
        %1736 = vmatprep.subr.bf16.mxu0 0
        %1737 = vmatpush1.bf16.msra.mxu0 0
        %1738 = vmatprep.subr.bf16.mxu0 0
        %1739 = vmatpush1.bf16.msra.mxu0 0
        %1740 = vmatprep.subr.bf16.mxu0 0
        %1741 = vmatpush1.bf16.msra.mxu0 0
        %1742 = vmatprep.subr.bf16.mxu0 0
        %1743 = vmatpush1.bf16.msra.mxu0 0
        %1744 = vmatprep.subr.bf16.mxu0 0
        %1745 = vmatpush1.bf16.msra.mxu0 0
        %1746 = vmatprep.subr.bf16.mxu0 0
        %1747 = vmatpush1.bf16.msra.mxu0 0
        %1748 = vmatprep.subr.bf16.mxu0 0
        %1749 = vmatpush1.bf16.msra.mxu0 0
        %1750 = vmatprep.subr.bf16.mxu0 0
        %1751 = vmatpush1.bf16.msra.mxu0 0
        %1752 = vmatprep.subr.bf16.mxu0 0
        %1753 = vmatpush1.bf16.msra.mxu0 0
        %1754 = vmatprep.subr.bf16.mxu0 0
        %1755 = vmatpush1.bf16.msra.mxu0 0
        %1756 = vmatprep.mubr.bf16.mxu0 0
        %1757 = vmatmul.mubr.bf16.gmra.mrb[0].mxu0 %v1722
        %v1758 = vpop.f32.mrb[0].mxu0
        %v1759 = vadd.f32 0.0, %v1758
        %v1760 = vpop.f32.mrb[0].mxu0
        %v1761 = vpop.f32.mrb[0].mxu0
        %v1762 = vadd.f32 0.0, %v1761
        %v1763 = vpop.f32.mrb[0].mxu0
        %1764 = vdwg.mxu0
        %1767 = vrot.lane.b32.xlu0 %v1759, 8
        %v1768 = vpop.permute.xlu0 %1767
        %1769 = vrot.lane.b32.xlu0 %v1762, 8
        %v1770 = vpop.permute.xlu0 %1769
        %1773 = vst.msk [vmem:[#allocation2 + $0x10] sm:$0xff] %vm1641, %v1768
        %1774 = vst.msk [vmem:[#allocation2 + $0x18] sm:$0xff] %vm1641, %v1770
        %1775 = vrot.lane.b32.xlu0 %v1088, 88
        %v1776 = vpop.permute.xlu0 %1775
        %1777 = vrot.lane.b32.xlu0 %v1089, 88
        %v1778 = vpop.permute.xlu0 %1777
        %1781 = vmatprep.subr.bf16.mxu0 0
        %1782 = vmatpush1.bf16.msra.mxu0 %v1776
        %1783 = vmatprep.subr.bf16.mxu0 0
        %1784 = vmatpush1.bf16.msra.mxu0 %v1778
        %1785 = vmatprep.subr.bf16.mxu0 0
        %1786 = vmatpush1.bf16.msra.mxu0 0
        %1787 = vmatprep.subr.bf16.mxu0 0
        %1788 = vmatpush1.bf16.msra.mxu0 0
        %1789 = vmatprep.subr.bf16.mxu0 0
        %1790 = vmatpush1.bf16.msra.mxu0 0
        %1791 = vmatprep.subr.bf16.mxu0 0
        %1792 = vmatpush1.bf16.msra.mxu0 0
        %1793 = vmatprep.subr.bf16.mxu0 0
        %1794 = vmatpush1.bf16.msra.mxu0 0
        %1795 = vmatprep.subr.bf16.mxu0 0
        %1796 = vmatpush1.bf16.msra.mxu0 0
        %1797 = vmatprep.subr.bf16.mxu0 0
        %1798 = vmatpush1.bf16.msra.mxu0 0
        %1799 = vmatprep.subr.bf16.mxu0 0
        %1800 = vmatpush1.bf16.msra.mxu0 0
        %1801 = vmatprep.subr.bf16.mxu0 0
        %1802 = vmatpush1.bf16.msra.mxu0 0
        %1803 = vmatprep.subr.bf16.mxu0 0
        %1804 = vmatpush1.bf16.msra.mxu0 0
        %1805 = vmatprep.subr.bf16.mxu0 0
        %1806 = vmatpush1.bf16.msra.mxu0 0
        %1807 = vmatprep.subr.bf16.mxu0 0
        %1808 = vmatpush1.bf16.msra.mxu0 0
        %1809 = vmatprep.subr.bf16.mxu0 0
        %1810 = vmatpush1.bf16.msra.mxu0 0
        %1811 = vmatprep.subr.bf16.mxu0 0
        %1812 = vmatpush1.bf16.msra.mxu0 0
        %1813 = vmatprep.mubr.bf16.mxu0 0
        %1814 = vmatmul.mubr.bf16.gmra.mrb[0].mxu0 %v1590
        %v1815 = vpop.f32.mrb[0].mxu0
        %v1816 = vadd.f32 0.0, %v1815
        %v1817 = vpop.f32.mrb[0].mxu0
        %v1818 = vpop.f32.mrb[0].mxu0
        %v1819 = vadd.f32 0.0, %v1818
        %v1820 = vpop.f32.mrb[0].mxu0
        %1821 = vdwg.mxu0
        %1824 = vrot.lane.b32.xlu0 %v1816, 8
        %v1825 = vpop.permute.xlu0 %1824
        %1826 = vrot.lane.b32.xlu0 %v1819, 8
        %v1827 = vpop.permute.xlu0 %1826
        %1830 = vst.msk [vmem:[#allocation2 + $0x20] sm:$0xff] %vm1641, %v1825
        %1831 = vst.msk [vmem:[#allocation2 + $0x28] sm:$0xff] %vm1641, %v1827
        %1832 = vrot.lane.b32.xlu0 %v1079, 112
        %v1833 = vpop.permute.xlu0 %1832
        %1834 = vrot.lane.b32.xlu0 %v1080, 112
        %v1835 = vpop.permute.xlu0 %1834
        %1836 = vrot.lane.b32.xlu0 %v1081, 112
        %v1837 = vpop.permute.xlu0 %1836
        %v1839 = vsel %vm1090, %v1833, 0
        %v1842 = vsel %vm1090, %v1835, 0
        %v1845 = vsel %vm1090, %v1837, 0
        %1847 = vmatprep.subr.bf16.mxu0 0
        %1848 = vmatpush1.bf16.xpose.msra.mxu0 %v1842
        %1849 = vmatprep.subr.bf16.mxu0 0
        %1850 = vmatpush1.bf16.xpose.msra.mxu0 %v1845
        %1851 = vmatprep.subr.bf16.mxu0 0
        %1852 = vmatpush1.bf16.xpose.msra.mxu0 0
        %1853 = vmatprep.subr.bf16.mxu0 0
        %1854 = vmatpush1.bf16.xpose.msra.mxu0 0
        %1855 = vmatprep.subr.bf16.mxu0 0
        %1856 = vmatpush1.bf16.xpose.msra.mxu0 0
        %1857 = vmatprep.subr.bf16.mxu0 0
        %1858 = vmatpush1.bf16.xpose.msra.mxu0 0
        %1859 = vmatprep.subr.bf16.mxu0 0
        %1860 = vmatpush1.bf16.xpose.msra.mxu0 0
        %1861 = vmatprep.subr.bf16.mxu0 0
        %1862 = vmatpush1.bf16.xpose.msra.mxu0 0
        %1863 = vmatprep.subr.bf16.mxu0 0
        %1864 = vmatpush1.bf16.xpose.msra.mxu0 0
        %1865 = vmatprep.subr.bf16.mxu0 0
        %1866 = vmatpush1.bf16.xpose.msra.mxu0 0
        %1867 = vmatprep.subr.bf16.mxu0 0
        %1868 = vmatpush1.bf16.xpose.msra.mxu0 0
        %1869 = vmatprep.subr.bf16.mxu0 0
        %1870 = vmatpush1.bf16.xpose.msra.mxu0 0
        %1871 = vmatprep.subr.bf16.mxu0 0
        %1872 = vmatpush1.bf16.xpose.msra.mxu0 0
        %1873 = vmatprep.subr.bf16.mxu0 0
        %1874 = vmatpush1.bf16.xpose.msra.mxu0 0
        %1875 = vmatprep.subr.bf16.mxu0 0
        %1876 = vmatpush1.bf16.xpose.msra.mxu0 0
        %1877 = vmatprep.subr.bf16.mxu0 0
        %1878 = vmatpush1.bf16.xpose.msra.mxu0 0
        %1879 = vmatprep.mubr.bf16.mxu0 0
        %1880 = vmatmul.mubr.bf16.gmra.mrb[0].mxu0 %v1839
        %v1881 = vpop.f32.mrb[0].mxu0
        %v1882 = vadd.f32 0.0, %v1881
        %v1883 = vpop.f32.mrb[0].mxu0
        %v1884 = vpop.f32.mrb[0].mxu0
        %v1885 = vadd.f32 0.0, %v1884
        %v1886 = vpop.f32.mrb[0].mxu0
        %1887 = vdwg.mxu0
        %1888 = vrot.lane.b32.xlu0 %v1078, 112
        %v1889 = vpop.permute.xlu0 %1888
        %1890 = vrot.lane.b32.xlu0 %v1082, 112
        %v1891 = vpop.permute.xlu0 %1890
        %1892 = vrot.lane.b32.xlu0 %v1083, 112
        %v1893 = vpop.permute.xlu0 %1892
        %v1895 = vsel %vm1090, %v1889, 0
        %v1898 = vsel %vm1090, %v1891, 0
        %v1901 = vsel %vm1090, %v1893, 0
        %1903 = vmatprep.subr.bf16.mxu0 0
        %1904 = vmatpush1.bf16.xpose.msra.mxu0 %v1898
        %1905 = vmatprep.subr.bf16.mxu0 0
        %1906 = vmatpush1.bf16.xpose.msra.mxu0 %v1901
        %1907 = vmatprep.subr.bf16.mxu0 0
        %1908 = vmatpush1.bf16.xpose.msra.mxu0 0
        %1909 = vmatprep.subr.bf16.mxu0 0
        %1910 = vmatpush1.bf16.xpose.msra.mxu0 0
        %1911 = vmatprep.subr.bf16.mxu0 0
        %1912 = vmatpush1.bf16.xpose.msra.mxu0 0
        %1913 = vmatprep.subr.bf16.mxu0 0
        %1914 = vmatpush1.bf16.xpose.msra.mxu0 0
        %1915 = vmatprep.subr.bf16.mxu0 0
        %1916 = vmatpush1.bf16.xpose.msra.mxu0 0
        %1917 = vmatprep.subr.bf16.mxu0 0
        %1918 = vmatpush1.bf16.xpose.msra.mxu0 0
        %1919 = vmatprep.subr.bf16.mxu0 0
        %1920 = vmatpush1.bf16.xpose.msra.mxu0 0
        %1921 = vmatprep.subr.bf16.mxu0 0
        %1922 = vmatpush1.bf16.xpose.msra.mxu0 0
        %1923 = vmatprep.subr.bf16.mxu0 0
        %1924 = vmatpush1.bf16.xpose.msra.mxu0 0
        %1925 = vmatprep.subr.bf16.mxu0 0
        %1926 = vmatpush1.bf16.xpose.msra.mxu0 0
        %1927 = vmatprep.subr.bf16.mxu0 0
        %1928 = vmatpush1.bf16.xpose.msra.mxu0 0
        %1929 = vmatprep.subr.bf16.mxu0 0
        %1930 = vmatpush1.bf16.xpose.msra.mxu0 0
        %1931 = vmatprep.subr.bf16.mxu0 0
        %1932 = vmatpush1.bf16.xpose.msra.mxu0 0
        %1933 = vmatprep.subr.bf16.mxu0 0
        %1934 = vmatpush1.bf16.xpose.msra.mxu0 0
        %1935 = vmatprep.mubr.bf16.mxu0 0
        %1936 = vmatmul.mubr.bf16.gmra.mrb[0].mxu0 %v1895
        %v1937 = vpop.f32.mrb[0].mxu0
        %v1938 = vadd.f32 %v1882, %v1937
        %v1939 = vpop.f32.mrb[0].mxu0
        %v1940 = vpop.f32.mrb[0].mxu0
        %v1941 = vadd.f32 %v1885, %v1940
        %v1942 = vpop.f32.mrb[0].mxu0
        %1943 = vdwg.mxu0
        %s1944 = scalar_lea.vmem %s595, 32 [#allocation15]
        %1945 = vst.msk [vmem:[%s1944] sm:$0xff] %vm730, %v1938
        %1946 = vst.msk [vmem:[%s1944 + $0x8] sm:$0xff] %vm730, %v1941
        %v1947 = vsel %vm730, %v1938, -inf
        %1948 = vmax.xlane.f32.xlu0 %v1947
        %v1949 = vpop.xlane.xlu0 %1948
        %v1950 = vsel %vm730, %v1941, -inf
        %1951 = vmax.xlane.f32.xlu0 %v1950
        %v1952 = vpop.xlane.xlu0 %1951
        %v1953 = vsub.f32 %v1938, %v1949
        %v1954 = vsub.f32 %v1941, %v1952
        %v1955 = vmul.f32 %v1953, 1.442695
        %v1956 = vpow.pop %v1955
        %v1957 = vmul.f32 %v1954, 1.442695
        %v1958 = vpow.pop %v1957
        %v1959 = vsel %vm730, %v1956, 0.0
        %1960 = vadd.xlane.f32.xlu0 %v1959
        %v1961 = vpop.xlane.xlu0 %1960
        %v1962 = vsel %vm730, %v1958, 0.0
        %1963 = vadd.xlane.f32.xlu0 %v1962
        %v1964 = vpop.xlane.xlu0 %1963
        %v1965 = vrcp.pop %v1961
        %v1966 = vrcp.pop %v1964
        %v1967 = vmul.f32 %v1956, %v1965
        %v1968 = vmul.f32 %v1958, %v1966
        %v1969 = vpack.c.bf16 %v1968, %v1967
        %1970 = vrot.lane.b32.xlu0 %v1084, 112
        %v1971 = vpop.permute.xlu0 %1970
        %1972 = vrot.lane.b32.xlu0 %v1085, 112
        %v1973 = vpop.permute.xlu0 %1972
        %v1977 = vsel %vm730, %v1969, 0
        %1979 = vmatprep.subr.bf16.mxu0 0
        %1980 = vmatpush1.bf16.msra.mxu0 %v1971
        %1981 = vmatprep.subr.bf16.mxu0 0
        %1982 = vmatpush1.bf16.msra.mxu0 %v1973
        %1983 = vmatprep.subr.bf16.mxu0 0
        %1984 = vmatpush1.bf16.msra.mxu0 0
        %1985 = vmatprep.subr.bf16.mxu0 0
        %1986 = vmatpush1.bf16.msra.mxu0 0
        %1987 = vmatprep.subr.bf16.mxu0 0
        %1988 = vmatpush1.bf16.msra.mxu0 0
        %1989 = vmatprep.subr.bf16.mxu0 0
        %1990 = vmatpush1.bf16.msra.mxu0 0
        %1991 = vmatprep.subr.bf16.mxu0 0
        %1992 = vmatpush1.bf16.msra.mxu0 0
        %1993 = vmatprep.subr.bf16.mxu0 0
        %1994 = vmatpush1.bf16.msra.mxu0 0
        %1995 = vmatprep.subr.bf16.mxu0 0
        %1996 = vmatpush1.bf16.msra.mxu0 0
        %1997 = vmatprep.subr.bf16.mxu0 0
        %1998 = vmatpush1.bf16.msra.mxu0 0
        %1999 = vmatprep.subr.bf16.mxu0 0
        %2000 = vmatpush1.bf16.msra.mxu0 0
        %2001 = vmatprep.subr.bf16.mxu0 0
        %2002 = vmatpush1.bf16.msra.mxu0 0
        %2003 = vmatprep.subr.bf16.mxu0 0
        %2004 = vmatpush1.bf16.msra.mxu0 0
        %2005 = vmatprep.subr.bf16.mxu0 0
        %2006 = vmatpush1.bf16.msra.mxu0 0
        %2007 = vmatprep.subr.bf16.mxu0 0
        %2008 = vmatpush1.bf16.msra.mxu0 0
        %2009 = vmatprep.subr.bf16.mxu0 0
        %2010 = vmatpush1.bf16.msra.mxu0 0
        %2011 = vmatprep.mubr.bf16.mxu0 0
        %2012 = vmatmul.mubr.bf16.gmra.mrb[0].mxu0 %v1977
        %v2013 = vpop.f32.mrb[0].mxu0
        %v2014 = vadd.f32 0.0, %v2013
        %v2015 = vpop.f32.mrb[0].mxu0
        %v2016 = vpop.f32.mrb[0].mxu0
        %v2017 = vadd.f32 0.0, %v2016
        %v2018 = vpop.f32.mrb[0].mxu0
        %2019 = vdwg.mxu0
        %2022 = vrot.lane.b32.xlu0 %v2014, 16
        %v2023 = vpop.permute.xlu0 %2022
        %2024 = vrot.lane.b32.xlu0 %v2017, 16
        %v2025 = vpop.permute.xlu0 %2024
        %vm2028 = vcmask 195712
        %2029 = vst.msk [vmem:[#allocation2] sm:$0xff] %vm2028, %v2023
        %2030 = vst.msk [vmem:[#allocation2 + $0x8] sm:$0xff] %vm2028, %v2025
        %2031 = vrot.lane.b32.xlu0 %v1086, 80
        %v2032 = vpop.permute.xlu0 %2031
        %2033 = vrot.lane.b32.xlu0 %v1087, 80
        %v2034 = vpop.permute.xlu0 %2033
        %v2036 = vsel %vm1090, %v2032, 0
        %v2039 = vsel %vm1090, %v2034, 0
        %2041 = vmatprep.subr.bf16.mxu0 0
        %2042 = vmatpush1.bf16.xpose.msra.mxu0 %v2036
        %2043 = vmatprep.subr.bf16.mxu0 0
        %2044 = vmatpush1.bf16.xpose.msra.mxu0 %v2039
        %2045 = vmatprep.subr.bf16.mxu0 0
        %2046 = vmatpush1.bf16.xpose.msra.mxu0 0
        %2047 = vmatprep.subr.bf16.mxu0 0
        %2048 = vmatpush1.bf16.xpose.msra.mxu0 0
        %2049 = vmatprep.subr.bf16.mxu0 0
        %2050 = vmatpush1.bf16.xpose.msra.mxu0 0
        %2051 = vmatprep.subr.bf16.mxu0 0
        %2052 = vmatpush1.bf16.xpose.msra.mxu0 0
        %2053 = vmatprep.subr.bf16.mxu0 0
        %2054 = vmatpush1.bf16.xpose.msra.mxu0 0
        %2055 = vmatprep.subr.bf16.mxu0 0
        %2056 = vmatpush1.bf16.xpose.msra.mxu0 0
        %2057 = vmatprep.subr.bf16.mxu0 0
        %2058 = vmatpush1.bf16.xpose.msra.mxu0 0
        %2059 = vmatprep.subr.bf16.mxu0 0
        %2060 = vmatpush1.bf16.xpose.msra.mxu0 0
        %2061 = vmatprep.subr.bf16.mxu0 0
        %2062 = vmatpush1.bf16.xpose.msra.mxu0 0
        %2063 = vmatprep.subr.bf16.mxu0 0
        %2064 = vmatpush1.bf16.xpose.msra.mxu0 0
        %2065 = vmatprep.subr.bf16.mxu0 0
        %2066 = vmatpush1.bf16.xpose.msra.mxu0 0
        %2067 = vmatprep.subr.bf16.mxu0 0
        %2068 = vmatpush1.bf16.xpose.msra.mxu0 0
        %2069 = vmatprep.subr.bf16.mxu0 0
        %2070 = vmatpush1.bf16.xpose.msra.mxu0 0
        %2071 = vmatprep.subr.bf16.mxu0 0
        %2072 = vmatpush1.bf16.xpose.msra.mxu0 0
        %2073 = vmatprep.mubr.bf16.mxu0 0
        %2074 = vmatmul.mubr.bf16.gmra.mrb[0].mxu0 %v1895
        %v2075 = vpop.f32.mrb[0].mxu0
        %v2076 = vadd.f32 %v1882, %v2075
        %v2077 = vpop.f32.mrb[0].mxu0
        %v2078 = vpop.f32.mrb[0].mxu0
        %v2079 = vadd.f32 %v1885, %v2078
        %v2080 = vpop.f32.mrb[0].mxu0
        %2081 = vdwg.mxu0
        %s2082 = scalar_lea.vmem %s602, 32 [#allocation17]
        %2083 = vst.msk [vmem:[%s2082] sm:$0xff] %vm730, %v2076
        %2084 = vst.msk [vmem:[%s2082 + $0x8] sm:$0xff] %vm730, %v2079
        %v2085 = vsel %vm730, %v2076, -inf
        %2086 = vmax.xlane.f32.xlu0 %v2085
        %v2087 = vpop.xlane.xlu0 %2086
        %v2088 = vsel %vm730, %v2079, -inf
        %2089 = vmax.xlane.f32.xlu0 %v2088
        %v2090 = vpop.xlane.xlu0 %2089
        %v2091 = vsub.f32 %v2076, %v2087
        %v2092 = vsub.f32 %v2079, %v2090
        %v2093 = vmul.f32 %v2091, 1.442695
        %v2094 = vpow.pop %v2093
        %v2095 = vmul.f32 %v2092, 1.442695
        %v2096 = vpow.pop %v2095
        %v2097 = vsel %vm730, %v2094, 0.0
        %2098 = vadd.xlane.f32.xlu0 %v2097
        %v2099 = vpop.xlane.xlu0 %2098
        %v2100 = vsel %vm730, %v2096, 0.0
        %2101 = vadd.xlane.f32.xlu0 %v2100
        %v2102 = vpop.xlane.xlu0 %2101
        %v2103 = vrcp.pop %v2099
        %v2104 = vrcp.pop %v2102
        %v2105 = vmul.f32 %v2094, %v2103
        %v2106 = vmul.f32 %v2096, %v2104
        %v2107 = vpack.c.bf16 %v2106, %v2105
        %v2109 = vsel %vm730, %v2107, 0
        %2111 = vmatprep.subr.bf16.mxu0 0
        %2112 = vmatpush1.bf16.msra.mxu0 %v1971
        %2113 = vmatprep.subr.bf16.mxu0 0
        %2114 = vmatpush1.bf16.msra.mxu0 %v1973
        %2115 = vmatprep.subr.bf16.mxu0 0
        %2116 = vmatpush1.bf16.msra.mxu0 0
        %2117 = vmatprep.subr.bf16.mxu0 0
        %2118 = vmatpush1.bf16.msra.mxu0 0
        %2119 = vmatprep.subr.bf16.mxu0 0
        %2120 = vmatpush1.bf16.msra.mxu0 0
        %2121 = vmatprep.subr.bf16.mxu0 0
        %2122 = vmatpush1.bf16.msra.mxu0 0
        %2123 = vmatprep.subr.bf16.mxu0 0
        %2124 = vmatpush1.bf16.msra.mxu0 0
        %2125 = vmatprep.subr.bf16.mxu0 0
        %2126 = vmatpush1.bf16.msra.mxu0 0
        %2127 = vmatprep.subr.bf16.mxu0 0
        %2128 = vmatpush1.bf16.msra.mxu0 0
        %2129 = vmatprep.subr.bf16.mxu0 0
        %2130 = vmatpush1.bf16.msra.mxu0 0
        %2131 = vmatprep.subr.bf16.mxu0 0
        %2132 = vmatpush1.bf16.msra.mxu0 0
        %2133 = vmatprep.subr.bf16.mxu0 0
        %2134 = vmatpush1.bf16.msra.mxu0 0
        %2135 = vmatprep.subr.bf16.mxu0 0
        %2136 = vmatpush1.bf16.msra.mxu0 0
        %2137 = vmatprep.subr.bf16.mxu0 0
        %2138 = vmatpush1.bf16.msra.mxu0 0
        %2139 = vmatprep.subr.bf16.mxu0 0
        %2140 = vmatpush1.bf16.msra.mxu0 0
        %2141 = vmatprep.subr.bf16.mxu0 0
        %2142 = vmatpush1.bf16.msra.mxu0 0
        %2143 = vmatprep.mubr.bf16.mxu0 0
        %2144 = vmatmul.mubr.bf16.gmra.mrb[0].mxu0 %v2109
        %v2145 = vpop.f32.mrb[0].mxu0
        %v2146 = vadd.f32 0.0, %v2145
        %v2147 = vpop.f32.mrb[0].mxu0
        %v2148 = vpop.f32.mrb[0].mxu0
        %v2149 = vadd.f32 0.0, %v2148
        %v2150 = vpop.f32.mrb[0].mxu0
        %2151 = vdwg.mxu0
        %2154 = vrot.lane.b32.xlu0 %v2146, 16
        %v2155 = vpop.permute.xlu0 %2154
        %2156 = vrot.lane.b32.xlu0 %v2149, 16
        %v2157 = vpop.permute.xlu0 %2156
        %2160 = vst.msk [vmem:[#allocation2 + $0x10] sm:$0xff] %vm2028, %v2155
        %2161 = vst.msk [vmem:[#allocation2 + $0x18] sm:$0xff] %vm2028, %v2157
        %2162 = vrot.lane.b32.xlu0 %v1088, 80
        %v2163 = vpop.permute.xlu0 %2162
        %2164 = vrot.lane.b32.xlu0 %v1089, 80
        %v2165 = vpop.permute.xlu0 %2164
        %2168 = vmatprep.subr.bf16.mxu0 0
        %2169 = vmatpush1.bf16.msra.mxu0 %v2163
        %2170 = vmatprep.subr.bf16.mxu0 0
        %2171 = vmatpush1.bf16.msra.mxu0 %v2165
        %2172 = vmatprep.subr.bf16.mxu0 0
        %2173 = vmatpush1.bf16.msra.mxu0 0
        %2174 = vmatprep.subr.bf16.mxu0 0
        %2175 = vmatpush1.bf16.msra.mxu0 0
        %2176 = vmatprep.subr.bf16.mxu0 0
        %2177 = vmatpush1.bf16.msra.mxu0 0
        %2178 = vmatprep.subr.bf16.mxu0 0
        %2179 = vmatpush1.bf16.msra.mxu0 0
        %2180 = vmatprep.subr.bf16.mxu0 0
        %2181 = vmatpush1.bf16.msra.mxu0 0
        %2182 = vmatprep.subr.bf16.mxu0 0
        %2183 = vmatpush1.bf16.msra.mxu0 0
        %2184 = vmatprep.subr.bf16.mxu0 0
        %2185 = vmatpush1.bf16.msra.mxu0 0
        %2186 = vmatprep.subr.bf16.mxu0 0
        %2187 = vmatpush1.bf16.msra.mxu0 0
        %2188 = vmatprep.subr.bf16.mxu0 0
        %2189 = vmatpush1.bf16.msra.mxu0 0
        %2190 = vmatprep.subr.bf16.mxu0 0
        %2191 = vmatpush1.bf16.msra.mxu0 0
        %2192 = vmatprep.subr.bf16.mxu0 0
        %2193 = vmatpush1.bf16.msra.mxu0 0
        %2194 = vmatprep.subr.bf16.mxu0 0
        %2195 = vmatpush1.bf16.msra.mxu0 0
        %2196 = vmatprep.subr.bf16.mxu0 0
        %2197 = vmatpush1.bf16.msra.mxu0 0
        %2198 = vmatprep.subr.bf16.mxu0 0
        %2199 = vmatpush1.bf16.msra.mxu0 0
        %2200 = vmatprep.mubr.bf16.mxu0 0
        %2201 = vmatmul.mubr.bf16.gmra.mrb[0].mxu0 %v1977
        %v2202 = vpop.f32.mrb[0].mxu0
        %v2203 = vadd.f32 0.0, %v2202
        %v2204 = vpop.f32.mrb[0].mxu0
        %v2205 = vpop.f32.mrb[0].mxu0
        %v2206 = vadd.f32 0.0, %v2205
        %v2207 = vpop.f32.mrb[0].mxu0
        %2208 = vdwg.mxu0
        %2211 = vrot.lane.b32.xlu0 %v2203, 16
        %v2212 = vpop.permute.xlu0 %2211
        %2213 = vrot.lane.b32.xlu0 %v2206, 16
        %v2214 = vpop.permute.xlu0 %2213
        %2217 = vst.msk [vmem:[#allocation2 + $0x20] sm:$0xff] %vm2028, %v2212
        %2218 = vst.msk [vmem:[#allocation2 + $0x28] sm:$0xff] %vm2028, %v2214
        %2219 = vrot.lane.b32.xlu0 %v1079, 104
        %v2220 = vpop.permute.xlu0 %2219
        %2221 = vrot.lane.b32.xlu0 %v1080, 104
        %v2222 = vpop.permute.xlu0 %2221
        %2223 = vrot.lane.b32.xlu0 %v1081, 104
        %v2224 = vpop.permute.xlu0 %2223
        %v2226 = vsel %vm1090, %v2220, 0
        %v2229 = vsel %vm1090, %v2222, 0
        %v2232 = vsel %vm1090, %v2224, 0
        %2234 = vmatprep.subr.bf16.mxu0 0
        %2235 = vmatpush1.bf16.xpose.msra.mxu0 %v2229
        %2236 = vmatprep.subr.bf16.mxu0 0
        %2237 = vmatpush1.bf16.xpose.msra.mxu0 %v2232
        %2238 = vmatprep.subr.bf16.mxu0 0
        %2239 = vmatpush1.bf16.xpose.msra.mxu0 0
        %2240 = vmatprep.subr.bf16.mxu0 0
        %2241 = vmatpush1.bf16.xpose.msra.mxu0 0
        %2242 = vmatprep.subr.bf16.mxu0 0
        %2243 = vmatpush1.bf16.xpose.msra.mxu0 0
        %2244 = vmatprep.subr.bf16.mxu0 0
        %2245 = vmatpush1.bf16.xpose.msra.mxu0 0
        %2246 = vmatprep.subr.bf16.mxu0 0
        %2247 = vmatpush1.bf16.xpose.msra.mxu0 0
        %2248 = vmatprep.subr.bf16.mxu0 0
        %2249 = vmatpush1.bf16.xpose.msra.mxu0 0
        %2250 = vmatprep.subr.bf16.mxu0 0
        %2251 = vmatpush1.bf16.xpose.msra.mxu0 0
        %2252 = vmatprep.subr.bf16.mxu0 0
        %2253 = vmatpush1.bf16.xpose.msra.mxu0 0
        %2254 = vmatprep.subr.bf16.mxu0 0
        %2255 = vmatpush1.bf16.xpose.msra.mxu0 0
        %2256 = vmatprep.subr.bf16.mxu0 0
        %2257 = vmatpush1.bf16.xpose.msra.mxu0 0
        %2258 = vmatprep.subr.bf16.mxu0 0
        %2259 = vmatpush1.bf16.xpose.msra.mxu0 0
        %2260 = vmatprep.subr.bf16.mxu0 0
        %2261 = vmatpush1.bf16.xpose.msra.mxu0 0
        %2262 = vmatprep.subr.bf16.mxu0 0
        %2263 = vmatpush1.bf16.xpose.msra.mxu0 0
        %2264 = vmatprep.subr.bf16.mxu0 0
        %2265 = vmatpush1.bf16.xpose.msra.mxu0 0
        %2266 = vmatprep.mubr.bf16.mxu0 0
        %2267 = vmatmul.mubr.bf16.gmra.mrb[0].mxu0 %v2226
        %v2268 = vpop.f32.mrb[0].mxu0
        %v2269 = vadd.f32 0.0, %v2268
        %v2270 = vpop.f32.mrb[0].mxu0
        %v2271 = vpop.f32.mrb[0].mxu0
        %v2272 = vadd.f32 0.0, %v2271
        %v2273 = vpop.f32.mrb[0].mxu0
        %2274 = vdwg.mxu0
        %2275 = vrot.lane.b32.xlu0 %v1078, 104
        %v2276 = vpop.permute.xlu0 %2275
        %2277 = vrot.lane.b32.xlu0 %v1082, 104
        %v2278 = vpop.permute.xlu0 %2277
        %2279 = vrot.lane.b32.xlu0 %v1083, 104
        %v2280 = vpop.permute.xlu0 %2279
        %v2282 = vsel %vm1090, %v2276, 0
        %v2285 = vsel %vm1090, %v2278, 0
        %v2288 = vsel %vm1090, %v2280, 0
        %2290 = vmatprep.subr.bf16.mxu0 0
        %2291 = vmatpush1.bf16.xpose.msra.mxu0 %v2285
        %2292 = vmatprep.subr.bf16.mxu0 0
        %2293 = vmatpush1.bf16.xpose.msra.mxu0 %v2288
        %2294 = vmatprep.subr.bf16.mxu0 0
        %2295 = vmatpush1.bf16.xpose.msra.mxu0 0
        %2296 = vmatprep.subr.bf16.mxu0 0
        %2297 = vmatpush1.bf16.xpose.msra.mxu0 0
        %2298 = vmatprep.subr.bf16.mxu0 0
        %2299 = vmatpush1.bf16.xpose.msra.mxu0 0
        %2300 = vmatprep.subr.bf16.mxu0 0
        %2301 = vmatpush1.bf16.xpose.msra.mxu0 0
        %2302 = vmatprep.subr.bf16.mxu0 0
        %2303 = vmatpush1.bf16.xpose.msra.mxu0 0
        %2304 = vmatprep.subr.bf16.mxu0 0
        %2305 = vmatpush1.bf16.xpose.msra.mxu0 0
        %2306 = vmatprep.subr.bf16.mxu0 0
        %2307 = vmatpush1.bf16.xpose.msra.mxu0 0
        %2308 = vmatprep.subr.bf16.mxu0 0
        %2309 = vmatpush1.bf16.xpose.msra.mxu0 0
        %2310 = vmatprep.subr.bf16.mxu0 0
        %2311 = vmatpush1.bf16.xpose.msra.mxu0 0
        %2312 = vmatprep.subr.bf16.mxu0 0
        %2313 = vmatpush1.bf16.xpose.msra.mxu0 0
        %2314 = vmatprep.subr.bf16.mxu0 0
        %2315 = vmatpush1.bf16.xpose.msra.mxu0 0
        %2316 = vmatprep.subr.bf16.mxu0 0
        %2317 = vmatpush1.bf16.xpose.msra.mxu0 0
        %2318 = vmatprep.subr.bf16.mxu0 0
        %2319 = vmatpush1.bf16.xpose.msra.mxu0 0
        %2320 = vmatprep.subr.bf16.mxu0 0
        %2321 = vmatpush1.bf16.xpose.msra.mxu0 0
        %2322 = vmatprep.mubr.bf16.mxu0 0
        %2323 = vmatmul.mubr.bf16.gmra.mrb[0].mxu0 %v2282
        %v2324 = vpop.f32.mrb[0].mxu0
        %v2325 = vadd.f32 %v2269, %v2324
        %v2326 = vpop.f32.mrb[0].mxu0
        %v2327 = vpop.f32.mrb[0].mxu0
        %v2328 = vadd.f32 %v2272, %v2327
        %v2329 = vpop.f32.mrb[0].mxu0
        %2330 = vdwg.mxu0
        %s2331 = scalar_lea.vmem %s595, 48 [#allocation15]
        %2332 = vst.msk [vmem:[%s2331] sm:$0xff] %vm730, %v2325
        %2333 = vst.msk [vmem:[%s2331 + $0x8] sm:$0xff] %vm730, %v2328
        %v2334 = vsel %vm730, %v2325, -inf
        %2335 = vmax.xlane.f32.xlu0 %v2334
        %v2336 = vpop.xlane.xlu0 %2335
        %v2337 = vsel %vm730, %v2328, -inf
        %2338 = vmax.xlane.f32.xlu0 %v2337
        %v2339 = vpop.xlane.xlu0 %2338
        %v2340 = vsub.f32 %v2325, %v2336
        %v2341 = vsub.f32 %v2328, %v2339
        %v2342 = vmul.f32 %v2340, 1.442695
        %v2343 = vpow.pop %v2342
        %v2344 = vmul.f32 %v2341, 1.442695
        %v2345 = vpow.pop %v2344
        %v2346 = vsel %vm730, %v2343, 0.0
        %2347 = vadd.xlane.f32.xlu0 %v2346
        %v2348 = vpop.xlane.xlu0 %2347
        %v2349 = vsel %vm730, %v2345, 0.0
        %2350 = vadd.xlane.f32.xlu0 %v2349
        %v2351 = vpop.xlane.xlu0 %2350
        %v2352 = vrcp.pop %v2348
        %v2353 = vrcp.pop %v2351
        %v2354 = vmul.f32 %v2343, %v2352
        %v2355 = vmul.f32 %v2345, %v2353
        %v2356 = vpack.c.bf16 %v2355, %v2354
        %2357 = vrot.lane.b32.xlu0 %v1084, 104
        %v2358 = vpop.permute.xlu0 %2357
        %2359 = vrot.lane.b32.xlu0 %v1085, 104
        %v2360 = vpop.permute.xlu0 %2359
        %v2364 = vsel %vm730, %v2356, 0
        %2366 = vmatprep.subr.bf16.mxu0 0
        %2367 = vmatpush1.bf16.msra.mxu0 %v2358
        %2368 = vmatprep.subr.bf16.mxu0 0
        %2369 = vmatpush1.bf16.msra.mxu0 %v2360
        %2370 = vmatprep.subr.bf16.mxu0 0
        %2371 = vmatpush1.bf16.msra.mxu0 0
        %2372 = vmatprep.subr.bf16.mxu0 0
        %2373 = vmatpush1.bf16.msra.mxu0 0
        %2374 = vmatprep.subr.bf16.mxu0 0
        %2375 = vmatpush1.bf16.msra.mxu0 0
        %2376 = vmatprep.subr.bf16.mxu0 0
        %2377 = vmatpush1.bf16.msra.mxu0 0
        %2378 = vmatprep.subr.bf16.mxu0 0
        %2379 = vmatpush1.bf16.msra.mxu0 0
        %2380 = vmatprep.subr.bf16.mxu0 0
        %2381 = vmatpush1.bf16.msra.mxu0 0
        %2382 = vmatprep.subr.bf16.mxu0 0
        %2383 = vmatpush1.bf16.msra.mxu0 0
        %2384 = vmatprep.subr.bf16.mxu0 0
        %2385 = vmatpush1.bf16.msra.mxu0 0
        %2386 = vmatprep.subr.bf16.mxu0 0
        %2387 = vmatpush1.bf16.msra.mxu0 0
        %2388 = vmatprep.subr.bf16.mxu0 0
        %2389 = vmatpush1.bf16.msra.mxu0 0
        %2390 = vmatprep.subr.bf16.mxu0 0
        %2391 = vmatpush1.bf16.msra.mxu0 0
        %2392 = vmatprep.subr.bf16.mxu0 0
        %2393 = vmatpush1.bf16.msra.mxu0 0
        %2394 = vmatprep.subr.bf16.mxu0 0
        %2395 = vmatpush1.bf16.msra.mxu0 0
        %2396 = vmatprep.subr.bf16.mxu0 0
        %2397 = vmatpush1.bf16.msra.mxu0 0
        %2398 = vmatprep.mubr.bf16.mxu0 0
        %2399 = vmatmul.mubr.bf16.gmra.mrb[0].mxu0 %v2364
        %v2400 = vpop.f32.mrb[0].mxu0
        %v2401 = vadd.f32 0.0, %v2400
        %v2402 = vpop.f32.mrb[0].mxu0
        %v2403 = vpop.f32.mrb[0].mxu0
        %v2404 = vadd.f32 0.0, %v2403
        %v2405 = vpop.f32.mrb[0].mxu0
        %2406 = vdwg.mxu0
        %2409 = vrot.lane.b32.xlu0 %v2401, 24
        %v2410 = vpop.permute.xlu0 %2409
        %2411 = vrot.lane.b32.xlu0 %v2404, 24
        %v2412 = vpop.permute.xlu0 %2411
        %vm2415 = vcmask 261312
        %2416 = vst.msk [vmem:[#allocation2] sm:$0xff] %vm2415, %v2410
        %2417 = vst.msk [vmem:[#allocation2 + $0x8] sm:$0xff] %vm2415, %v2412
        %2418 = vrot.lane.b32.xlu0 %v1086, 72
        %v2419 = vpop.permute.xlu0 %2418
        %2420 = vrot.lane.b32.xlu0 %v1087, 72
        %v2421 = vpop.permute.xlu0 %2420
        %v2423 = vsel %vm1090, %v2419, 0
        %v2426 = vsel %vm1090, %v2421, 0
        %2428 = vmatprep.subr.bf16.mxu0 0
        %2429 = vmatpush1.bf16.xpose.msra.mxu0 %v2423
        %2430 = vmatprep.subr.bf16.mxu0 0
        %2431 = vmatpush1.bf16.xpose.msra.mxu0 %v2426
        %2432 = vmatprep.subr.bf16.mxu0 0
        %2433 = vmatpush1.bf16.xpose.msra.mxu0 0
        %2434 = vmatprep.subr.bf16.mxu0 0
        %2435 = vmatpush1.bf16.xpose.msra.mxu0 0
        %2436 = vmatprep.subr.bf16.mxu0 0
        %2437 = vmatpush1.bf16.xpose.msra.mxu0 0
        %2438 = vmatprep.subr.bf16.mxu0 0
        %2439 = vmatpush1.bf16.xpose.msra.mxu0 0
        %2440 = vmatprep.subr.bf16.mxu0 0
        %2441 = vmatpush1.bf16.xpose.msra.mxu0 0
        %2442 = vmatprep.subr.bf16.mxu0 0
        %2443 = vmatpush1.bf16.xpose.msra.mxu0 0
        %2444 = vmatprep.subr.bf16.mxu0 0
        %2445 = vmatpush1.bf16.xpose.msra.mxu0 0
        %2446 = vmatprep.subr.bf16.mxu0 0
        %2447 = vmatpush1.bf16.xpose.msra.mxu0 0
        %2448 = vmatprep.subr.bf16.mxu0 0
        %2449 = vmatpush1.bf16.xpose.msra.mxu0 0
        %2450 = vmatprep.subr.bf16.mxu0 0
        %2451 = vmatpush1.bf16.xpose.msra.mxu0 0
        %2452 = vmatprep.subr.bf16.mxu0 0
        %2453 = vmatpush1.bf16.xpose.msra.mxu0 0
        %2454 = vmatprep.subr.bf16.mxu0 0
        %2455 = vmatpush1.bf16.xpose.msra.mxu0 0
        %2456 = vmatprep.subr.bf16.mxu0 0
        %2457 = vmatpush1.bf16.xpose.msra.mxu0 0
        %2458 = vmatprep.subr.bf16.mxu0 0
        %2459 = vmatpush1.bf16.xpose.msra.mxu0 0
        %2460 = vmatprep.mubr.bf16.mxu0 0
        %2461 = vmatmul.mubr.bf16.gmra.mrb[0].mxu0 %v2282
        %v2462 = vpop.f32.mrb[0].mxu0
        %v2463 = vadd.f32 %v2269, %v2462
        %v2464 = vpop.f32.mrb[0].mxu0
        %v2465 = vpop.f32.mrb[0].mxu0
        %v2466 = vadd.f32 %v2272, %v2465
        %v2467 = vpop.f32.mrb[0].mxu0
        %2468 = vdwg.mxu0
        %s2469 = scalar_lea.vmem %s602, 48 [#allocation17]
        %2470 = vst.msk [vmem:[%s2469] sm:$0xff] %vm730, %v2463
        %2471 = vst.msk [vmem:[%s2469 + $0x8] sm:$0xff] %vm730, %v2466
        %v2472 = vsel %vm730, %v2463, -inf
        %2473 = vmax.xlane.f32.xlu0 %v2472
        %v2474 = vpop.xlane.xlu0 %2473
        %v2475 = vsel %vm730, %v2466, -inf
        %2476 = vmax.xlane.f32.xlu0 %v2475
        %v2477 = vpop.xlane.xlu0 %2476
        %v2478 = vsub.f32 %v2463, %v2474
        %v2479 = vsub.f32 %v2466, %v2477
        %v2480 = vmul.f32 %v2478, 1.442695
        %v2481 = vpow.pop %v2480
        %v2482 = vmul.f32 %v2479, 1.442695
        %v2483 = vpow.pop %v2482
        %v2484 = vsel %vm730, %v2481, 0.0
        %2485 = vadd.xlane.f32.xlu0 %v2484
        %v2486 = vpop.xlane.xlu0 %2485
        %v2487 = vsel %vm730, %v2483, 0.0
        %2488 = vadd.xlane.f32.xlu0 %v2487
        %v2489 = vpop.xlane.xlu0 %2488
        %v2490 = vrcp.pop %v2486
        %v2491 = vrcp.pop %v2489
        %v2492 = vmul.f32 %v2481, %v2490
        %v2493 = vmul.f32 %v2483, %v2491
        %v2494 = vpack.c.bf16 %v2493, %v2492
        %v2496 = vsel %vm730, %v2494, 0
        %2498 = vmatprep.subr.bf16.mxu0 0
        %2499 = vmatpush1.bf16.msra.mxu0 %v2358
        %2500 = vmatprep.subr.bf16.mxu0 0
        %2501 = vmatpush1.bf16.msra.mxu0 %v2360
        %2502 = vmatprep.subr.bf16.mxu0 0
        %2503 = vmatpush1.bf16.msra.mxu0 0
        %2504 = vmatprep.subr.bf16.mxu0 0
        %2505 = vmatpush1.bf16.msra.mxu0 0
        %2506 = vmatprep.subr.bf16.mxu0 0
        %2507 = vmatpush1.bf16.msra.mxu0 0
        %2508 = vmatprep.subr.bf16.mxu0 0
        %2509 = vmatpush1.bf16.msra.mxu0 0
        %2510 = vmatprep.subr.bf16.mxu0 0
        %2511 = vmatpush1.bf16.msra.mxu0 0
        %2512 = vmatprep.subr.bf16.mxu0 0
        %2513 = vmatpush1.bf16.msra.mxu0 0
        %2514 = vmatprep.subr.bf16.mxu0 0
        %2515 = vmatpush1.bf16.msra.mxu0 0
        %2516 = vmatprep.subr.bf16.mxu0 0
        %2517 = vmatpush1.bf16.msra.mxu0 0
        %2518 = vmatprep.subr.bf16.mxu0 0
        %2519 = vmatpush1.bf16.msra.mxu0 0
        %2520 = vmatprep.subr.bf16.mxu0 0
        %2521 = vmatpush1.bf16.msra.mxu0 0
        %2522 = vmatprep.subr.bf16.mxu0 0
        %2523 = vmatpush1.bf16.msra.mxu0 0
        %2524 = vmatprep.subr.bf16.mxu0 0
        %2525 = vmatpush1.bf16.msra.mxu0 0
        %2526 = vmatprep.subr.bf16.mxu0 0
        %2527 = vmatpush1.bf16.msra.mxu0 0
        %2528 = vmatprep.subr.bf16.mxu0 0
        %2529 = vmatpush1.bf16.msra.mxu0 0
        %2530 = vmatprep.mubr.bf16.mxu0 0
        %2531 = vmatmul.mubr.bf16.gmra.mrb[0].mxu0 %v2496
        %v2532 = vpop.f32.mrb[0].mxu0
        %v2533 = vadd.f32 0.0, %v2532
        %v2534 = vpop.f32.mrb[0].mxu0
        %v2535 = vpop.f32.mrb[0].mxu0
        %v2536 = vadd.f32 0.0, %v2535
        %v2537 = vpop.f32.mrb[0].mxu0
        %2538 = vdwg.mxu0
        %2541 = vrot.lane.b32.xlu0 %v2533, 24
        %v2542 = vpop.permute.xlu0 %2541
        %2543 = vrot.lane.b32.xlu0 %v2536, 24
        %v2544 = vpop.permute.xlu0 %2543
        %2547 = vst.msk [vmem:[#allocation2 + $0x10] sm:$0xff] %vm2415, %v2542
        %2548 = vst.msk [vmem:[#allocation2 + $0x18] sm:$0xff] %vm2415, %v2544
        %2549 = vrot.lane.b32.xlu0 %v1088, 72
        %v2550 = vpop.permute.xlu0 %2549
        %2551 = vrot.lane.b32.xlu0 %v1089, 72
        %v2552 = vpop.permute.xlu0 %2551
        %2555 = vmatprep.subr.bf16.mxu0 0
        %2556 = vmatpush1.bf16.msra.mxu0 %v2550
        %2557 = vmatprep.subr.bf16.mxu0 0
        %2558 = vmatpush1.bf16.msra.mxu0 %v2552
        %2559 = vmatprep.subr.bf16.mxu0 0
        %2560 = vmatpush1.bf16.msra.mxu0 0
        %2561 = vmatprep.subr.bf16.mxu0 0
        %2562 = vmatpush1.bf16.msra.mxu0 0
        %2563 = vmatprep.subr.bf16.mxu0 0
        %2564 = vmatpush1.bf16.msra.mxu0 0
        %2565 = vmatprep.subr.bf16.mxu0 0
        %2566 = vmatpush1.bf16.msra.mxu0 0
        %2567 = vmatprep.subr.bf16.mxu0 0
        %2568 = vmatpush1.bf16.msra.mxu0 0
        %2569 = vmatprep.subr.bf16.mxu0 0
        %2570 = vmatpush1.bf16.msra.mxu0 0
        %2571 = vmatprep.subr.bf16.mxu0 0
        %2572 = vmatpush1.bf16.msra.mxu0 0
        %2573 = vmatprep.subr.bf16.mxu0 0
        %2574 = vmatpush1.bf16.msra.mxu0 0
        %2575 = vmatprep.subr.bf16.mxu0 0
        %2576 = vmatpush1.bf16.msra.mxu0 0
        %2577 = vmatprep.subr.bf16.mxu0 0
        %2578 = vmatpush1.bf16.msra.mxu0 0
        %2579 = vmatprep.subr.bf16.mxu0 0
        %2580 = vmatpush1.bf16.msra.mxu0 0
        %2581 = vmatprep.subr.bf16.mxu0 0
        %2582 = vmatpush1.bf16.msra.mxu0 0
        %2583 = vmatprep.subr.bf16.mxu0 0
        %2584 = vmatpush1.bf16.msra.mxu0 0
        %2585 = vmatprep.subr.bf16.mxu0 0
        %2586 = vmatpush1.bf16.msra.mxu0 0
        %2587 = vmatprep.mubr.bf16.mxu0 0
        %2588 = vmatmul.mubr.bf16.gmra.mrb[0].mxu0 %v2364
        %v2589 = vpop.f32.mrb[0].mxu0
        %v2590 = vadd.f32 0.0, %v2589
        %v2591 = vpop.f32.mrb[0].mxu0
        %v2592 = vpop.f32.mrb[0].mxu0
        %v2593 = vadd.f32 0.0, %v2592
        %v2594 = vpop.f32.mrb[0].mxu0
        %2595 = vdwg.mxu0
        %2598 = vrot.lane.b32.xlu0 %v2590, 24
        %v2599 = vpop.permute.xlu0 %2598
        %2600 = vrot.lane.b32.xlu0 %v2593, 24
        %v2601 = vpop.permute.xlu0 %2600
        %2604 = vst.msk [vmem:[#allocation2 + $0x20] sm:$0xff] %vm2415, %v2599
        %2605 = vst.msk [vmem:[#allocation2 + $0x28] sm:$0xff] %vm2415, %v2601
        %v2606 = vld [vmem:[#allocation2] sm:$0xff]
        %v2607 = vld [vmem:[#allocation2 + $0x8] sm:$0xff]
        %v2608 = vld [vmem:[#allocation2 + $0x10] sm:$0xff]
        %v2609 = vld [vmem:[#allocation2 + $0x18] sm:$0xff]
        %v2610 = vld [vmem:[#allocation2 + $0x20] sm:$0xff]
        %v2611 = vld [vmem:[#allocation2 + $0x28] sm:$0xff]
        %v2612 = vpack.c.bf16 %v2607, %v2606
        %v2613 = vpack.c.bf16 %v2609, %v2608
        %v2614 = vpack.c.bf16 %v2611, %v2610
        %v2615 = vld [vmem:[%s9] sm:$0xf]
        %v2616 = vld [vmem:[%s9 + $0x4] sm:$0xf]
        %v2617 = vld [vmem:[%s9 + $0x8] sm:$0xf]
        %v2618 = vld [vmem:[%s9 + $0xc] sm:$0xf]
        %v2619 = vlaneseq
        %v2620 = vshrl.u32 %v2619, 7
        %v2621 = vsub.s32 7, %v2620
        %v2622 = vrot.slane %v614, %v2621
        %v2627 = vunpack.c.l.b16 %v2615
        %v2628 = vunpack.c.l.b16 %v2616
        %v2629 = vunpack.c.l.b16 %v2617
        %v2630 = vunpack.c.l.b16 %v2618
        %v2631 = vpack.c.b16 %v2628, %v2627
        %v2632 = vpack.c.b16 %v2630, %v2629
        %v2636 = vsel %vm730, %v2612, 0
        %v2639 = vsel %vm730, %v2613, 0
        %v2642 = vsel %vm730, %v2614, 0
        %2644 = vmatprep.subr.bf16.mxu0 0
        %2645 = vmatpush1.bf16.msra.mxu0 %v2631
        %2646 = vmatprep.subr.bf16.mxu0 0
        %2647 = vmatpush1.bf16.msra.mxu0 %v2632
        %2648 = vmatprep.subr.bf16.mxu0 0
        %2649 = vmatpush1.bf16.msra.mxu0 0
        %2650 = vmatprep.subr.bf16.mxu0 0
        %2651 = vmatpush1.bf16.msra.mxu0 0
        %2652 = vmatprep.subr.bf16.mxu0 0
        %2653 = vmatpush1.bf16.msra.mxu0 0
        %2654 = vmatprep.subr.bf16.mxu0 0
        %2655 = vmatpush1.bf16.msra.mxu0 0
        %2656 = vmatprep.subr.bf16.mxu0 0
        %2657 = vmatpush1.bf16.msra.mxu0 0
        %2658 = vmatprep.subr.bf16.mxu0 0
        %2659 = vmatpush1.bf16.msra.mxu0 0
        %2660 = vmatprep.subr.bf16.mxu0 0
        %2661 = vmatpush1.bf16.msra.mxu0 0
        %2662 = vmatprep.subr.bf16.mxu0 0
        %2663 = vmatpush1.bf16.msra.mxu0 0
        %2664 = vmatprep.subr.bf16.mxu0 0
        %2665 = vmatpush1.bf16.msra.mxu0 0
        %2666 = vmatprep.subr.bf16.mxu0 0
        %2667 = vmatpush1.bf16.msra.mxu0 0
        %2668 = vmatprep.subr.bf16.mxu0 0
        %2669 = vmatpush1.bf16.msra.mxu0 0
        %2670 = vmatprep.subr.bf16.mxu0 0
        %2671 = vmatpush1.bf16.msra.mxu0 0
        %2672 = vmatprep.subr.bf16.mxu0 0
        %2673 = vmatpush1.bf16.msra.mxu0 0
        %2674 = vmatprep.subr.bf16.mxu0 0
        %2675 = vmatpush1.bf16.msra.mxu0 0
        %2676 = vmatprep.mubr.bf16.mxu0 0
        %2677 = vmatmul.mubr.bf16.gmra.mrb[0].mxu0 %v2636
        %v2678 = vpop.f32.mrb[0].mxu0
        %v2679 = vadd.f32 %v2622, %v2678
        %v2680 = vpop.f32.mrb[0].mxu0
        %v2681 = vpop.f32.mrb[0].mxu0
        %v2682 = vadd.f32 %v2622, %v2681
        %v2683 = vpop.f32.mrb[0].mxu0
        %2684 = vmatprep.mubr.bf16.mxu0 0
        %2685 = vmatmul.mubr.bf16.gmra.mrb[0].mxu0 %v2639
        %v2686 = vpop.f32.mrb[0].mxu0
        %v2687 = vadd.f32 %v2622, %v2686
        %v2688 = vpop.f32.mrb[0].mxu0
        %v2689 = vpop.f32.mrb[0].mxu0
        %v2690 = vadd.f32 %v2622, %v2689
        %v2691 = vpop.f32.mrb[0].mxu0
        %2692 = vmatprep.mubr.bf16.mxu0 0
        %2693 = vmatmul.mubr.bf16.gmra.mrb[0].mxu0 %v2642
        %v2694 = vpop.f32.mrb[0].mxu0
        %v2695 = vadd.f32 %v2622, %v2694
        %v2696 = vpop.f32.mrb[0].mxu0
        %v2697 = vpop.f32.mrb[0].mxu0
        %v2698 = vadd.f32 %v2622, %v2697
        %v2699 = vpop.f32.mrb[0].mxu0
        %2700 = vdwg.mxu0
        %2701 = vst.msk [vmem:[%s588] sm:$0xff] %vm730, %v2679
        %2702 = vst.msk [vmem:[%s588 + $0x8] sm:$0xff] %vm730, %v2682
        %s2703 = scalar_lea.vmem %s588, 16 [#allocation14]
        %2704 = vst.msk [vmem:[%s2703] sm:$0xff] %vm730, %v2687
        %2705 = vst.msk [vmem:[%s2703 + $0x8] sm:$0xff] %vm730, %v2690
        %s2706 = scalar_lea.vmem %s588, 32 [#allocation14]
        %2707 = vst.msk [vmem:[%s2706] sm:$0xff] %vm730, %v2695
        %2708 = vst.msk [vmem:[%s2706 + $0x8] sm:$0xff] %vm730, %v2698
        %s2709 = sand.u32 %s298, 1
        %s2710 = scalar_lea.sflag [#allocation5], %s2709
        %s2711 = sand.u32 %s298, 1
        %s2712 = smul.addr %s2711, 48
        %s2713 = scalar_lea.vmem [#allocation14], %s2712
        %s2714 = sand.u32 %s39, 1
        %s2715 = scalar_lea.sflag [#allocation16], %s2714
        %s2716 = sand.u32 %s324, 1
        %s2717 = smul.addr %s2716, 64
        %s2718 = scalar_lea.vmem [#allocation15], %s2717
        %s2719 = sand.u32 %s39, 1
        %s2720 = scalar_lea.sflag [#allocation16], %s2719
        %s2721 = sand.u32 %s350, 1
        %s2722 = smul.addr %s2721, 64
        %s2723 = scalar_lea.vmem [#allocation17], %s2722
        // Predicated region
        $region89: #{tpu_custom_call.1} parent=63 // pred_check
          %p2724 = pneg %p308
        $region90: #{tpu_custom_call.1} parent=63 // pred_check_branch
          %2726 = sbr.rel (%p2724) target = $region92
        $region91: #{tpu_custom_call.1} parent=63 // pred_region
          %s2728 = ssub.s32 768, 768
          %2729 = vsyncadd %s2710, %s2728
          %s2730 = smul.addr %s39, 6
          %s2731 = smul.addr %s2730, 128
          %s2732 = scalar_lea.hbm %s11, %s2731
          %s2733 = sshll.u32 %s2713, 4
          %s2734 = int_to_ptr.vmem [resolvable:$true] %s2733
          %2739 = dma.vmem_to_hbm [thread:$0]  %s2734, 768, %s2732, %s2710, 128, 128, 8
        $region92: #{tpu_custom_call.1} parent=63 // pred_fallthru
          _
        // Predicated region
        $region93: #{tpu_custom_call.1} parent=63 // pred_check
          %p2740 = pneg %p334
        $region94: #{tpu_custom_call.1} parent=63 // pred_check_branch
          %2742 = sbr.rel (%p2740) target = $region96
        $region95: #{tpu_custom_call.1} parent=63 // pred_region
          %s2744 = ssub.s32 1024, 1024
          %2745 = vsyncadd %s2715, %s2744
          %s2746 = smul.addr %s39, 8
          %s2747 = smul.addr %s2746, 128
          %s2748 = scalar_lea.hbm %s12, %s2747
          %s2749 = sshll.u32 %s2718, 4
          %s2750 = int_to_ptr.vmem [resolvable:$true] %s2749
          %2755 = dma.vmem_to_hbm [thread:$0]  %s2750, 1024, %s2748, %s2715, 128, 128, 8
        $region96: #{tpu_custom_call.1} parent=63 // pred_fallthru
          _
        // Predicated region
        $region97: #{tpu_custom_call.1} parent=63 // pred_check
          %p2756 = pneg %p360
        $region98: #{tpu_custom_call.1} parent=63 // pred_check_branch
          %2758 = sbr.rel (%p2756) target = $region100
        $region99: #{tpu_custom_call.1} parent=63 // pred_region
          %s2760 = ssub.s32 1024, 1024
          %2761 = vsyncadd %s2720, %s2760
          %s2762 = smul.addr %s39, 8
          %s2763 = smul.addr %s2762, 128
          %s2764 = scalar_lea.hbm %s13, %s2763
          %s2765 = sshll.u32 %s2723, 4
          %s2766 = int_to_ptr.vmem [resolvable:$true] %s2765
          %2771 = dma.vmem_to_hbm [thread:$0]  %s2766, 1024, %s2764, %s2720, 128, 128, 8
        $region100: #{tpu_custom_call.1} parent=63 // pred_fallthru
          _
      $region64: #{tpu_custom_call.1} parent=5 // pred_fallthru
        _
      %p2772 = scmp.le.s32.totalorder 2, %s34
      // Predicated region
      $region101: #{tpu_custom_call.1} parent=5 // pred_check
        %p2773 = pneg %p2772
      $region102: #{tpu_custom_call.1} parent=5 // pred_check_branch
        %2775 = sbr.rel (%p2773) target = $region104
      $region103: #{tpu_custom_call.1} parent=5 // pred_region
        %s2776 = ssub.s32 %s34, 2
        // Predicated region
        $region105: #{tpu_custom_call.1} parent=103 // pred_check
          %p2777 = pneg %p314
        $region106: #{tpu_custom_call.1} parent=103 // pred_check_branch
          %2779 = sbr.rel (%p2777) target = $region108
        $region107: #{tpu_custom_call.1} parent=103 // pred_region
          %s2780 = sand.u32 %s299, 1
          %s2781 = scalar_lea.sflag [#allocation5], %s2780
          %s2782 = sand.u32 %s299, 1
          %s2783 = smul.addr %s2782, 48
          %s2784 = scalar_lea.vmem [#allocation14], %s2783
          %2785 = dma.done %s2781, 768
        $region108: #{tpu_custom_call.1} parent=103 // pred_fallthru
          _
        // Predicated region
        $region109: #{tpu_custom_call.1} parent=103 // pred_check
          %p2786 = pneg %p340
        $region110: #{tpu_custom_call.1} parent=103 // pred_check_branch
          %2788 = sbr.rel (%p2786) target = $region112
        $region111: #{tpu_custom_call.1} parent=103 // pred_region
          %s2789 = sand.u32 %s40, 1
          %s2790 = scalar_lea.sflag [#allocation16], %s2789
          %s2791 = sand.u32 %s325, 1
          %s2792 = smul.addr %s2791, 64
          %s2793 = scalar_lea.vmem [#allocation15], %s2792
          %2794 = dma.done %s2790, 1024
        $region112: #{tpu_custom_call.1} parent=103 // pred_fallthru
          _
        // Predicated region
        $region113: #{tpu_custom_call.1} parent=103 // pred_check
          %p2795 = pneg %p366
        $region114: #{tpu_custom_call.1} parent=103 // pred_check_branch
          %2797 = sbr.rel (%p2795) target = $region116
        $region115: #{tpu_custom_call.1} parent=103 // pred_region
          %s2798 = sand.u32 %s40, 1
          %s2799 = scalar_lea.sflag [#allocation16], %s2798
          %s2800 = sand.u32 %s351, 1
          %s2801 = smul.addr %s2800, 64
          %s2802 = scalar_lea.vmem [#allocation17], %s2801
          %2803 = dma.done %s2799, 1024
        $region116: #{tpu_custom_call.1} parent=103 // pred_fallthru
          _
      $region104: #{tpu_custom_call.1} parent=5 // pred_fallthru
        _
    $region6: #{tpu_custom_call.1} parent=1 // loop_footer
      %s38 = sadd.s32 1, %s34
    $region7: #{tpu_custom_call.1} parent=1 // loop_footer_branch
      %33 = sbr.rel target = $region3
    $region8: #{tpu_custom_call.1} parent=1 // loop_exit
      _
    %2804 = vsyncpa [#allocation4], 1
    %s2805 = scalar_lea.sflag [#allocation4], 1
    %2806 = vsyncpa %s2805, 1
    %2807 = vsyncpa [#allocation7], 1
    %s2808 = scalar_lea.sflag [#allocation7], 1
    %2809 = vsyncpa %s2808, 1
    %2810 = vsyncpa [#allocation10], 1
    %2811 = vsyncpa [#allocation13], 1
    %2812 = vsyncpa [#allocation5], 1
    %s2813 = scalar_lea.sflag [#allocation5], 1
    %2814 = vsyncpa %s2813, 1
    %2815 = vsyncpa [#allocation16], 1
    %s2816 = scalar_lea.sflag [#allocation16], 1
    %2817 = vsyncpa %s2816, 1

</llo_original>
